<compile_context>
chip_gen: v5e
topology: v5e:2x2
jax: 0.10.0
libtpu: 0.0.40
codegen_flags: <defaults>
</compile_context>

<pallas_src>
import functools

import jax
import jax.numpy as jnp
from jax import lax
from jax.experimental import pallas as pl
from jax.experimental.pallas import tpu as pltpu

EPS = 1e-5


def _round_up(x, m):
    return ((x + m - 1) // m) * m


def _vmem_cap_bytes():
    """Generation-aware VMEM capacity (v5e/v6e: 128 MiB, v7x: 64 MiB per TensorCore)."""
    try:
        return int(pltpu.get_tpu_info().vmem_capacity_bytes)
    except Exception:
        return 64 * 1024 * 1024  # conservative fallback (v7x per-core size)


# --------------------------------------------------------------------------------------
# Pass 1: fused projection + batch-coupled BatchNorm statistics (accumulated over batch).
# --------------------------------------------------------------------------------------
def _proj_stats_kernel(x2_ref, w_ref, vsum_ref, vsq_ref, qsum_ref, qsq_ref, *, KP, VP, H):
    @pl.when(pl.program_id(0) == 0)
    def _init():
        vsum_ref[...] = jnp.zeros_like(vsum_ref)
        vsq_ref[...] = jnp.zeros_like(vsq_ref)
        qsum_ref[...] = jnp.zeros_like(qsum_ref)
        qsq_ref[...] = jnp.zeros_like(qsq_ref)

    # Project only the value & query columns (keys not needed for statistics); the slice start
    # (KP) is 128-lane aligned so this is a free view.  bf16 operands, f32 accumulation.
    P = jnp.dot(x2_ref[...], w_ref[:, KP:], preferred_element_type=jnp.float32)  # (N, VP + H*KP)
    vals = P[:, :VP]          # (M, VP); padded value lanes are exact zeros (zero weight columns)
    Q = P[:, VP:]             # (N, H*KP); padded per-head query lanes are exact zeros

    # Value BatchNorm1d(m): per-m sums over (batch, v) -- one lane reduce over the packed block.
    vsum_ref[...] += jnp.sum(vals, axis=1, keepdims=True)            # (M, 1)
    vsq_ref[...] += jnp.sum(vals * vals, axis=1, keepdims=True)

    # Query BatchNorm2d(k): per-k sums over (batch, n, h) -- ONE wide axis-0 reduce of the full
    # aligned Q block, then a tiny (H, KP) reshape+sum head fold (no per-head unaligned slices).
    cs = jnp.sum(Q, axis=0, keepdims=True)                           # (1, H*KP)
    cs2 = jnp.sum(Q * Q, axis=0, keepdims=True)
    qsum_ref[...] += jnp.sum(cs.reshape(H, KP), axis=0, keepdims=True)   # (1, KP)
    qsq_ref[...] += jnp.sum(cs2.reshape(H, KP), axis=0, keepdims=True)


# --------------------------------------------------------------------------------------
# Pass 2: per-batch lambdas + application ("parallel" over batch -> both v7x TensorCores).
# --------------------------------------------------------------------------------------
def _lambda_apply_kernel(x2_ref, w_ref, et_ref, vmean_ref, vinv_ref, qmean_ref, qinv_ref,
                         out_ref, *, K, H, KP, VP):
    # Fused projection for this batch element (recomputed: cheaper than an HBM round-trip of P).
    P = jnp.dot(x2_ref[...], w_ref[...], preferred_element_type=jnp.float32)  # (N, KP+VP+H*KP)
    keys = P[:, :KP]               # (M, KP)   m == n (global context)
    vals = P[:, KP:KP + VP]        # (M, VP)
    Q = P[:, KP + VP:]             # (N, H*KP) head-major, per-head 128-aligned

    # Softmax over the context axis m (rows).  Padded key columns are exactly zero -> uniform
    # softmax there, but those lambda rows only ever meet exactly-zero normalized query columns.
    kmax = jnp.max(keys, axis=0, keepdims=True)
    ek = jnp.exp(keys - kmax)
    inv_den = pl.reciprocal(jnp.sum(ek, axis=0, keepdims=True), approx=True)   # EUP slot
    sk = (ek * inv_den).astype(jnp.bfloat16)                                   # (M, KP)

    # BatchNorms with the training-mode batch statistics from pass 1.
    vn = ((vals - vmean_ref[...]) * vinv_ref[...]).astype(jnp.bfloat16)        # (M, VP)
    qmean_t = jnp.concatenate([qmean_ref[...]] * H, axis=1)                    # (1, H*KP)
    qinv_t = jnp.concatenate([qinv_ref[...]] * H, axis=1)
    QN = (Q - qmean_t) * qinv_t                                                # (N, H*KP) f32

    # Content lambda: contract context dim 0 of both (no explicit transpose); bf16 MXU, f32 acc.
    cl = lax.dot_general(sk, vn, (((0,), (0,)), ((), ())),
                         preferred_element_type=jnp.float32).astype(jnp.bfloat16)  # (KP, VP)

    # Content application on the MXU: per-head (N,KP)@(KP,VP), 128-aligned query slices.
    accs = [jnp.dot(QN[:, hh * KP:(hh + 1) * KP].astype(jnp.bfloat16), cl,
                    preferred_element_type=jnp.float32) for hh in range(H)]    # H x (N, VP) f32

    # Positional application: per-k position lambda on the MXU, then K unrolled lane-dense
    # multiply-accumulates (f32 VPU) into the per-head accumulators.  K, H are small static
    # trip-counts; live set stays bounded at {accs, current plam_k, QN}.
    for kk in range(K):
        plam_k = jnp.dot(et_ref[kk], vn, preferred_element_type=jnp.float32)   # (N, VP) f32
        for hh in range(H):
            qcol = QN[:, hh * KP + kk:hh * KP + kk + 1]                        # (N, 1)
            accs[hh] = accs[hh] + qcol * plam_k

    # ONE lane-dense store (N, H*VP), last dim a multiple of 128 -> unmasked vst.
    out_ref[...] = jnp.concatenate(accs, axis=1)


# --------------------------------------------------------------------------------------
# One-time parameter repacking (hoisted out of the jitted forward; call once at init).
# --------------------------------------------------------------------------------------
def pack_lambda_params(Wq, Wk, Wv, E, heads):
    """Fused, 128-lane-aligned projection weight [keys|values|per-head queries] and per-k
    positional embeddings, both bf16.  Weights use PyTorch nn.Linear layout (out, in)."""
    k, d = Wk.shape
    v = Wv.shape[0]
    h = heads
    KP = _round_up(k, 128)
    VP = _round_up(v, 128)
    wk = jnp.pad(Wk.T, ((0, 0), (0, KP - k)))                       # (d, KP)
    wv = jnp.pad(Wv.T, ((0, 0), (0, VP - v)))                       # (d, VP)
    # nn.Linear computes x @ Wq.T; column j of Wq.T is feature (k_idx = j // h, h_idx = j % h).
    # Re-pack to head-major columns h*KP + k (per-head blocks padded to 128 lanes).
    wq = jnp.reshape(Wq.T, (d, k, h)).transpose(0, 2, 1)            # (d, h, k)
    wq = jnp.pad(wq, ((0, 0), (0, 0), (0, KP - k))).reshape(d, h * KP)
    w_all = jnp.concatenate([wk, wv, wq], axis=1).astype(jnp.bfloat16)   # (d, KP+VP+h*KP)
    et = jnp.transpose(E, (2, 0, 1)).astype(jnp.bfloat16)           # (k, n, m); et[k] = E[:, :, k]
    return w_all, et


@functools.partial(jax.jit, static_argnames=("heads", "qk_size", "value_size"))
def lambda_layer_forward(x, w_all, et, *, heads, qk_size, value_size):
    """Pallas-backed LambdaLayer.forward on pre-packed parameters."""
    b, d, n1, n2 = x.shape
    n = n1 * n2
    h, k, v = heads, qk_size, value_size
    K_, N_, M_ = et.shape
    assert K_ == k and N_ == n and M_ == n, "global-context assumption: m == n == n1*n2"
    assert h * v == d, "reshape (b,h,v,n)->(b,d,n) requires h*v == d"
    KP = _round_up(k, 128)
    VP = _round_up(v, 128)
    WT = KP + VP + h * KP
    assert w_all.shape == (d, WT)

    # Glue: raw reshape exactly like torch.reshape(x, [b, n, d]); bf16 MXU operands.
    x2 = jnp.reshape(x, (b * n, d)).astype(jnp.bfloat16)

    cap = _vmem_cap_bytes()

    # ---------------- pass 1: BatchNorm statistics (serial accumulation over batch) ----------
    stats_bytes = (2 * n * d * 2 + d * WT * 2 + n * (VP + h * KP) * 4 + 4 * 4 * (n + KP))
    vmem1 = int(min(0.8 * cap, max(8 << 20, 2 * stats_bytes)))
    vsum, vsq, qsum, qsq = pl.pallas_call(
        functools.partial(_proj_stats_kernel, KP=KP, VP=VP, H=h),
        grid=(b,),
        in_specs=[pl.BlockSpec((n, d), lambda i: (i, 0)),
                  pl.BlockSpec((d, WT), lambda i: (0, 0))],
        out_specs=(pl.BlockSpec((n, 1), lambda i: (0, 0)),
                   pl.BlockSpec((n, 1), lambda i: (0, 0)),
                   pl.BlockSpec((1, KP), lambda i: (0, 0)),
                   pl.BlockSpec((1, KP), lambda i: (0, 0))),
        out_shape=(jax.ShapeDtypeStruct((n, 1), jnp.float32),
                   jax.ShapeDtypeStruct((n, 1), jnp.float32),
                   jax.ShapeDtypeStruct((1, KP), jnp.float32),
                   jax.ShapeDtypeStruct((1, KP), jnp.float32)),
        compiler_params=pltpu.CompilerParams(
            dimension_semantics=("arbitrary",), vmem_limit_bytes=vmem1),
    )(x2, w_all)

    # Sums -> training-mode batch statistics (biased variance, eps=1e-5).  E[x^2]-E[x]^2 with a
    # clamp against tiny negative variance; the projections are ~zero-mean so cancellation is mild.
    vcnt = float(b * v)
    vmean = vsum / vcnt
    vinv = lax.rsqrt(jnp.maximum(vsq / vcnt - vmean * vmean, 0.0) + EPS)      # (n, 1)
    qcnt = float(b * n * h)
    qmean = qsum / qcnt
    qinv = lax.rsqrt(jnp.maximum(qsq / qcnt - qmean * qmean, 0.0) + EPS)      # (1, KP)

    # ---------------- pass 2: lambdas + application (independent per batch -> "parallel") ----
    apply_bytes = (2 * n * d * 2 + d * WT * 2 + k * n * n * 2           # inputs (et resident)
                   + 4 * 4 * (n + KP)                                    # stats vectors
                   + 2 * n * h * VP * 4                                  # output block (dbl-buffered)
                   + n * WT * 4 + n * h * KP * 4                         # P, QN
                   + (h + 1) * n * VP * 4                                # accumulators + plam_k
                   + n * (KP + VP) * 4)                                  # softmax keys + vn
    vmem2 = int(min(0.8 * cap, max(16 << 20, int(1.5 * apply_bytes))))
    out = pl.pallas_call(
        functools.partial(_lambda_apply_kernel, K=k, H=h, KP=KP, VP=VP),
        grid=(b,),
        in_specs=[pl.BlockSpec((n, d), lambda i: (i, 0)),
                  pl.BlockSpec((d, WT), lambda i: (0, 0)),
                  pl.BlockSpec((k, n, n), lambda i: (0, 0, 0)),
                  pl.BlockSpec((n, 1), lambda i: (0, 0)),
                  pl.BlockSpec((n, 1), lambda i: (0, 0)),
                  pl.BlockSpec((1, KP), lambda i: (0, 0)),
                  pl.BlockSpec((1, KP), lambda i: (0, 0))],
        out_specs=pl.BlockSpec((n, h * VP), lambda i: (i, 0)),
        out_shape=jax.ShapeDtypeStruct((b * n, h * VP), jnp.float32),
        compiler_params=pltpu.CompilerParams(
            dimension_semantics=("parallel",), vmem_limit_bytes=vmem2),
    )(x2, w_all, et, vmean, vinv, qmean, qinv)

    # Lane-dense padded slab -> (b, d, n1, n2): drop the per-head V padding, then the cheap
    # (n, d)->(d, n) transpose (XLA layout op, mirrors the final torch reshapes).
    out = jnp.reshape(out, (b, n, h, VP))[:, :, :, :v]      # (b, n, h, v)
    out = jnp.transpose(out, (0, 2, 3, 1))                  # (b, h, v, n)
    return jnp.reshape(out, (b, d, n1, n2))


# --------------------------------------------------------------------------------------
# Pure-JAX (f32) mirror of the PyTorch forward (training-mode batch norms) for validation.
# --------------------------------------------------------------------------------------
def lambda_layer_ref(x, Wq, Wk, Wv, E, heads, eps=EPS):
    b, d, n1, n2 = x.shape
    n = n1 * n2
    m = E.shape[1]
    k = Wk.shape[0]
    h = heads
    xf = jnp.reshape(x, (b, n, d))
    c = jnp.reshape(xf, (b, m, d))
    keys = c @ Wk.T
    sk = jax.nn.softmax(keys, axis=1)
    vals = c @ Wv.T
    vmean = jnp.mean(vals, axis=(0, 2), keepdims=True)
    vvar = jnp.var(vals, axis=(0, 2), keepdims=True)
    vn = (vals - vmean) / jnp.sqrt(vvar + eps)
    q = jnp.reshape(xf @ Wq.T, (b, n, k, h)).transpose(0, 2, 1, 3)   # (b, k, n, h)
    qmean = jnp.mean(q, axis=(0, 2, 3), keepdims=True)
    qvar = jnp.var(q, axis=(0, 2, 3), keepdims=True)
    qn = (q - qmean) / jnp.sqrt(qvar + eps)
    cl = jnp.einsum('bmk,bmv->bkv', sk, vn)
    plam = jnp.einsum('nmk,bmv->bnkv', E, vn)
    c_out = jnp.einsum('bknh,bkv->bhvn', qn, cl)
    p_out = jnp.einsum('bknh,bnkv->bhvn', qn, plam)
    out = jnp.reshape(c_out + p_out, (b, d, n))
    return jnp.reshape(out, (b, d, n1, n2))


if __name__ == "__main__":
    # Small, consistent shapes: d == h*v, m == n1*n2 (global context).
    b, n1, n2 = 2, 4, 4
    n = n1 * n2
    d, k, v, h = 32, 16, 8, 4
    m = n

    key = jax.random.PRNGKey(0)
    kx, kq, kk_, kv_, ke = jax.random.split(key, 5)
    x = jax.random.normal(kx, (b, d, n1, n2), dtype=jnp.float32)

    # Deterministic parameter init matching reset_params() statistics (nn.Linear layout: (out, in)).
    std_q = (d * k) ** -0.5
    std_kv = d ** -0.5
    Wq = std_q * jax.random.normal(kq, (k * h, d), dtype=jnp.float32)
    Wk = std_kv * jax.random.normal(kk_, (k, d), dtype=jnp.float32)
    Wv = std_kv * jax.random.normal(kv_, (v, d), dtype=jnp.float32)
    E = jax.random.normal(ke, (n, m, k), dtype=jnp.float32)

    # One-time repack at "init" time (hoisted out of the jitted forward, per review).
    w_all, et = pack_lambda_params(Wq, Wk, Wv, E, heads=h)

    out = lambda_layer_forward(x, w_all, et, heads=h, qk_size=k, value_size=v)
    out = jax.block_until_ready(out)

    ref = lambda_layer_ref(x, Wq, Wk, Wv, E, h)
    assert out.shape == (b, d, n1, n2), out.shape
    # bf16 MXU operands (f32 accumulation) + approx softmax reciprocal: scale-relative bound.
    err = float(jnp.max(jnp.abs(out - ref)))
    scale = float(jnp.max(jnp.abs(ref)))
    assert err <= 4e-2 * scale + 1e-3, (err, scale)
    print("KERNEL_OK")
</pallas_src>

<mosaic_0001>
module attributes {stable_mosaic.version = 11 : i64} {
  func.func @_proj_stats_kernel(%arg0: i32, %arg1: memref<16x32xbf16, #tpu.memory_space<vmem>>, %arg2: memref<32x768xbf16, #tpu.memory_space<vmem>>, %arg3: memref<16x1xf32, #tpu.memory_space<vmem>>, %arg4: memref<16x1xf32, #tpu.memory_space<vmem>>, %arg5: memref<1x128xf32, #tpu.memory_space<vmem>>, %arg6: memref<1x128xf32, #tpu.memory_space<vmem>>) attributes {dimension_semantics = [#tpu.dimension_semantics<arbitrary>], iteration_bounds = array<i64: 2>, scalar_prefetch = 0 : i64, scratch_operands = 0 : i64, tpu.core_type = #tpu.core_type<tc>, window_params = [{transform_indices = @transform_0, window_bounds = array<i64: 16, 32>}, {pipeline_mode = #tpu.pipeline_mode<synchronous>, transform_indices = @transform_1, window_bounds = array<i64: 32, 768>}, {pipeline_mode = #tpu.pipeline_mode<synchronous>, transform_indices = @transform_2, window_bounds = array<i64: 16, 1>}, {pipeline_mode = #tpu.pipeline_mode<synchronous>, transform_indices = @transform_3, window_bounds = array<i64: 16, 1>}, {pipeline_mode = #tpu.pipeline_mode<synchronous>, transform_indices = @transform_4, window_bounds = array<i64: 1, 128>}, {pipeline_mode = #tpu.pipeline_mode<synchronous>, transform_indices = @transform_5, window_bounds = array<i64: 1, 128>}]} {
    %c0_i32 = arith.constant 0 : i32
    %0 = arith.cmpi eq, %arg0, %c0_i32 : i32
    %1 = arith.extui %0 : i1 to i32
    %c0_i32_0 = arith.constant 0 : i32
    %2 = arith.cmpi ne, %1, %c0_i32_0 : i32
    scf.if %2 {
      %cst_25 = arith.constant 0.000000e+00 : f32
      %36 = vector.broadcast %cst_25 : f32 to vector<16x1xf32>
      %c0_26 = arith.constant 0 : index
      %c0_27 = arith.constant 0 : index
      %37 = vector.load %arg3[%c0_26, %c0_27] : memref<16x1xf32, #tpu.memory_space<vmem>>, vector<16x1xf32>
      tpu.vector_store %arg3[%c0_26, %c0_27], %36 {strides = array<i32>} : memref<16x1xf32, #tpu.memory_space<vmem>>, vector<16x1xf32>,
      %cst_28 = arith.constant 0.000000e+00 : f32
      %38 = vector.broadcast %cst_28 : f32 to vector<16x1xf32>
      %c0_29 = arith.constant 0 : index
      %c0_30 = arith.constant 0 : index
      %39 = vector.load %arg4[%c0_29, %c0_30] : memref<16x1xf32, #tpu.memory_space<vmem>>, vector<16x1xf32>
      tpu.vector_store %arg4[%c0_29, %c0_30], %38 {strides = array<i32>} : memref<16x1xf32, #tpu.memory_space<vmem>>, vector<16x1xf32>,
      %cst_31 = arith.constant 0.000000e+00 : f32
      %40 = vector.broadcast %cst_31 : f32 to vector<1x128xf32>
      %c0_32 = arith.constant 0 : index
      %c0_33 = arith.constant 0 : index
      %41 = vector.load %arg5[%c0_32, %c0_33] : memref<1x128xf32, #tpu.memory_space<vmem>>, vector<1x128xf32>
      tpu.vector_store %arg5[%c0_32, %c0_33], %40 {strides = array<i32>} : memref<1x128xf32, #tpu.memory_space<vmem>>, vector<1x128xf32>,
      %cst_34 = arith.constant 0.000000e+00 : f32
      %42 = vector.broadcast %cst_34 : f32 to vector<1x128xf32>
      %c0_35 = arith.constant 0 : index
      %c0_36 = arith.constant 0 : index
      %43 = vector.load %arg6[%c0_35, %c0_36] : memref<1x128xf32, #tpu.memory_space<vmem>>, vector<1x128xf32>
      tpu.vector_store %arg6[%c0_35, %c0_36], %42 {strides = array<i32>} : memref<1x128xf32, #tpu.memory_space<vmem>>, vector<1x128xf32>,
    } else {
    }
    %c0 = arith.constant 0 : index
    %c0_1 = arith.constant 0 : index
    %3 = vector.load %arg1[%c0, %c0_1] : memref<16x32xbf16, #tpu.memory_space<vmem>>, vector<16x32xbf16>
    %c0_2 = arith.constant 0 : index
    %c128 = arith.constant 128 : index
    %4 = vector.load %arg2[%c0_2, %c128] : memref<32x768xbf16, #tpu.memory_space<vmem>>, vector<32x640xbf16>
    %cst = arith.constant dense<0.000000e+00> : vector<16x640xf32>
    %5 = tpu.matmul %3, %4, %cst {dimension_numbers = #tpu.dot_dimension_numbers<[1], [0], [0], [1], [0, 0, 1, 1], [], []>} : vector<16x32xbf16>, vector<32x640xbf16>, vector<16x640xf32> -> vector<16x640xf32>
    %6 = vector.extract_strided_slice %5 {offsets = [0, 0], sizes = [16, 128], strides = [1, 1]} : vector<16x640xf32> to vector<16x128xf32>
    %7 = vector.extract_strided_slice %5 {offsets = [0, 128], sizes = [16, 512], strides = [1, 1]} : vector<16x640xf32> to vector<16x512xf32>
    %c0_3 = arith.constant 0 : index
    %c0_4 = arith.constant 0 : index
    %8 = vector.load %arg3[%c0_3, %c0_4] : memref<16x1xf32, #tpu.memory_space<vmem>>, vector<16x1xf32>
    %cst_5 = arith.constant dense<0.000000e+00> : vector<16xf32>
    %9 = vector.multi_reduction <add>, %6, %cst_5 [1] : vector<16x128xf32> to vector<16xf32>
    %10 = vector.shape_cast %9 : vector<16xf32> to vector<16x1xf32>
    %11 = arith.addf %8, %10 : vector<16x1xf32>
    %c0_6 = arith.constant 0 : index
    %c0_7 = arith.constant 0 : index
    %12 = vector.load %arg3[%c0_6, %c0_7] : memref<16x1xf32, #tpu.memory_space<vmem>>, vector<16x1xf32>
    tpu.vector_store %arg3[%c0_6, %c0_7], %11 {strides = array<i32>} : memref<16x1xf32, #tpu.memory_space<vmem>>, vector<16x1xf32>,
    %c0_8 = arith.constant 0 : index
    %c0_9 = arith.constant 0 : index
    %13 = vector.load %arg4[%c0_8, %c0_9] : memref<16x1xf32, #tpu.memory_space<vmem>>, vector<16x1xf32>
    %14 = arith.mulf %6, %6 : vector<16x128xf32>
    %cst_10 = arith.constant dense<0.000000e+00> : vector<16xf32>
    %15 = vector.multi_reduction <add>, %14, %cst_10 [1] : vector<16x128xf32> to vector<16xf32>
    %16 = vector.shape_cast %15 : vector<16xf32> to vector<16x1xf32>
    %17 = arith.addf %13, %16 : vector<16x1xf32>
    %c0_11 = arith.constant 0 : index
    %c0_12 = arith.constant 0 : index
    %18 = vector.load %arg4[%c0_11, %c0_12] : memref<16x1xf32, #tpu.memory_space<vmem>>, vector<16x1xf32>
    tpu.vector_store %arg4[%c0_11, %c0_12], %17 {strides = array<i32>} : memref<16x1xf32, #tpu.memory_space<vmem>>, vector<16x1xf32>,
    %cst_13 = arith.constant dense<0.000000e+00> : vector<512xf32>
    %19 = vector.multi_reduction <add>, %7, %cst_13 [0] : vector<16x512xf32> to vector<512xf32>
    %20 = vector.shape_cast %19 : vector<512xf32> to vector<1x512xf32>
    %21 = arith.mulf %7, %7 : vector<16x512xf32>
    %cst_14 = arith.constant dense<0.000000e+00> : vector<512xf32>
    %22 = vector.multi_reduction <add>, %21, %cst_14 [0] : vector<16x512xf32> to vector<512xf32>
    %23 = vector.shape_cast %22 : vector<512xf32> to vector<1x512xf32>
    %c0_15 = arith.constant 0 : index
    %c0_16 = arith.constant 0 : index
    %24 = vector.load %arg5[%c0_15, %c0_16] : memref<1x128xf32, #tpu.memory_space<vmem>>, vector<1x128xf32>
    %25 = vector.shape_cast %20 : vector<1x512xf32> to vector<4x128xf32>
    %cst_17 = arith.constant dense<0.000000e+00> : vector<128xf32>
    %26 = vector.multi_reduction <add>, %25, %cst_17 [0] : vector<4x128xf32> to vector<128xf32>
    %27 = vector.shape_cast %26 : vector<128xf32> to vector<1x128xf32>
    %28 = arith.addf %24, %27 : vector<1x128xf32>
    %c0_18 = arith.constant 0 : index
    %c0_19 = arith.constant 0 : index
    %29 = vector.load %arg5[%c0_18, %c0_19] : memref<1x128xf32, #tpu.memory_space<vmem>>, vector<1x128xf32>
    tpu.vector_store %arg5[%c0_18, %c0_19], %28 {strides = array<i32>} : memref<1x128xf32, #tpu.memory_space<vmem>>, vector<1x128xf32>,
    %c0_20 = arith.constant 0 : index
    %c0_21 = arith.constant 0 : index
    %30 = vector.load %arg6[%c0_20, %c0_21] : memref<1x128xf32, #tpu.memory_space<vmem>>, vector<1x128xf32>
    %31 = vector.shape_cast %23 : vector<1x512xf32> to vector<4x128xf32>
    %cst_22 = arith.constant dense<0.000000e+00> : vector<128xf32>
    %32 = vector.multi_reduction <add>, %31, %cst_22 [0] : vector<4x128xf32> to vector<128xf32>
    %33 = vector.shape_cast %32 : vector<128xf32> to vector<1x128xf32>
    %34 = arith.addf %30, %33 : vector<1x128xf32>
    %c0_23 = arith.constant 0 : index
    %c0_24 = arith.constant 0 : index
    %35 = vector.load %arg6[%c0_23, %c0_24] : memref<1x128xf32, #tpu.memory_space<vmem>>, vector<1x128xf32>
    tpu.vector_store %arg6[%c0_23, %c0_24], %34 {strides = array<i32>} : memref<1x128xf32, #tpu.memory_space<vmem>>, vector<1x128xf32>,
    return
  }
  func.func @transform_0(%arg0: i32) -> (i32, i32) {
    %c0_i32 = arith.constant 0 : i32
    %c0_i32_0 = arith.constant 0 : i32
    return %arg0, %c0_i32 : i32, i32
  }
  func.func @transform_1(%arg0: i32) -> (i32, i32) {
    %c0_i32 = arith.constant 0 : i32
    %c0_i32_0 = arith.constant 0 : i32
    %c0_i32_1 = arith.constant 0 : i32
    return %c0_i32, %c0_i32_0 : i32, i32
  }
  func.func @transform_2(%arg0: i32) -> (i32, i32) {
    %c0_i32 = arith.constant 0 : i32
    %c0_i32_0 = arith.constant 0 : i32
    %c0_i32_1 = arith.constant 0 : i32
    return %c0_i32, %c0_i32_0 : i32, i32
  }
  func.func @transform_3(%arg0: i32) -> (i32, i32) {
    %c0_i32 = arith.constant 0 : i32
    %c0_i32_0 = arith.constant 0 : i32
    %c0_i32_1 = arith.constant 0 : i32
    return %c0_i32, %c0_i32_0 : i32, i32
  }
  func.func @transform_4(%arg0: i32) -> (i32, i32) {
    %c0_i32 = arith.constant 0 : i32
    %c0_i32_0 = arith.constant 0 : i32
    %c0_i32_1 = arith.constant 0 : i32
    return %c0_i32, %c0_i32_0 : i32, i32
  }
  func.func @transform_5(%arg0: i32) -> (i32, i32) {
    %c0_i32 = arith.constant 0 : i32
    %c0_i32_0 = arith.constant 0 : i32
    %c0_i32_1 = arith.constant 0 : i32
    return %c0_i32, %c0_i32_0 : i32, i32
  }
}

module attributes {stable_mosaic.version = 11 : i64} {
  func.func @_lambda_apply_kernel(%arg0: i32, %arg1: memref<16x32xbf16, #tpu.memory_space<vmem>>, %arg2: memref<32x768xbf16, #tpu.memory_space<vmem>>, %arg3: memref<16x16x16xbf16, #tpu.memory_space<vmem>>, %arg4: memref<16x1xf32, #tpu.memory_space<vmem>>, %arg5: memref<16x1xf32, #tpu.memory_space<vmem>>, %arg6: memref<1x128xf32, #tpu.memory_space<vmem>>, %arg7: memref<1x128xf32, #tpu.memory_space<vmem>>, %arg8: memref<16x512xf32, #tpu.memory_space<vmem>>) attributes {dimension_semantics = [#tpu.dimension_semantics<parallel>], iteration_bounds = array<i64: 2>, scalar_prefetch = 0 : i64, scratch_operands = 0 : i64, tpu.core_type = #tpu.core_type<tc>, window_params = [{transform_indices = @transform_0, window_bounds = array<i64: 16, 32>}, {pipeline_mode = #tpu.pipeline_mode<synchronous>, transform_indices = @transform_1, window_bounds = array<i64: 32, 768>}, {pipeline_mode = #tpu.pipeline_mode<synchronous>, transform_indices = @transform_2, window_bounds = array<i64: 16, 16, 16>}, {pipeline_mode = #tpu.pipeline_mode<synchronous>, transform_indices = @transform_3, window_bounds = array<i64: 16, 1>}, {pipeline_mode = #tpu.pipeline_mode<synchronous>, transform_indices = @transform_4, window_bounds = array<i64: 16, 1>}, {pipeline_mode = #tpu.pipeline_mode<synchronous>, transform_indices = @transform_5, window_bounds = array<i64: 1, 128>}, {pipeline_mode = #tpu.pipeline_mode<synchronous>, transform_indices = @transform_6, window_bounds = array<i64: 1, 128>}, {transform_indices = @transform_7, window_bounds = array<i64: 16, 512>}]} {
    %c0 = arith.constant 0 : index
    %c0_0 = arith.constant 0 : index
    %0 = vector.load %arg1[%c0, %c0_0] : memref<16x32xbf16, #tpu.memory_space<vmem>>, vector<16x32xbf16>
    %c0_1 = arith.constant 0 : index
    %c0_2 = arith.constant 0 : index
    %1 = vector.load %arg2[%c0_1, %c0_2] : memref<32x768xbf16, #tpu.memory_space<vmem>>, vector<32x768xbf16>
    %cst = arith.constant dense<0.000000e+00> : vector<16x768xf32>
    %2 = tpu.matmul %0, %1, %cst {dimension_numbers = #tpu.dot_dimension_numbers<[1], [0], [0], [1], [0, 0, 1, 1], [], []>} : vector<16x32xbf16>, vector<32x768xbf16>, vector<16x768xf32> -> vector<16x768xf32>
    %3 = vector.extract_strided_slice %2 {offsets = [0, 0], sizes = [16, 128], strides = [1, 1]} : vector<16x768xf32> to vector<16x128xf32>
    %4 = vector.extract_strided_slice %2 {offsets = [0, 128], sizes = [16, 128], strides = [1, 1]} : vector<16x768xf32> to vector<16x128xf32>
    %5 = vector.extract_strided_slice %2 {offsets = [0, 256], sizes = [16, 512], strides = [1, 1]} : vector<16x768xf32> to vector<16x512xf32>
    %cst_3 = arith.constant dense<0xFF800000> : vector<128xf32>
    %6 = vector.multi_reduction <maximumf>, %3, %cst_3 [0] : vector<16x128xf32> to vector<128xf32>
    %7 = vector.shape_cast %6 : vector<128xf32> to vector<1x128xf32>
    %8 = vector.broadcast %7 : vector<1x128xf32> to vector<16x128xf32>
    %9 = arith.subf %3, %8 : vector<16x128xf32>
    %10 = math.exp %9 : vector<16x128xf32>
    %cst_4 = arith.constant dense<0.000000e+00> : vector<128xf32>
    %11 = vector.multi_reduction <add>, %10, %cst_4 [0] : vector<16x128xf32> to vector<128xf32>
    %12 = vector.shape_cast %11 : vector<128xf32> to vector<1x128xf32>
    %13 = tpu.reciprocal %12 {approx = true} : vector<1x128xf32> -> vector<1x128xf32>
    %14 = vector.broadcast %13 : vector<1x128xf32> to vector<16x128xf32>
    %15 = arith.mulf %10, %14 : vector<16x128xf32>
    %16 = arith.truncf %15 : vector<16x128xf32> to vector<16x128xbf16>
    %c0_5 = arith.constant 0 : index
    %c0_6 = arith.constant 0 : index
    %17 = vector.load %arg4[%c0_5, %c0_6] : memref<16x1xf32, #tpu.memory_space<vmem>>, vector<16x1xf32>
    %18 = vector.broadcast %17 : vector<16x1xf32> to vector<16x128xf32>
    %19 = arith.subf %4, %18 : vector<16x128xf32>
    %c0_7 = arith.constant 0 : index
    %c0_8 = arith.constant 0 : index
    %20 = vector.load %arg5[%c0_7, %c0_8] : memref<16x1xf32, #tpu.memory_space<vmem>>, vector<16x1xf32>
    %21 = vector.broadcast %20 : vector<16x1xf32> to vector<16x128xf32>
    %22 = arith.mulf %19, %21 : vector<16x128xf32>
    %23 = arith.truncf %22 : vector<16x128xf32> to vector<16x128xbf16>
    %c0_9 = arith.constant 0 : index
    %c0_10 = arith.constant 0 : index
    %24 = vector.load %arg6[%c0_9, %c0_10] : memref<1x128xf32, #tpu.memory_space<vmem>>, vector<1x128xf32>
    %25 = tpu.concatenate %24, %24, %24, %24 in 1 : vector<1x128xf32>, vector<1x128xf32>, vector<1x128xf32>, vector<1x128xf32> -> vector<1x512xf32>
    %c0_11 = arith.constant 0 : index
    %c0_12 = arith.constant 0 : index
    %26 = vector.load %arg7[%c0_11, %c0_12] : memref<1x128xf32, #tpu.memory_space<vmem>>, vector<1x128xf32>
    %27 = tpu.concatenate %26, %26, %26, %26 in 1 : vector<1x128xf32>, vector<1x128xf32>, vector<1x128xf32>, vector<1x128xf32> -> vector<1x512xf32>
    %28 = vector.broadcast %25 : vector<1x512xf32> to vector<16x512xf32>
    %29 = arith.subf %5, %28 : vector<16x512xf32>
    %30 = vector.broadcast %27 : vector<1x512xf32> to vector<16x512xf32>
    %31 = arith.mulf %29, %30 : vector<16x512xf32>
    %cst_13 = arith.constant dense<0.000000e+00> : vector<128x128xf32>
    %32 = tpu.matmul %16, %23, %cst_13 {dimension_numbers = #tpu.dot_dimension_numbers<[0], [0], [1], [1], [0, 1, 1, 1], [], []>} : vector<16x128xbf16>, vector<16x128xbf16>, vector<128x128xf32> -> vector<128x128xf32>
    %33 = arith.truncf %32 : vector<128x128xf32> to vector<128x128xbf16>
    %34 = vector.extract_strided_slice %31 {offsets = [0, 0], sizes = [16, 128], strides = [1, 1]} : vector<16x512xf32> to vector<16x128xf32>
    %35 = arith.truncf %34 : vector<16x128xf32> to vector<16x128xbf16>
    %cst_14 = arith.constant dense<0.000000e+00> : vector<16x128xf32>
    %36 = tpu.matmul %35, %33, %cst_14 {dimension_numbers = #tpu.dot_dimension_numbers<[1], [0], [0], [1], [0, 0, 1, 1], [], []>} : vector<16x128xbf16>, vector<128x128xbf16>, vector<16x128xf32> -> vector<16x128xf32>
    %37 = vector.extract_strided_slice %31 {offsets = [0, 128], sizes = [16, 128], strides = [1, 1]} : vector<16x512xf32> to vector<16x128xf32>
    %38 = arith.truncf %37 : vector<16x128xf32> to vector<16x128xbf16>
    %cst_15 = arith.constant dense<0.000000e+00> : vector<16x128xf32>
    %39 = tpu.matmul %38, %33, %cst_15 {dimension_numbers = #tpu.dot_dimension_numbers<[1], [0], [0], [1], [0, 0, 1, 1], [], []>} : vector<16x128xbf16>, vector<128x128xbf16>, vector<16x128xf32> -> vector<16x128xf32>
    %40 = vector.extract_strided_slice %31 {offsets = [0, 256], sizes = [16, 128], strides = [1, 1]} : vector<16x512xf32> to vector<16x128xf32>
    %41 = arith.truncf %40 : vector<16x128xf32> to vector<16x128xbf16>
    %cst_16 = arith.constant dense<0.000000e+00> : vector<16x128xf32>
    %42 = tpu.matmul %41, %33, %cst_16 {dimension_numbers = #tpu.dot_dimension_numbers<[1], [0], [0], [1], [0, 0, 1, 1], [], []>} : vector<16x128xbf16>, vector<128x128xbf16>, vector<16x128xf32> -> vector<16x128xf32>
    %43 = vector.extract_strided_slice %31 {offsets = [0, 384], sizes = [16, 128], strides = [1, 1]} : vector<16x512xf32> to vector<16x128xf32>
    %44 = arith.truncf %43 : vector<16x128xf32> to vector<16x128xbf16>
    %cst_17 = arith.constant dense<0.000000e+00> : vector<16x128xf32>
    %45 = tpu.matmul %44, %33, %cst_17 {dimension_numbers = #tpu.dot_dimension_numbers<[1], [0], [0], [1], [0, 0, 1, 1], [], []>} : vector<16x128xbf16>, vector<128x128xbf16>, vector<16x128xf32> -> vector<16x128xf32>
    %c0_18 = arith.constant 0 : index
    %c0_19 = arith.constant 0 : index
    %c0_20 = arith.constant 0 : index
    %46 = vector.load %arg3[%c0_18, %c0_19, %c0_20] : memref<16x16x16xbf16, #tpu.memory_space<vmem>>, vector<1x16x16xbf16>
    %47 = vector.shape_cast %46 : vector<1x16x16xbf16> to vector<16x16xbf16>
    %cst_21 = arith.constant dense<0.000000e+00> : vector<16x128xf32>
    %48 = tpu.matmul %47, %23, %cst_21 {dimension_numbers = #tpu.dot_dimension_numbers<[1], [0], [0], [1], [0, 0, 1, 1], [], []>} : vector<16x16xbf16>, vector<16x128xbf16>, vector<16x128xf32> -> vector<16x128xf32>
    %49 = vector.extract_strided_slice %31 {offsets = [0, 0], sizes = [16, 1], strides = [1, 1]} : vector<16x512xf32> to vector<16x1xf32>
    %50 = vector.broadcast %49 : vector<16x1xf32> to vector<16x128xf32>
    %51 = arith.mulf %50, %48 : vector<16x128xf32>
    %52 = arith.addf %36, %51 : vector<16x128xf32>
    %53 = vector.extract_strided_slice %31 {offsets = [0, 128], sizes = [16, 1], strides = [1, 1]} : vector<16x512xf32> to vector<16x1xf32>
    %54 = vector.broadcast %53 : vector<16x1xf32> to vector<16x128xf32>
    %55 = arith.mulf %54, %48 : vector<16x128xf32>
    %56 = arith.addf %39, %55 : vector<16x128xf32>
    %57 = vector.extract_strided_slice %31 {offsets = [0, 256], sizes = [16, 1], strides = [1, 1]} : vector<16x512xf32> to vector<16x1xf32>
    %58 = vector.broadcast %57 : vector<16x1xf32> to vector<16x128xf32>
    %59 = arith.mulf %58, %48 : vector<16x128xf32>
    %60 = arith.addf %42, %59 : vector<16x128xf32>
    %61 = vector.extract_strided_slice %31 {offsets = [0, 384], sizes = [16, 1], strides = [1, 1]} : vector<16x512xf32> to vector<16x1xf32>
    %62 = vector.broadcast %61 : vector<16x1xf32> to vector<16x128xf32>
    %63 = arith.mulf %62, %48 : vector<16x128xf32>
    %64 = arith.addf %45, %63 : vector<16x128xf32>
    %c1 = arith.constant 1 : index
    %c0_22 = arith.constant 0 : index
    %c0_23 = arith.constant 0 : index
    %65 = vector.load %arg3[%c1, %c0_22, %c0_23] : memref<16x16x16xbf16, #tpu.memory_space<vmem>>, vector<1x16x16xbf16>
    %66 = vector.shape_cast %65 : vector<1x16x16xbf16> to vector<16x16xbf16>
    %cst_24 = arith.constant dense<0.000000e+00> : vector<16x128xf32>
    %67 = tpu.matmul %66, %23, %cst_24 {dimension_numbers = #tpu.dot_dimension_numbers<[1], [0], [0], [1], [0, 0, 1, 1], [], []>} : vector<16x16xbf16>, vector<16x128xbf16>, vector<16x128xf32> -> vector<16x128xf32>
    %68 = vector.extract_strided_slice %31 {offsets = [0, 1], sizes = [16, 1], strides = [1, 1]} : vector<16x512xf32> to vector<16x1xf32>
    %69 = vector.broadcast %68 : vector<16x1xf32> to vector<16x128xf32>
    %70 = arith.mulf %69, %67 : vector<16x128xf32>
    %71 = arith.addf %52, %70 : vector<16x128xf32>
    %72 = vector.extract_strided_slice %31 {offsets = [0, 129], sizes = [16, 1], strides = [1, 1]} : vector<16x512xf32> to vector<16x1xf32>
    %73 = vector.broadcast %72 : vector<16x1xf32> to vector<16x128xf32>
    %74 = arith.mulf %73, %67 : vector<16x128xf32>
    %75 = arith.addf %56, %74 : vector<16x128xf32>
    %76 = vector.extract_strided_slice %31 {offsets = [0, 257], sizes = [16, 1], strides = [1, 1]} : vector<16x512xf32> to vector<16x1xf32>
    %77 = vector.broadcast %76 : vector<16x1xf32> to vector<16x128xf32>
    %78 = arith.mulf %77, %67 : vector<16x128xf32>
    %79 = arith.addf %60, %78 : vector<16x128xf32>
    %80 = vector.extract_strided_slice %31 {offsets = [0, 385], sizes = [16, 1], strides = [1, 1]} : vector<16x512xf32> to vector<16x1xf32>
    %81 = vector.broadcast %80 : vector<16x1xf32> to vector<16x128xf32>
    %82 = arith.mulf %81, %67 : vector<16x128xf32>
    %83 = arith.addf %64, %82 : vector<16x128xf32>
    %c2 = arith.constant 2 : index
    %c0_25 = arith.constant 0 : index
    %c0_26 = arith.constant 0 : index
    %84 = vector.load %arg3[%c2, %c0_25, %c0_26] : memref<16x16x16xbf16, #tpu.memory_space<vmem>>, vector<1x16x16xbf16>
    %85 = vector.shape_cast %84 : vector<1x16x16xbf16> to vector<16x16xbf16>
    %cst_27 = arith.constant dense<0.000000e+00> : vector<16x128xf32>
    %86 = tpu.matmul %85, %23, %cst_27 {dimension_numbers = #tpu.dot_dimension_numbers<[1], [0], [0], [1], [0, 0, 1, 1], [], []>} : vector<16x16xbf16>, vector<16x128xbf16>, vector<16x128xf32> -> vector<16x128xf32>
    %87 = vector.extract_strided_slice %31 {offsets = [0, 2], sizes = [16, 1], strides = [1, 1]} : vector<16x512xf32> to vector<16x1xf32>
    %88 = vector.broadcast %87 : vector<16x1xf32> to vector<16x128xf32>
    %89 = arith.mulf %88, %86 : vector<16x128xf32>
    %90 = arith.addf %71, %89 : vector<16x128xf32>
    %91 = vector.extract_strided_slice %31 {offsets = [0, 130], sizes = [16, 1], strides = [1, 1]} : vector<16x512xf32> to vector<16x1xf32>
    %92 = vector.broadcast %91 : vector<16x1xf32> to vector<16x128xf32>
    %93 = arith.mulf %92, %86 : vector<16x128xf32>
    %94 = arith.addf %75, %93 : vector<16x128xf32>
    %95 = vector.extract_strided_slice %31 {offsets = [0, 258], sizes = [16, 1], strides = [1, 1]} : vector<16x512xf32> to vector<16x1xf32>
    %96 = vector.broadcast %95 : vector<16x1xf32> to vector<16x128xf32>
    %97 = arith.mulf %96, %86 : vector<16x128xf32>
    %98 = arith.addf %79, %97 : vector<16x128xf32>
    %99 = vector.extract_strided_slice %31 {offsets = [0, 386], sizes = [16, 1], strides = [1, 1]} : vector<16x512xf32> to vector<16x1xf32>
    %100 = vector.broadcast %99 : vector<16x1xf32> to vector<16x128xf32>
    %101 = arith.mulf %100, %86 : vector<16x128xf32>
    %102 = arith.addf %83, %101 : vector<16x128xf32>
    %c3 = arith.constant 3 : index
    %c0_28 = arith.constant 0 : index
    %c0_29 = arith.constant 0 : index
    %103 = vector.load %arg3[%c3, %c0_28, %c0_29] : memref<16x16x16xbf16, #tpu.memory_space<vmem>>, vector<1x16x16xbf16>
    %104 = vector.shape_cast %103 : vector<1x16x16xbf16> to vector<16x16xbf16>
    %cst_30 = arith.constant dense<0.000000e+00> : vector<16x128xf32>
    %105 = tpu.matmul %104, %23, %cst_30 {dimension_numbers = #tpu.dot_dimension_numbers<[1], [0], [0], [1], [0, 0, 1, 1], [], []>} : vector<16x16xbf16>, vector<16x128xbf16>, vector<16x128xf32> -> vector<16x128xf32>
    %106 = vector.extract_strided_slice %31 {offsets = [0, 3], sizes = [16, 1], strides = [1, 1]} : vector<16x512xf32> to vector<16x1xf32>
    %107 = vector.broadcast %106 : vector<16x1xf32> to vector<16x128xf32>
    %108 = arith.mulf %107, %105 : vector<16x128xf32>
    %109 = arith.addf %90, %108 : vector<16x128xf32>
    %110 = vector.extract_strided_slice %31 {offsets = [0, 131], sizes = [16, 1], strides = [1, 1]} : vector<16x512xf32> to vector<16x1xf32>
    %111 = vector.broadcast %110 : vector<16x1xf32> to vector<16x128xf32>
    %112 = arith.mulf %111, %105 : vector<16x128xf32>
    %113 = arith.addf %94, %112 : vector<16x128xf32>
    %114 = vector.extract_strided_slice %31 {offsets = [0, 259], sizes = [16, 1], strides = [1, 1]} : vector<16x512xf32> to vector<16x1xf32>
    %115 = vector.broadcast %114 : vector<16x1xf32> to vector<16x128xf32>
    %116 = arith.mulf %115, %105 : vector<16x128xf32>
    %117 = arith.addf %98, %116 : vector<16x128xf32>
    %118 = vector.extract_strided_slice %31 {offsets = [0, 387], sizes = [16, 1], strides = [1, 1]} : vector<16x512xf32> to vector<16x1xf32>
    %119 = vector.broadcast %118 : vector<16x1xf32> to vector<16x128xf32>
    %120 = arith.mulf %119, %105 : vector<16x128xf32>
    %121 = arith.addf %102, %120 : vector<16x128xf32>
    %c4 = arith.constant 4 : index
    %c0_31 = arith.constant 0 : index
    %c0_32 = arith.constant 0 : index
    %122 = vector.load %arg3[%c4, %c0_31, %c0_32] : memref<16x16x16xbf16, #tpu.memory_space<vmem>>, vector<1x16x16xbf16>
    %123 = vector.shape_cast %122 : vector<1x16x16xbf16> to vector<16x16xbf16>
    %cst_33 = arith.constant dense<0.000000e+00> : vector<16x128xf32>
    %124 = tpu.matmul %123, %23, %cst_33 {dimension_numbers = #tpu.dot_dimension_numbers<[1], [0], [0], [1], [0, 0, 1, 1], [], []>} : vector<16x16xbf16>, vector<16x128xbf16>, vector<16x128xf32> -> vector<16x128xf32>
    %125 = vector.extract_strided_slice %31 {offsets = [0, 4], sizes = [16, 1], strides = [1, 1]} : vector<16x512xf32> to vector<16x1xf32>
    %126 = vector.broadcast %125 : vector<16x1xf32> to vector<16x128xf32>
    %127 = arith.mulf %126, %124 : vector<16x128xf32>
    %128 = arith.addf %109, %127 : vector<16x128xf32>
    %129 = vector.extract_strided_slice %31 {offsets = [0, 132], sizes = [16, 1], strides = [1, 1]} : vector<16x512xf32> to vector<16x1xf32>
    %130 = vector.broadcast %129 : vector<16x1xf32> to vector<16x128xf32>
    %131 = arith.mulf %130, %124 : vector<16x128xf32>
    %132 = arith.addf %113, %131 : vector<16x128xf32>
    %133 = vector.extract_strided_slice %31 {offsets = [0, 260], sizes = [16, 1], strides = [1, 1]} : vector<16x512xf32> to vector<16x1xf32>
    %134 = vector.broadcast %133 : vector<16x1xf32> to vector<16x128xf32>
    %135 = arith.mulf %134, %124 : vector<16x128xf32>
    %136 = arith.addf %117, %135 : vector<16x128xf32>
    %137 = vector.extract_strided_slice %31 {offsets = [0, 388], sizes = [16, 1], strides = [1, 1]} : vector<16x512xf32> to vector<16x1xf32>
    %138 = vector.broadcast %137 : vector<16x1xf32> to vector<16x128xf32>
    %139 = arith.mulf %138, %124 : vector<16x128xf32>
    %140 = arith.addf %121, %139 : vector<16x128xf32>
    %c5 = arith.constant 5 : index
    %c0_34 = arith.constant 0 : index
    %c0_35 = arith.constant 0 : index
    %141 = vector.load %arg3[%c5, %c0_34, %c0_35] : memref<16x16x16xbf16, #tpu.memory_space<vmem>>, vector<1x16x16xbf16>
    %142 = vector.shape_cast %141 : vector<1x16x16xbf16> to vector<16x16xbf16>
    %cst_36 = arith.constant dense<0.000000e+00> : vector<16x128xf32>
    %143 = tpu.matmul %142, %23, %cst_36 {dimension_numbers = #tpu.dot_dimension_numbers<[1], [0], [0], [1], [0, 0, 1, 1], [], []>} : vector<16x16xbf16>, vector<16x128xbf16>, vector<16x128xf32> -> vector<16x128xf32>
    %144 = vector.extract_strided_slice %31 {offsets = [0, 5], sizes = [16, 1], strides = [1, 1]} : vector<16x512xf32> to vector<16x1xf32>
    %145 = vector.broadcast %144 : vector<16x1xf32> to vector<16x128xf32>
    %146 = arith.mulf %145, %143 : vector<16x128xf32>
    %147 = arith.addf %128, %146 : vector<16x128xf32>
    %148 = vector.extract_strided_slice %31 {offsets = [0, 133], sizes = [16, 1], strides = [1, 1]} : vector<16x512xf32> to vector<16x1xf32>
    %149 = vector.broadcast %148 : vector<16x1xf32> to vector<16x128xf32>
    %150 = arith.mulf %149, %143 : vector<16x128xf32>
    %151 = arith.addf %132, %150 : vector<16x128xf32>
    %152 = vector.extract_strided_slice %31 {offsets = [0, 261], sizes = [16, 1], strides = [1, 1]} : vector<16x512xf32> to vector<16x1xf32>
    %153 = vector.broadcast %152 : vector<16x1xf32> to vector<16x128xf32>
    %154 = arith.mulf %153, %143 : vector<16x128xf32>
    %155 = arith.addf %136, %154 : vector<16x128xf32>
    %156 = vector.extract_strided_slice %31 {offsets = [0, 389], sizes = [16, 1], strides = [1, 1]} : vector<16x512xf32> to vector<16x1xf32>
    %157 = vector.broadcast %156 : vector<16x1xf32> to vector<16x128xf32>
    %158 = arith.mulf %157, %143 : vector<16x128xf32>
    %159 = arith.addf %140, %158 : vector<16x128xf32>
    %c6 = arith.constant 6 : index
    %c0_37 = arith.constant 0 : index
    %c0_38 = arith.constant 0 : index
    %160 = vector.load %arg3[%c6, %c0_37, %c0_38] : memref<16x16x16xbf16, #tpu.memory_space<vmem>>, vector<1x16x16xbf16>
    %161 = vector.shape_cast %160 : vector<1x16x16xbf16> to vector<16x16xbf16>
    %cst_39 = arith.constant dense<0.000000e+00> : vector<16x128xf32>
    %162 = tpu.matmul %161, %23, %cst_39 {dimension_numbers = #tpu.dot_dimension_numbers<[1], [0], [0], [1], [0, 0, 1, 1], [], []>} : vector<16x16xbf16>, vector<16x128xbf16>, vector<16x128xf32> -> vector<16x128xf32>
    %163 = vector.extract_strided_slice %31 {offsets = [0, 6], sizes = [16, 1], strides = [1, 1]} : vector<16x512xf32> to vector<16x1xf32>
    %164 = vector.broadcast %163 : vector<16x1xf32> to vector<16x128xf32>
    %165 = arith.mulf %164, %162 : vector<16x128xf32>
    %166 = arith.addf %147, %165 : vector<16x128xf32>
    %167 = vector.extract_strided_slice %31 {offsets = [0, 134], sizes = [16, 1], strides = [1, 1]} : vector<16x512xf32> to vector<16x1xf32>
    %168 = vector.broadcast %167 : vector<16x1xf32> to vector<16x128xf32>
    %169 = arith.mulf %168, %162 : vector<16x128xf32>
    %170 = arith.addf %151, %169 : vector<16x128xf32>
    %171 = vector.extract_strided_slice %31 {offsets = [0, 262], sizes = [16, 1], strides = [1, 1]} : vector<16x512xf32> to vector<16x1xf32>
    %172 = vector.broadcast %171 : vector<16x1xf32> to vector<16x128xf32>
    %173 = arith.mulf %172, %162 : vector<16x128xf32>
    %174 = arith.addf %155, %173 : vector<16x128xf32>
    %175 = vector.extract_strided_slice %31 {offsets = [0, 390], sizes = [16, 1], strides = [1, 1]} : vector<16x512xf32> to vector<16x1xf32>
    %176 = vector.broadcast %175 : vector<16x1xf32> to vector<16x128xf32>
    %177 = arith.mulf %176, %162 : vector<16x128xf32>
    %178 = arith.addf %159, %177 : vector<16x128xf32>
    %c7 = arith.constant 7 : index
    %c0_40 = arith.constant 0 : index
    %c0_41 = arith.constant 0 : index
    %179 = vector.load %arg3[%c7, %c0_40, %c0_41] : memref<16x16x16xbf16, #tpu.memory_space<vmem>>, vector<1x16x16xbf16>
    %180 = vector.shape_cast %179 : vector<1x16x16xbf16> to vector<16x16xbf16>
    %cst_42 = arith.constant dense<0.000000e+00> : vector<16x128xf32>
    %181 = tpu.matmul %180, %23, %cst_42 {dimension_numbers = #tpu.dot_dimension_numbers<[1], [0], [0], [1], [0, 0, 1, 1], [], []>} : vector<16x16xbf16>, vector<16x128xbf16>, vector<16x128xf32> -> vector<16x128xf32>
    %182 = vector.extract_strided_slice %31 {offsets = [0, 7], sizes = [16, 1], strides = [1, 1]} : vector<16x512xf32> to vector<16x1xf32>
    %183 = vector.broadcast %182 : vector<16x1xf32> to vector<16x128xf32>
    %184 = arith.mulf %183, %181 : vector<16x128xf32>
    %185 = arith.addf %166, %184 : vector<16x128xf32>
    %186 = vector.extract_strided_slice %31 {offsets = [0, 135], sizes = [16, 1], strides = [1, 1]} : vector<16x512xf32> to vector<16x1xf32>
    %187 = vector.broadcast %186 : vector<16x1xf32> to vector<16x128xf32>
    %188 = arith.mulf %187, %181 : vector<16x128xf32>
    %189 = arith.addf %170, %188 : vector<16x128xf32>
    %190 = vector.extract_strided_slice %31 {offsets = [0, 263], sizes = [16, 1], strides = [1, 1]} : vector<16x512xf32> to vector<16x1xf32>
    %191 = vector.broadcast %190 : vector<16x1xf32> to vector<16x128xf32>
    %192 = arith.mulf %191, %181 : vector<16x128xf32>
    %193 = arith.addf %174, %192 : vector<16x128xf32>
    %194 = vector.extract_strided_slice %31 {offsets = [0, 391], sizes = [16, 1], strides = [1, 1]} : vector<16x512xf32> to vector<16x1xf32>
    %195 = vector.broadcast %194 : vector<16x1xf32> to vector<16x128xf32>
    %196 = arith.mulf %195, %181 : vector<16x128xf32>
    %197 = arith.addf %178, %196 : vector<16x128xf32>
    %c8 = arith.constant 8 : index
    %c0_43 = arith.constant 0 : index
    %c0_44 = arith.constant 0 : index
    %198 = vector.load %arg3[%c8, %c0_43, %c0_44] : memref<16x16x16xbf16, #tpu.memory_space<vmem>>, vector<1x16x16xbf16>
    %199 = vector.shape_cast %198 : vector<1x16x16xbf16> to vector<16x16xbf16>
    %cst_45 = arith.constant dense<0.000000e+00> : vector<16x128xf32>
    %200 = tpu.matmul %199, %23, %cst_45 {dimension_numbers = #tpu.dot_dimension_numbers<[1], [0], [0], [1], [0, 0, 1, 1], [], []>} : vector<16x16xbf16>, vector<16x128xbf16>, vector<16x128xf32> -> vector<16x128xf32>
    %201 = vector.extract_strided_slice %31 {offsets = [0, 8], sizes = [16, 1], strides = [1, 1]} : vector<16x512xf32> to vector<16x1xf32>
    %202 = vector.broadcast %201 : vector<16x1xf32> to vector<16x128xf32>
    %203 = arith.mulf %202, %200 : vector<16x128xf32>
    %204 = arith.addf %185, %203 : vector<16x128xf32>
    %205 = vector.extract_strided_slice %31 {offsets = [0, 136], sizes = [16, 1], strides = [1, 1]} : vector<16x512xf32> to vector<16x1xf32>
    %206 = vector.broadcast %205 : vector<16x1xf32> to vector<16x128xf32>
    %207 = arith.mulf %206, %200 : vector<16x128xf32>
    %208 = arith.addf %189, %207 : vector<16x128xf32>
    %209 = vector.extract_strided_slice %31 {offsets = [0, 264], sizes = [16, 1], strides = [1, 1]} : vector<16x512xf32> to vector<16x1xf32>
    %210 = vector.broadcast %209 : vector<16x1xf32> to vector<16x128xf32>
    %211 = arith.mulf %210, %200 : vector<16x128xf32>
    %212 = arith.addf %193, %211 : vector<16x128xf32>
    %213 = vector.extract_strided_slice %31 {offsets = [0, 392], sizes = [16, 1], strides = [1, 1]} : vector<16x512xf32> to vector<16x1xf32>
    %214 = vector.broadcast %213 : vector<16x1xf32> to vector<16x128xf32>
    %215 = arith.mulf %214, %200 : vector<16x128xf32>
    %216 = arith.addf %197, %215 : vector<16x128xf32>
    %c9 = arith.constant 9 : index
    %c0_46 = arith.constant 0 : index
    %c0_47 = arith.constant 0 : index
    %217 = vector.load %arg3[%c9, %c0_46, %c0_47] : memref<16x16x16xbf16, #tpu.memory_space<vmem>>, vector<1x16x16xbf16>
    %218 = vector.shape_cast %217 : vector<1x16x16xbf16> to vector<16x16xbf16>
    %cst_48 = arith.constant dense<0.000000e+00> : vector<16x128xf32>
    %219 = tpu.matmul %218, %23, %cst_48 {dimension_numbers = #tpu.dot_dimension_numbers<[1], [0], [0], [1], [0, 0, 1, 1], [], []>} : vector<16x16xbf16>, vector<16x128xbf16>, vector<16x128xf32> -> vector<16x128xf32>
    %220 = vector.extract_strided_slice %31 {offsets = [0, 9], sizes = [16, 1], strides = [1, 1]} : vector<16x512xf32> to vector<16x1xf32>
    %221 = vector.broadcast %220 : vector<16x1xf32> to vector<16x128xf32>
    %222 = arith.mulf %221, %219 : vector<16x128xf32>
    %223 = arith.addf %204, %222 : vector<16x128xf32>
    %224 = vector.extract_strided_slice %31 {offsets = [0, 137], sizes = [16, 1], strides = [1, 1]} : vector<16x512xf32> to vector<16x1xf32>
    %225 = vector.broadcast %224 : vector<16x1xf32> to vector<16x128xf32>
    %226 = arith.mulf %225, %219 : vector<16x128xf32>
    %227 = arith.addf %208, %226 : vector<16x128xf32>
    %228 = vector.extract_strided_slice %31 {offsets = [0, 265], sizes = [16, 1], strides = [1, 1]} : vector<16x512xf32> to vector<16x1xf32>
    %229 = vector.broadcast %228 : vector<16x1xf32> to vector<16x128xf32>
    %230 = arith.mulf %229, %219 : vector<16x128xf32>
    %231 = arith.addf %212, %230 : vector<16x128xf32>
    %232 = vector.extract_strided_slice %31 {offsets = [0, 393], sizes = [16, 1], strides = [1, 1]} : vector<16x512xf32> to vector<16x1xf32>
    %233 = vector.broadcast %232 : vector<16x1xf32> to vector<16x128xf32>
    %234 = arith.mulf %233, %219 : vector<16x128xf32>
    %235 = arith.addf %216, %234 : vector<16x128xf32>
    %c10 = arith.constant 10 : index
    %c0_49 = arith.constant 0 : index
    %c0_50 = arith.constant 0 : index
    %236 = vector.load %arg3[%c10, %c0_49, %c0_50] : memref<16x16x16xbf16, #tpu.memory_space<vmem>>, vector<1x16x16xbf16>
    %237 = vector.shape_cast %236 : vector<1x16x16xbf16> to vector<16x16xbf16>
    %cst_51 = arith.constant dense<0.000000e+00> : vector<16x128xf32>
    %238 = tpu.matmul %237, %23, %cst_51 {dimension_numbers = #tpu.dot_dimension_numbers<[1], [0], [0], [1], [0, 0, 1, 1], [], []>} : vector<16x16xbf16>, vector<16x128xbf16>, vector<16x128xf32> -> vector<16x128xf32>
    %239 = vector.extract_strided_slice %31 {offsets = [0, 10], sizes = [16, 1], strides = [1, 1]} : vector<16x512xf32> to vector<16x1xf32>
    %240 = vector.broadcast %239 : vector<16x1xf32> to vector<16x128xf32>
    %241 = arith.mulf %240, %238 : vector<16x128xf32>
    %242 = arith.addf %223, %241 : vector<16x128xf32>
    %243 = vector.extract_strided_slice %31 {offsets = [0, 138], sizes = [16, 1], strides = [1, 1]} : vector<16x512xf32> to vector<16x1xf32>
    %244 = vector.broadcast %243 : vector<16x1xf32> to vector<16x128xf32>
    %245 = arith.mulf %244, %238 : vector<16x128xf32>
    %246 = arith.addf %227, %245 : vector<16x128xf32>
    %247 = vector.extract_strided_slice %31 {offsets = [0, 266], sizes = [16, 1], strides = [1, 1]} : vector<16x512xf32> to vector<16x1xf32>
    %248 = vector.broadcast %247 : vector<16x1xf32> to vector<16x128xf32>
    %249 = arith.mulf %248, %238 : vector<16x128xf32>
    %250 = arith.addf %231, %249 : vector<16x128xf32>
    %251 = vector.extract_strided_slice %31 {offsets = [0, 394], sizes = [16, 1], strides = [1, 1]} : vector<16x512xf32> to vector<16x1xf32>
    %252 = vector.broadcast %251 : vector<16x1xf32> to vector<16x128xf32>
    %253 = arith.mulf %252, %238 : vector<16x128xf32>
    %254 = arith.addf %235, %253 : vector<16x128xf32>
    %c11 = arith.constant 11 : index
    %c0_52 = arith.constant 0 : index
    %c0_53 = arith.constant 0 : index
    %255 = vector.load %arg3[%c11, %c0_52, %c0_53] : memref<16x16x16xbf16, #tpu.memory_space<vmem>>, vector<1x16x16xbf16>
    %256 = vector.shape_cast %255 : vector<1x16x16xbf16> to vector<16x16xbf16>
    %cst_54 = arith.constant dense<0.000000e+00> : vector<16x128xf32>
    %257 = tpu.matmul %256, %23, %cst_54 {dimension_numbers = #tpu.dot_dimension_numbers<[1], [0], [0], [1], [0, 0, 1, 1], [], []>} : vector<16x16xbf16>, vector<16x128xbf16>, vector<16x128xf32> -> vector<16x128xf32>
    %258 = vector.extract_strided_slice %31 {offsets = [0, 11], sizes = [16, 1], strides = [1, 1]} : vector<16x512xf32> to vector<16x1xf32>
    %259 = vector.broadcast %258 : vector<16x1xf32> to vector<16x128xf32>
    %260 = arith.mulf %259, %257 : vector<16x128xf32>
    %261 = arith.addf %242, %260 : vector<16x128xf32>
    %262 = vector.extract_strided_slice %31 {offsets = [0, 139], sizes = [16, 1], strides = [1, 1]} : vector<16x512xf32> to vector<16x1xf32>
    %263 = vector.broadcast %262 : vector<16x1xf32> to vector<16x128xf32>
    %264 = arith.mulf %263, %257 : vector<16x128xf32>
    %265 = arith.addf %246, %264 : vector<16x128xf32>
    %266 = vector.extract_strided_slice %31 {offsets = [0, 267], sizes = [16, 1], strides = [1, 1]} : vector<16x512xf32> to vector<16x1xf32>
    %267 = vector.broadcast %266 : vector<16x1xf32> to vector<16x128xf32>
    %268 = arith.mulf %267, %257 : vector<16x128xf32>
    %269 = arith.addf %250, %268 : vector<16x128xf32>
    %270 = vector.extract_strided_slice %31 {offsets = [0, 395], sizes = [16, 1], strides = [1, 1]} : vector<16x512xf32> to vector<16x1xf32>
    %271 = vector.broadcast %270 : vector<16x1xf32> to vector<16x128xf32>
    %272 = arith.mulf %271, %257 : vector<16x128xf32>
    %273 = arith.addf %254, %272 : vector<16x128xf32>
    %c12 = arith.constant 12 : index
    %c0_55 = arith.constant 0 : index
    %c0_56 = arith.constant 0 : index
    %274 = vector.load %arg3[%c12, %c0_55, %c0_56] : memref<16x16x16xbf16, #tpu.memory_space<vmem>>, vector<1x16x16xbf16>
    %275 = vector.shape_cast %274 : vector<1x16x16xbf16> to vector<16x16xbf16>
    %cst_57 = arith.constant dense<0.000000e+00> : vector<16x128xf32>
    %276 = tpu.matmul %275, %23, %cst_57 {dimension_numbers = #tpu.dot_dimension_numbers<[1], [0], [0], [1], [0, 0, 1, 1], [], []>} : vector<16x16xbf16>, vector<16x128xbf16>, vector<16x128xf32> -> vector<16x128xf32>
    %277 = vector.extract_strided_slice %31 {offsets = [0, 12], sizes = [16, 1], strides = [1, 1]} : vector<16x512xf32> to vector<16x1xf32>
    %278 = vector.broadcast %277 : vector<16x1xf32> to vector<16x128xf32>
    %279 = arith.mulf %278, %276 : vector<16x128xf32>
    %280 = arith.addf %261, %279 : vector<16x128xf32>
    %281 = vector.extract_strided_slice %31 {offsets = [0, 140], sizes = [16, 1], strides = [1, 1]} : vector<16x512xf32> to vector<16x1xf32>
    %282 = vector.broadcast %281 : vector<16x1xf32> to vector<16x128xf32>
    %283 = arith.mulf %282, %276 : vector<16x128xf32>
    %284 = arith.addf %265, %283 : vector<16x128xf32>
    %285 = vector.extract_strided_slice %31 {offsets = [0, 268], sizes = [16, 1], strides = [1, 1]} : vector<16x512xf32> to vector<16x1xf32>
    %286 = vector.broadcast %285 : vector<16x1xf32> to vector<16x128xf32>
    %287 = arith.mulf %286, %276 : vector<16x128xf32>
    %288 = arith.addf %269, %287 : vector<16x128xf32>
    %289 = vector.extract_strided_slice %31 {offsets = [0, 396], sizes = [16, 1], strides = [1, 1]} : vector<16x512xf32> to vector<16x1xf32>
    %290 = vector.broadcast %289 : vector<16x1xf32> to vector<16x128xf32>
    %291 = arith.mulf %290, %276 : vector<16x128xf32>
    %292 = arith.addf %273, %291 : vector<16x128xf32>
    %c13 = arith.constant 13 : index
    %c0_58 = arith.constant 0 : index
    %c0_59 = arith.constant 0 : index
    %293 = vector.load %arg3[%c13, %c0_58, %c0_59] : memref<16x16x16xbf16, #tpu.memory_space<vmem>>, vector<1x16x16xbf16>
    %294 = vector.shape_cast %293 : vector<1x16x16xbf16> to vector<16x16xbf16>
    %cst_60 = arith.constant dense<0.000000e+00> : vector<16x128xf32>
    %295 = tpu.matmul %294, %23, %cst_60 {dimension_numbers = #tpu.dot_dimension_numbers<[1], [0], [0], [1], [0, 0, 1, 1], [], []>} : vector<16x16xbf16>, vector<16x128xbf16>, vector<16x128xf32> -> vector<16x128xf32>
    %296 = vector.extract_strided_slice %31 {offsets = [0, 13], sizes = [16, 1], strides = [1, 1]} : vector<16x512xf32> to vector<16x1xf32>
    %297 = vector.broadcast %296 : vector<16x1xf32> to vector<16x128xf32>
    %298 = arith.mulf %297, %295 : vector<16x128xf32>
    %299 = arith.addf %280, %298 : vector<16x128xf32>
    %300 = vector.extract_strided_slice %31 {offsets = [0, 141], sizes = [16, 1], strides = [1, 1]} : vector<16x512xf32> to vector<16x1xf32>
    %301 = vector.broadcast %300 : vector<16x1xf32> to vector<16x128xf32>
    %302 = arith.mulf %301, %295 : vector<16x128xf32>
    %303 = arith.addf %284, %302 : vector<16x128xf32>
    %304 = vector.extract_strided_slice %31 {offsets = [0, 269], sizes = [16, 1], strides = [1, 1]} : vector<16x512xf32> to vector<16x1xf32>
    %305 = vector.broadcast %304 : vector<16x1xf32> to vector<16x128xf32>
    %306 = arith.mulf %305, %295 : vector<16x128xf32>
    %307 = arith.addf %288, %306 : vector<16x128xf32>
    %308 = vector.extract_strided_slice %31 {offsets = [0, 397], sizes = [16, 1], strides = [1, 1]} : vector<16x512xf32> to vector<16x1xf32>
    %309 = vector.broadcast %308 : vector<16x1xf32> to vector<16x128xf32>
    %310 = arith.mulf %309, %295 : vector<16x128xf32>
    %311 = arith.addf %292, %310 : vector<16x128xf32>
    %c14 = arith.constant 14 : index
    %c0_61 = arith.constant 0 : index
    %c0_62 = arith.constant 0 : index
    %312 = vector.load %arg3[%c14, %c0_61, %c0_62] : memref<16x16x16xbf16, #tpu.memory_space<vmem>>, vector<1x16x16xbf16>
    %313 = vector.shape_cast %312 : vector<1x16x16xbf16> to vector<16x16xbf16>
    %cst_63 = arith.constant dense<0.000000e+00> : vector<16x128xf32>
    %314 = tpu.matmul %313, %23, %cst_63 {dimension_numbers = #tpu.dot_dimension_numbers<[1], [0], [0], [1], [0, 0, 1, 1], [], []>} : vector<16x16xbf16>, vector<16x128xbf16>, vector<16x128xf32> -> vector<16x128xf32>
    %315 = vector.extract_strided_slice %31 {offsets = [0, 14], sizes = [16, 1], strides = [1, 1]} : vector<16x512xf32> to vector<16x1xf32>
    %316 = vector.broadcast %315 : vector<16x1xf32> to vector<16x128xf32>
    %317 = arith.mulf %316, %314 : vector<16x128xf32>
    %318 = arith.addf %299, %317 : vector<16x128xf32>
    %319 = vector.extract_strided_slice %31 {offsets = [0, 142], sizes = [16, 1], strides = [1, 1]} : vector<16x512xf32> to vector<16x1xf32>
    %320 = vector.broadcast %319 : vector<16x1xf32> to vector<16x128xf32>
    %321 = arith.mulf %320, %314 : vector<16x128xf32>
    %322 = arith.addf %303, %321 : vector<16x128xf32>
    %323 = vector.extract_strided_slice %31 {offsets = [0, 270], sizes = [16, 1], strides = [1, 1]} : vector<16x512xf32> to vector<16x1xf32>
    %324 = vector.broadcast %323 : vector<16x1xf32> to vector<16x128xf32>
    %325 = arith.mulf %324, %314 : vector<16x128xf32>
    %326 = arith.addf %307, %325 : vector<16x128xf32>
    %327 = vector.extract_strided_slice %31 {offsets = [0, 398], sizes = [16, 1], strides = [1, 1]} : vector<16x512xf32> to vector<16x1xf32>
    %328 = vector.broadcast %327 : vector<16x1xf32> to vector<16x128xf32>
    %329 = arith.mulf %328, %314 : vector<16x128xf32>
    %330 = arith.addf %311, %329 : vector<16x128xf32>
    %c15 = arith.constant 15 : index
    %c0_64 = arith.constant 0 : index
    %c0_65 = arith.constant 0 : index
    %331 = vector.load %arg3[%c15, %c0_64, %c0_65] : memref<16x16x16xbf16, #tpu.memory_space<vmem>>, vector<1x16x16xbf16>
    %332 = vector.shape_cast %331 : vector<1x16x16xbf16> to vector<16x16xbf16>
    %cst_66 = arith.constant dense<0.000000e+00> : vector<16x128xf32>
    %333 = tpu.matmul %332, %23, %cst_66 {dimension_numbers = #tpu.dot_dimension_numbers<[1], [0], [0], [1], [0, 0, 1, 1], [], []>} : vector<16x16xbf16>, vector<16x128xbf16>, vector<16x128xf32> -> vector<16x128xf32>
    %334 = vector.extract_strided_slice %31 {offsets = [0, 15], sizes = [16, 1], strides = [1, 1]} : vector<16x512xf32> to vector<16x1xf32>
    %335 = vector.broadcast %334 : vector<16x1xf32> to vector<16x128xf32>
    %336 = arith.mulf %335, %333 : vector<16x128xf32>
    %337 = arith.addf %318, %336 : vector<16x128xf32>
    %338 = vector.extract_strided_slice %31 {offsets = [0, 143], sizes = [16, 1], strides = [1, 1]} : vector<16x512xf32> to vector<16x1xf32>
    %339 = vector.broadcast %338 : vector<16x1xf32> to vector<16x128xf32>
    %340 = arith.mulf %339, %333 : vector<16x128xf32>
    %341 = arith.addf %322, %340 : vector<16x128xf32>
    %342 = vector.extract_strided_slice %31 {offsets = [0, 271], sizes = [16, 1], strides = [1, 1]} : vector<16x512xf32> to vector<16x1xf32>
    %343 = vector.broadcast %342 : vector<16x1xf32> to vector<16x128xf32>
    %344 = arith.mulf %343, %333 : vector<16x128xf32>
    %345 = arith.addf %326, %344 : vector<16x128xf32>
    %346 = vector.extract_strided_slice %31 {offsets = [0, 399], sizes = [16, 1], strides = [1, 1]} : vector<16x512xf32> to vector<16x1xf32>
    %347 = vector.broadcast %346 : vector<16x1xf32> to vector<16x128xf32>
    %348 = arith.mulf %347, %333 : vector<16x128xf32>
    %349 = arith.addf %330, %348 : vector<16x128xf32>
    %350 = tpu.concatenate %337, %341, %345, %349 in 1 : vector<16x128xf32>, vector<16x128xf32>, vector<16x128xf32>, vector<16x128xf32> -> vector<16x512xf32>
    %c0_67 = arith.constant 0 : index
    %c0_68 = arith.constant 0 : index
    %351 = vector.load %arg8[%c0_67, %c0_68] : memref<16x512xf32, #tpu.memory_space<vmem>>, vector<16x512xf32>
    tpu.vector_store %arg8[%c0_67, %c0_68], %350 {strides = array<i32>} : memref<16x512xf32, #tpu.memory_space<vmem>>, vector<16x512xf32>,
    return
  }
  func.func @transform_0(%arg0: i32) -> (i32, i32) {
    %c0_i32 = arith.constant 0 : i32
    %c0_i32_0 = arith.constant 0 : i32
    return %arg0, %c0_i32 : i32, i32
  }
  func.func @transform_1(%arg0: i32) -> (i32, i32) {
    %c0_i32 = arith.constant 0 : i32
    %c0_i32_0 = arith.constant 0 : i32
    %c0_i32_1 = arith.constant 0 : i32
    return %c0_i32, %c0_i32_0 : i32, i32
  }
  func.func @transform_2(%arg0: i32) -> (i32, i32, i32) {
    %c0_i32 = arith.constant 0 : i32
    %c0_i32_0 = arith.constant 0 : i32
    %c0_i32_1 = arith.constant 0 : i32
    %c0_i32_2 = arith.constant 0 : i32
    return %c0_i32, %c0_i32_0, %c0_i32_1 : i32, i32, i32
  }
  func.func @transform_3(%arg0: i32) -> (i32, i32) {
    %c0_i32 = arith.constant 0 : i32
    %c0_i32_0 = arith.constant 0 : i32
    %c0_i32_1 = arith.constant 0 : i32
    return %c0_i32, %c0_i32_0 : i32, i32
  }
  func.func @transform_4(%arg0: i32) -> (i32, i32) {
    %c0_i32 = arith.constant 0 : i32
    %c0_i32_0 = arith.constant 0 : i32
    %c0_i32_1 = arith.constant 0 : i32
    return %c0_i32, %c0_i32_0 : i32, i32
  }
  func.func @transform_5(%arg0: i32) -> (i32, i32) {
    %c0_i32 = arith.constant 0 : i32
    %c0_i32_0 = arith.constant 0 : i32
    %c0_i32_1 = arith.constant 0 : i32
    return %c0_i32, %c0_i32_0 : i32, i32
  }
  func.func @transform_6(%arg0: i32) -> (i32, i32) {
    %c0_i32 = arith.constant 0 : i32
    %c0_i32_0 = arith.constant 0 : i32
    %c0_i32_1 = arith.constant 0 : i32
    return %c0_i32, %c0_i32_0 : i32, i32
  }
  func.func @transform_7(%arg0: i32) -> (i32, i32) {
    %c0_i32 = arith.constant 0 : i32
    %c0_i32_0 = arith.constant 0 : i32
    return %arg0, %c0_i32 : i32, i32
  }
}

</mosaic_0001>

<llo_original>
// kernel: lambda_layer_forward.2
$region0: #{lambda_layer_forward.2}
  #allocation0 [shape = 'u32[]', space=smem, size = 0x4, offset = 0x4, fixed_abs, tag = 'smem constant byte address 0x4 - core index']
  #allocation1 [shape = 'u32[72,128]{1,0:T(1,128)}', space=vmem, size = 0x9000, scoped, tag = 'internal scratch']
  %s0 = inlined_call_operand.vmem [shape: bf16[32,32], index: 0, kind: input, shape index: {}]
  %s1 = inlined_call_operand.vmem [shape: bf16[32,768], index: 1, kind: input, shape index: {}]
  %s2 = inlined_call_operand.vmem [shape: f32[16,1], index: 2, kind: output, shape index: {0}]
  %s3 = inlined_call_operand.vmem [shape: f32[16,1], index: 3, kind: output, shape index: {1}]
  %s4 = inlined_call_operand.vmem [shape: f32[1,128], index: 4, kind: output, shape index: {2}]
  %s5 = inlined_call_operand.vmem [shape: f32[1,128], index: 5, kind: output, shape index: {3}]
  %6 = xla_tuple %s2, %s3, %s4, %s5
  %s7 = sld [smem:[#allocation0]]
  $region69: #{lambda_layer_forward.2} parent=0
    _
  %s9 = ssub.s32 1, %s7
  %s10 = scalar_select 0, %s9, %s7
  loop: start=0, step=1, limit=4
  $region2: #{lambda_layer_forward.2} parent=0 // loop_pre_header
    _
  $region3: #{lambda_layer_forward.2} parent=0 // loop_header
    %s12 = sphi 0, %s16
    %p13 = scmp.ge.s32.totalorder %s12, 4
    %s22 = sphi 0, %s24
    %s25 = sphi 0, %s22
    %s26 = sphi 0, %s25
    %s42 = sphi 0, %s26
    %s46 = sphi 0, %s46
    %s48 = sphi 0, %s46
    %s49 = sphi 0, %s48
    %s63 = sphi 0, %s49
    %s67 = sphi 0, %s67
    %s69 = sphi 0, %s67
    %s70 = sphi 0, %s69
    %s84 = sphi 0, %s70
    %s88 = sphi 0, %s88
    %s90 = sphi 0, %s88
    %s91 = sphi 0, %s90
    %s105 = sphi 0, %s91
    %s109 = sphi 0, %s109
    %s111 = sphi 0, %s109
    %s112 = sphi 0, %s111
    %s126 = sphi 0, %s112
    %s130 = sphi 0, %s130
    %s132 = sphi 0, %s130
    %s133 = sphi 0, %s132
    %s147 = sphi 0, %s133
  $region4: #{lambda_layer_forward.2} parent=0 // loop_header_branch
    %15 = sbr.rel (%p13) target = $region8
  $region5: #{lambda_layer_forward.2} parent=0 // loop_body
    %s17 = ssub.s32 %s12, 1
    %s18 = ssub.s32 %s12, 2
    %s19 = sadd.s32 %s12, 1
    %s20 = ssub.s32 %s12, %s19
    %p21 = scmp.eq.s32.totalorder %s20, 0
    %s23 = sadd.s32 %s22, 1
    %s24 = scalar_select %p21, %s22, %s23
    %p27 = pneg %p21
    %p28 = scmp.eq.s32.totalorder %s12, 1
    %p29 = por %p27, %p28
    %p30 = scmp.ne.s32.totalorder %s22, %s25
    %p31 = scmp.eq.s32.totalorder %s12, 0
    %p32 = por %p30, %p31
    %p33 = scmp.ne.s32.totalorder %s22, %s25
    %p34 = scmp.eq.s32.totalorder %s17, 1
    %p35 = por %p33, %p34
    %p36 = scmp.ne.s32.totalorder %s25, %s26
    %p37 = scmp.eq.s32.totalorder %s17, 0
    %p38 = por %p36, %p37
    %p39 = scmp.ne.s32.totalorder %s25, %s26
    %p40 = scmp.eq.s32.totalorder %s18, 1
    %p41 = por %p39, %p40
    %p43 = scmp.ne.s32.totalorder %s26, %s42
    %p44 = scmp.eq.s32.totalorder %s18, 0
    %p45 = por %p43, %p44
    %s47 = sadd.s32 %s46, 1
    %p50 = scmp.eq.s32.totalorder %s12, 1
    %p51 = scmp.ne.s32.totalorder %s46, %s48
    %p52 = scmp.eq.s32.totalorder %s12, 0
    %p53 = por %p51, %p52
    %p54 = scmp.ne.s32.totalorder %s46, %s48
    %p55 = scmp.eq.s32.totalorder %s17, 1
    %p56 = por %p54, %p55
    %p57 = scmp.ne.s32.totalorder %s48, %s49
    %p58 = scmp.eq.s32.totalorder %s17, 0
    %p59 = por %p57, %p58
    %p60 = scmp.ne.s32.totalorder %s48, %s49
    %p61 = scmp.eq.s32.totalorder %s18, 1
    %p62 = por %p60, %p61
    %p64 = scmp.ne.s32.totalorder %s49, %s63
    %p65 = scmp.eq.s32.totalorder %s18, 0
    %p66 = por %p64, %p65
    %s68 = sadd.s32 %s67, 1
    %p71 = scmp.eq.s32.totalorder %s12, 1
    %p72 = scmp.ne.s32.totalorder %s67, %s69
    %p73 = scmp.eq.s32.totalorder %s12, 0
    %p74 = por %p72, %p73
    %p75 = scmp.ne.s32.totalorder %s67, %s69
    %p76 = scmp.eq.s32.totalorder %s17, 1
    %p77 = por %p75, %p76
    %p78 = scmp.ne.s32.totalorder %s69, %s70
    %p79 = scmp.eq.s32.totalorder %s17, 0
    %p80 = por %p78, %p79
    %p81 = scmp.ne.s32.totalorder %s69, %s70
    %p82 = scmp.eq.s32.totalorder %s18, 1
    %p83 = por %p81, %p82
    %p85 = scmp.ne.s32.totalorder %s70, %s84
    %p86 = scmp.eq.s32.totalorder %s18, 0
    %p87 = por %p85, %p86
    %s89 = sadd.s32 %s88, 1
    %p92 = scmp.eq.s32.totalorder %s12, 1
    %p93 = scmp.ne.s32.totalorder %s88, %s90
    %p94 = scmp.eq.s32.totalorder %s12, 0
    %p95 = por %p93, %p94
    %p96 = scmp.ne.s32.totalorder %s88, %s90
    %p97 = scmp.eq.s32.totalorder %s17, 1
    %p98 = por %p96, %p97
    %p99 = scmp.ne.s32.totalorder %s90, %s91
    %p100 = scmp.eq.s32.totalorder %s17, 0
    %p101 = por %p99, %p100
    %p102 = scmp.ne.s32.totalorder %s90, %s91
    %p103 = scmp.eq.s32.totalorder %s18, 1
    %p104 = por %p102, %p103
    %p106 = scmp.ne.s32.totalorder %s91, %s105
    %p107 = scmp.eq.s32.totalorder %s18, 0
    %p108 = por %p106, %p107
    %s110 = sadd.s32 %s109, 1
    %p113 = scmp.eq.s32.totalorder %s12, 1
    %p114 = scmp.ne.s32.totalorder %s109, %s111
    %p115 = scmp.eq.s32.totalorder %s12, 0
    %p116 = por %p114, %p115
    %p117 = scmp.ne.s32.totalorder %s109, %s111
    %p118 = scmp.eq.s32.totalorder %s17, 1
    %p119 = por %p117, %p118
    %p120 = scmp.ne.s32.totalorder %s111, %s112
    %p121 = scmp.eq.s32.totalorder %s17, 0
    %p122 = por %p120, %p121
    %p123 = scmp.ne.s32.totalorder %s111, %s112
    %p124 = scmp.eq.s32.totalorder %s18, 1
    %p125 = por %p123, %p124
    %p127 = scmp.ne.s32.totalorder %s112, %s126
    %p128 = scmp.eq.s32.totalorder %s18, 0
    %p129 = por %p127, %p128
    %s131 = sadd.s32 %s130, 1
    %p134 = scmp.eq.s32.totalorder %s12, 1
    %p135 = scmp.ne.s32.totalorder %s130, %s132
    %p136 = scmp.eq.s32.totalorder %s12, 0
    %p137 = por %p135, %p136
    %p138 = scmp.ne.s32.totalorder %s130, %s132
    %p139 = scmp.eq.s32.totalorder %s17, 1
    %p140 = por %p138, %p139
    %p141 = scmp.ne.s32.totalorder %s132, %s133
    %p142 = scmp.eq.s32.totalorder %s17, 0
    %p143 = por %p141, %p142
    %p144 = scmp.ne.s32.totalorder %s132, %s133
    %p145 = scmp.eq.s32.totalorder %s18, 1
    %p146 = por %p144, %p145
    %p148 = scmp.ne.s32.totalorder %s133, %s147
    %p149 = scmp.eq.s32.totalorder %s18, 0
    %p150 = por %p148, %p149
    %p151 = scmp.le.s32.totalorder 1, %s12
    %p152 = scmp.lt.s32.totalorder %s12, 3
    %p153 = pnand %p151, %p152
    %p154 = pneg %p153
    // Predicated region
    $region9: #{lambda_layer_forward.2} parent=5 // pred_check
      _
    $region10: #{lambda_layer_forward.2} parent=5 // pred_check_branch
      %156 = sbr.rel (%p153) target = $region12
    $region11: #{lambda_layer_forward.2} parent=5 // pred_region
      %s157 = ssub.s32 %s12, 1
      // Predicated region
      $region13: #{lambda_layer_forward.2} parent=11 // pred_check
        %p158 = pneg %p59
      $region14: #{lambda_layer_forward.2} parent=11 // pred_check_branch
        %160 = sbr.rel (%p158) target = $region16
      $region15: #{lambda_layer_forward.2} parent=11 // pred_region
        _
      $region16: #{lambda_layer_forward.2} parent=11 // pred_fallthru
        _
    $region12: #{lambda_layer_forward.2} parent=5 // pred_fallthru
      _
    %p161 = scmp.lt.s32.totalorder %s12, 2
    // Predicated region
    $region17: #{lambda_layer_forward.2} parent=5 // pred_check
      %p162 = pneg %p161
    $region18: #{lambda_layer_forward.2} parent=5 // pred_check_branch
      %164 = sbr.rel (%p162) target = $region20
    $region19: #{lambda_layer_forward.2} parent=5 // pred_region
      // Predicated region
      $region21: #{lambda_layer_forward.2} parent=19 // pred_check
        %p165 = pneg %p32
      $region22: #{lambda_layer_forward.2} parent=19 // pred_check_branch
        %167 = sbr.rel (%p165) target = $region24
      $region23: #{lambda_layer_forward.2} parent=19 // pred_region
        %s168 = smul.u32 2, %s12
        %p169 = scmp.lt.s32.totalorder %s168, 3
        %s170 = scalar_select %p169, %s168, 3
        %s171 = smul.addr %s170, 4
        %s172 = scalar_lea.vmem %s0, %s171
        %s173 = smul.u32 2, %s12
      $region24: #{lambda_layer_forward.2} parent=19 // pred_fallthru
        _
    $region20: #{lambda_layer_forward.2} parent=5 // pred_fallthru
      _
    %p174 = scmp.le.s32.totalorder 1, %s12
    %p175 = scmp.lt.s32.totalorder %s12, 3
    %p176 = pnand %p174, %p175
    %p177 = pneg %p176
    // Predicated region
    $region25: #{lambda_layer_forward.2} parent=5 // pred_check
      _
    $region26: #{lambda_layer_forward.2} parent=5 // pred_check_branch
      %179 = sbr.rel (%p176) target = $region28
    $region27: #{lambda_layer_forward.2} parent=5 // pred_region
      %s180 = ssub.s32 %s12, 1
      %s181 = smul.u32 2, %s17
      %p182 = scmp.lt.s32.totalorder %s181, 3
      %s183 = scalar_select %p182, %s181, 3
      %s184 = smul.addr %s183, 4
      %s185 = scalar_lea.vmem %s0, %s184
      %p186 = pneg %p38
      %p187 = pneg %p35
      %p188 = pneg %p59
      %p189 = pneg %p56
      %p190 = pneg %p80
      %p191 = pneg %p77
      %p192 = pneg %p101
      %p193 = pneg %p98
      %p194 = pneg %p122
      %p195 = pneg %p119
      %p196 = pneg %p143
      %p197 = pneg %p140
      %s198 = smul.u32 2, %s17
      %p199 = scmp.lt.s32.totalorder %s198, 3
      %s200 = scalar_select %p199, %s198, 3
      %s201 = smul.addr %s200, 4
      %s202 = scalar_lea.vmem %s0, %s201
      %s203 = smul.u32 2, %s17
      %p205 = scmp.eq.s32.totalorder %s17, 0
      // Predicated region
      $region29: #{lambda_layer_forward.2} parent=27 // pred_check
        %p206 = pneg %p205
      $region30: #{lambda_layer_forward.2} parent=27 // pred_check_branch
        %208 = sbr.rel (%p206) target = $region32
      $region31: #{lambda_layer_forward.2} parent=27 // pred_region
        %vm209 = vcmask 7168
        %210 = vst.msk [vmem:[%s2] sm:$0xff] %vm209, 0.0
        %211 = vst.msk [vmem:[%s2 + $0x8] sm:$0xff] %vm209, 0.0
        %212 = vst.msk [vmem:[%s3] sm:$0xff] %vm209, 0.0
        %213 = vst.msk [vmem:[%s3 + $0x8] sm:$0xff] %vm209, 0.0
        %214 = vst [vmem:[%s4] sm:$0x1] 0.0
        %215 = vst [vmem:[%s5] sm:$0x1] 0.0
      $region32: #{lambda_layer_forward.2} parent=27 // pred_fallthru
        _
      %v216 = vld [vmem:[%s202] sm:$0xf]
      %v217 = vld [vmem:[%s202 + $0x4] sm:$0xf]
      %v218 = vld [vmem:[%s1 + $0x4] sm:$0xff]
      %v219 = vld [vmem:[%s1 + $0xc] sm:$0xff]
      %v220 = vld [vmem:[%s1 + $0x14] sm:$0xf]
      %v221 = vld [vmem:[%s1 + $0x1c] sm:$0xff]
      %v222 = vld [vmem:[%s1 + $0x24] sm:$0xff]
      %v223 = vld [vmem:[%s1 + $0x2c] sm:$0xf]
      %v224 = vld [vmem:[%s1 + $0x34] sm:$0xff]
      %v225 = vld [vmem:[%s1 + $0x3c] sm:$0xff]
      %v226 = vld [vmem:[%s1 + $0x44] sm:$0xf]
      %v227 = vld [vmem:[%s1 + $0x4c] sm:$0xff]
      %v228 = vld [vmem:[%s1 + $0x54] sm:$0xff]
      %v229 = vld [vmem:[%s1 + $0x5c] sm:$0xf]
      %v232 = vunpack.c.l.b16 %v216
      %v233 = vunpack.c.l.b16 %v217
      %v234 = vpack.c.b16 %v233, %v232
      %v247 = vunpack.c.l.b16 %v218
      %v248 = vunpack.c.h.b16 %v218
      %v249 = vunpack.c.l.b16 %v219
      %v250 = vunpack.c.h.b16 %v219
      %v251 = vunpack.c.l.b16 %v220
      %v252 = vunpack.c.l.b16 %v221
      %v253 = vunpack.c.h.b16 %v221
      %v254 = vunpack.c.l.b16 %v222
      %v255 = vunpack.c.h.b16 %v222
      %v256 = vunpack.c.l.b16 %v223
      %v257 = vunpack.c.l.b16 %v224
      %v258 = vunpack.c.h.b16 %v224
      %v259 = vunpack.c.l.b16 %v225
      %v260 = vunpack.c.h.b16 %v225
      %v261 = vunpack.c.l.b16 %v226
      %v262 = vunpack.c.l.b16 %v227
      %v263 = vunpack.c.h.b16 %v227
      %v264 = vunpack.c.l.b16 %v228
      %v265 = vunpack.c.h.b16 %v228
      %v266 = vunpack.c.l.b16 %v229
      %v267 = vpack.c.b16 %v252, %v247
      %v268 = vpack.c.b16 %v253, %v248
      %v269 = vpack.c.b16 %v254, %v249
      %v270 = vpack.c.b16 %v255, %v250
      %v271 = vpack.c.b16 %v256, %v251
      %v272 = vpack.c.b16 %v262, %v257
      %v273 = vpack.c.b16 %v263, %v258
      %v274 = vpack.c.b16 %v264, %v259
      %v275 = vpack.c.b16 %v265, %v260
      %v276 = vpack.c.b16 %v266, %v261
      %vm287 = vcmask 261120
      %v289 = vsel %vm287, %v234, 0
      %291 = vmatpush.bf16.msra.mxu0 0
      %292 = vmatpush.bf16.msra.mxu0 0
      %293 = vmatpush.bf16.msra.mxu0 0
      %294 = vmatpush.bf16.msra.mxu0 0
      %295 = vmatpush.bf16.msra.mxu0 0
      %296 = vmatpush.bf16.msra.mxu0 0
      %297 = vmatpush.bf16.msra.mxu0 %v272
      %298 = vmatpush.bf16.msra.mxu0 %v267
      %299 = vmatmul.bf16.gmra.mxu0 %v289
      %v300 = vpop.f32.mrf.mxu0
      %v301 = vadd.f32 0.0, %v300
      %v302 = vpop.f32.mrf.mxu0
      %v303 = vadd.f32 0.0, %v302
      %304 = vdwg.mxu0
      %305 = vmatpush.bf16.msra.mxu0 0
      %306 = vmatpush.bf16.msra.mxu0 0
      %307 = vmatpush.bf16.msra.mxu0 0
      %308 = vmatpush.bf16.msra.mxu0 0
      %309 = vmatpush.bf16.msra.mxu0 0
      %310 = vmatpush.bf16.msra.mxu0 0
      %311 = vmatpush.bf16.msra.mxu0 %v273
      %312 = vmatpush.bf16.msra.mxu0 %v268
      %313 = vmatmul.bf16.gmra.mxu0 %v289
      %v314 = vpop.f32.mrf.mxu0
      %v315 = vadd.f32 0.0, %v314
      %v316 = vpop.f32.mrf.mxu0
      %v317 = vadd.f32 0.0, %v316
      %318 = vdwg.mxu0
      %319 = vmatpush.bf16.msra.mxu0 0
      %320 = vmatpush.bf16.msra.mxu0 0
      %321 = vmatpush.bf16.msra.mxu0 0
      %322 = vmatpush.bf16.msra.mxu0 0
      %323 = vmatpush.bf16.msra.mxu0 0
      %324 = vmatpush.bf16.msra.mxu0 0
      %325 = vmatpush.bf16.msra.mxu0 %v274
      %326 = vmatpush.bf16.msra.mxu0 %v269
      %327 = vmatmul.bf16.gmra.mxu0 %v289
      %v328 = vpop.f32.mrf.mxu0
      %v329 = vadd.f32 0.0, %v328
      %v330 = vpop.f32.mrf.mxu0
      %v331 = vadd.f32 0.0, %v330
      %332 = vdwg.mxu0
      %333 = vmatpush.bf16.msra.mxu0 0
      %334 = vmatpush.bf16.msra.mxu0 0
      %335 = vmatpush.bf16.msra.mxu0 0
      %336 = vmatpush.bf16.msra.mxu0 0
      %337 = vmatpush.bf16.msra.mxu0 0
      %338 = vmatpush.bf16.msra.mxu0 0
      %339 = vmatpush.bf16.msra.mxu0 %v275
      %340 = vmatpush.bf16.msra.mxu0 %v270
      %341 = vmatmul.bf16.gmra.mxu0 %v289
      %v342 = vpop.f32.mrf.mxu0
      %v343 = vadd.f32 0.0, %v342
      %v344 = vpop.f32.mrf.mxu0
      %v345 = vadd.f32 0.0, %v344
      %346 = vdwg.mxu0
      %347 = vmatpush.bf16.msra.mxu0 0
      %348 = vmatpush.bf16.msra.mxu0 0
      %349 = vmatpush.bf16.msra.mxu0 0
      %350 = vmatpush.bf16.msra.mxu0 0
      %351 = vmatpush.bf16.msra.mxu0 0
      %352 = vmatpush.bf16.msra.mxu0 0
      %353 = vmatpush.bf16.msra.mxu0 %v276
      %354 = vmatpush.bf16.msra.mxu0 %v271
      %355 = vmatmul.bf16.gmra.mxu0 %v289
      %v356 = vpop.f32.mrf.mxu0
      %v357 = vadd.f32 0.0, %v356
      %v358 = vpop.f32.mrf.mxu0
      %v359 = vadd.f32 0.0, %v358
      %360 = vdwg.mxu0
      %v361 = vld [vmem:[%s2] sm:$0xff]
      %v362 = vld [vmem:[%s2 + $0x8] sm:$0xff]
      %363 = vadd.xlane.f32.xlu0 %v301
      %v364 = vpop.xlane.xlu0 %363
      %365 = vadd.xlane.f32.xlu0 %v303
      %v366 = vpop.xlane.xlu0 %365
      %v367 = vadd.f32 %v361, %v364
      %v368 = vadd.f32 %v362, %v366
      %vm369 = vcmask 7168
      %370 = vst.msk [vmem:[%s2] sm:$0xff] %vm369, %v367
      %371 = vst.msk [vmem:[%s2 + $0x8] sm:$0xff] %vm369, %v368
      %v372 = vld [vmem:[%s3] sm:$0xff]
      %v373 = vld [vmem:[%s3 + $0x8] sm:$0xff]
      %v374 = vmul.f32 %v301, %v301
      %v375 = vmul.f32 %v303, %v303
      %376 = vadd.xlane.f32.xlu0 %v374
      %v377 = vpop.xlane.xlu0 %376
      %378 = vadd.xlane.f32.xlu0 %v375
      %v379 = vpop.xlane.xlu0 %378
      %v380 = vadd.f32 %v372, %v377
      %v381 = vadd.f32 %v373, %v379
      %382 = vst.msk [vmem:[%s3] sm:$0xff] %vm369, %v380
      %383 = vst.msk [vmem:[%s3 + $0x8] sm:$0xff] %vm369, %v381
      %v384 = vadd.f32 %v315, %v317
      %v385 = vrot.slane %v384, 4
      %v386 = vadd.f32 %v384, %v385
      %v387 = vrot.slane %v386, 2
      %v388 = vadd.f32 %v386, %v387
      %v389 = vrot.slane %v388, 1
      %v390 = vadd.f32 %v388, %v389
      %v391 = vadd.f32 %v329, %v331
      %v392 = vrot.slane %v391, 4
      %v393 = vadd.f32 %v391, %v392
      %v394 = vrot.slane %v393, 2
      %v395 = vadd.f32 %v393, %v394
      %v396 = vrot.slane %v395, 1
      %v397 = vadd.f32 %v395, %v396
      %v398 = vadd.f32 %v343, %v345
      %v399 = vrot.slane %v398, 4
      %v400 = vadd.f32 %v398, %v399
      %v401 = vrot.slane %v400, 2
      %v402 = vadd.f32 %v400, %v401
      %v403 = vrot.slane %v402, 1
      %v404 = vadd.f32 %v402, %v403
      %v405 = vadd.f32 %v357, %v359
      %v406 = vrot.slane %v405, 4
      %v407 = vadd.f32 %v405, %v406
      %v408 = vrot.slane %v407, 2
      %v409 = vadd.f32 %v407, %v408
      %v410 = vrot.slane %v409, 1
      %v411 = vadd.f32 %v409, %v410
      %v412 = vmul.f32 %v315, %v315
      %v413 = vmul.f32 %v329, %v329
      %v414 = vmul.f32 %v343, %v343
      %v415 = vmul.f32 %v357, %v357
      %v416 = vmul.f32 %v317, %v317
      %v417 = vmul.f32 %v331, %v331
      %v418 = vmul.f32 %v345, %v345
      %v419 = vmul.f32 %v359, %v359
      %v420 = vadd.f32 %v412, %v416
      %v421 = vrot.slane %v420, 4
      %v422 = vadd.f32 %v420, %v421
      %v423 = vrot.slane %v422, 2
      %v424 = vadd.f32 %v422, %v423
      %v425 = vrot.slane %v424, 1
      %v426 = vadd.f32 %v424, %v425
      %v427 = vadd.f32 %v413, %v417
      %v428 = vrot.slane %v427, 4
      %v429 = vadd.f32 %v427, %v428
      %v430 = vrot.slane %v429, 2
      %v431 = vadd.f32 %v429, %v430
      %v432 = vrot.slane %v431, 1
      %v433 = vadd.f32 %v431, %v432
      %v434 = vadd.f32 %v414, %v418
      %v435 = vrot.slane %v434, 4
      %v436 = vadd.f32 %v434, %v435
      %v437 = vrot.slane %v436, 2
      %v438 = vadd.f32 %v436, %v437
      %v439 = vrot.slane %v438, 1
      %v440 = vadd.f32 %v438, %v439
      %v441 = vadd.f32 %v415, %v419
      %v442 = vrot.slane %v441, 4
      %v443 = vadd.f32 %v441, %v442
      %v444 = vrot.slane %v443, 2
      %v445 = vadd.f32 %v443, %v444
      %v446 = vrot.slane %v445, 1
      %v447 = vadd.f32 %v445, %v446
      %v448 = vld [vmem:[%s4] sm:$0x1]
      %v453 = vrot.slane %v397, 7
      %v454 = vrot.slane %v404, 6
      %v455 = vrot.slane %v411, 5
      %vm456 = vcmask 1040384
      %v457 = vsel %vm456, %v390, %v453
      %vm458 = vcmask 1042434
      %v459 = vsel %vm458, %v454, %v455
      %vm460 = vcmask 1041408
      %v461 = vsel %vm460, %v457, %v459
      %vm463 = vcmask 1043456
      %v464 = vsel %vm463, %v461, 0.0
      %v465 = vrot.slane %v464, 4
      %v466 = vadd.f32 %v464, %v465
      %v467 = vrot.slane %v466, 2
      %v468 = vadd.f32 %v466, %v467
      %v469 = vrot.slane %v468, 1
      %v470 = vadd.f32 %v468, %v469
      %v471 = vadd.f32 %v448, %v470
      %472 = vst [vmem:[%s4] sm:$0x1] %v471
      %v473 = vld [vmem:[%s5] sm:$0x1]
      %v478 = vrot.slane %v433, 7
      %v479 = vrot.slane %v440, 6
      %v480 = vrot.slane %v447, 5
      %v481 = vsel %vm456, %v426, %v478
      %v482 = vsel %vm458, %v479, %v480
      %v483 = vsel %vm460, %v481, %v482
      %v485 = vsel %vm463, %v483, 0.0
      %v486 = vrot.slane %v485, 4
      %v487 = vadd.f32 %v485, %v486
      %v488 = vrot.slane %v487, 2
      %v489 = vadd.f32 %v487, %v488
      %v490 = vrot.slane %v489, 1
      %v491 = vadd.f32 %v489, %v490
      %v492 = vadd.f32 %v473, %v491
      %493 = vst [vmem:[%s5] sm:$0x1] %v492
      // Predicated region
      $region33: #{lambda_layer_forward.2} parent=27 // pred_check
        %p494 = pneg %p77
      $region34: #{lambda_layer_forward.2} parent=27 // pred_check_branch
        %496 = sbr.rel (%p494) target = $region36
      $region35: #{lambda_layer_forward.2} parent=27 // pred_region
        _
      $region36: #{lambda_layer_forward.2} parent=27 // pred_fallthru
        _
      // Predicated region
      $region37: #{lambda_layer_forward.2} parent=27 // pred_check
        %p497 = pneg %p98
      $region38: #{lambda_layer_forward.2} parent=27 // pred_check_branch
        %499 = sbr.rel (%p497) target = $region40
      $region39: #{lambda_layer_forward.2} parent=27 // pred_region
        _
      $region40: #{lambda_layer_forward.2} parent=27 // pred_fallthru
        _
      // Predicated region
      $region41: #{lambda_layer_forward.2} parent=27 // pred_check
        %p500 = pneg %p119
      $region42: #{lambda_layer_forward.2} parent=27 // pred_check_branch
        %502 = sbr.rel (%p500) target = $region44
      $region43: #{lambda_layer_forward.2} parent=27 // pred_region
        _
      $region44: #{lambda_layer_forward.2} parent=27 // pred_fallthru
        _
      // Predicated region
      $region45: #{lambda_layer_forward.2} parent=27 // pred_check
        %p503 = pneg %p140
      $region46: #{lambda_layer_forward.2} parent=27 // pred_check_branch
        %505 = sbr.rel (%p503) target = $region48
      $region47: #{lambda_layer_forward.2} parent=27 // pred_region
        _
      $region48: #{lambda_layer_forward.2} parent=27 // pred_fallthru
        _
      // Predicated region
      $region49: #{lambda_layer_forward.2} parent=27 // pred_check
        %p506 = pneg %p77
      $region50: #{lambda_layer_forward.2} parent=27 // pred_check_branch
        %508 = sbr.rel (%p506) target = $region52
      $region51: #{lambda_layer_forward.2} parent=27 // pred_region
        _
      $region52: #{lambda_layer_forward.2} parent=27 // pred_fallthru
        _
      // Predicated region
      $region53: #{lambda_layer_forward.2} parent=27 // pred_check
        %p509 = pneg %p98
      $region54: #{lambda_layer_forward.2} parent=27 // pred_check_branch
        %511 = sbr.rel (%p509) target = $region56
      $region55: #{lambda_layer_forward.2} parent=27 // pred_region
        _
      $region56: #{lambda_layer_forward.2} parent=27 // pred_fallthru
        _
      // Predicated region
      $region57: #{lambda_layer_forward.2} parent=27 // pred_check
        %p512 = pneg %p119
      $region58: #{lambda_layer_forward.2} parent=27 // pred_check_branch
        %514 = sbr.rel (%p512) target = $region60
      $region59: #{lambda_layer_forward.2} parent=27 // pred_region
        _
      $region60: #{lambda_layer_forward.2} parent=27 // pred_fallthru
        _
      // Predicated region
      $region61: #{lambda_layer_forward.2} parent=27 // pred_check
        %p515 = pneg %p140
      $region62: #{lambda_layer_forward.2} parent=27 // pred_check_branch
        %517 = sbr.rel (%p515) target = $region64
      $region63: #{lambda_layer_forward.2} parent=27 // pred_region
        _
      $region64: #{lambda_layer_forward.2} parent=27 // pred_fallthru
        _
    $region28: #{lambda_layer_forward.2} parent=5 // pred_fallthru
      _
    %p518 = scmp.le.s32.totalorder 2, %s12
    // Predicated region
    $region65: #{lambda_layer_forward.2} parent=5 // pred_check
      %p519 = pneg %p518
    $region66: #{lambda_layer_forward.2} parent=5 // pred_check_branch
      %521 = sbr.rel (%p519) target = $region68
    $region67: #{lambda_layer_forward.2} parent=5 // pred_region
      %s522 = ssub.s32 %s12, 2
    $region68: #{lambda_layer_forward.2} parent=5 // pred_fallthru
      _
  $region6: #{lambda_layer_forward.2} parent=0 // loop_footer
    %s16 = sadd.s32 1, %s12
  $region7: #{lambda_layer_forward.2} parent=0 // loop_footer_branch
    %11 = sbr.rel target = $region3
  $region8: #{lambda_layer_forward.2} parent=0 // loop_exit
    _

// kernel: lambda_layer_forward.3
$region0: #{lambda_layer_forward.3}
  #allocation0 [shape = 'u32[]', space=smem, size = 0x4, offset = 0x4, fixed_abs, tag = 'smem constant byte address 0x4 - core index']
  #allocation1 [shape = 'u32[72,128]{1,0:T(1,128)}', space=vmem, size = 0x9000, scoped, tag = 'internal scratch']
  %s0 = inlined_call_operand.vmem [shape: bf16[32,32], index: 0, kind: input, shape index: {}]
  %s1 = inlined_call_operand.vmem [shape: bf16[32,768], index: 1, kind: input, shape index: {}]
  %s2 = inlined_call_operand.vmem [shape: bf16[16,16,16], index: 2, kind: input, shape index: {}]
  %s3 = inlined_call_operand.vmem [shape: f32[16,1], index: 3, kind: input, shape index: {}]
  %s4 = inlined_call_operand.vmem [shape: f32[16,1], index: 4, kind: input, shape index: {}]
  %s5 = inlined_call_operand.vmem [shape: f32[1,128], index: 5, kind: input, shape index: {}]
  %s6 = inlined_call_operand.vmem [shape: f32[1,128], index: 6, kind: input, shape index: {}]
  %s7 = inlined_call_operand.vmem [shape: f32[32,512], index: 7, kind: output, shape index: {}]
  %s8 = sld [smem:[#allocation0]]
  $region61: #{lambda_layer_forward.3} parent=0
    _
  %s10 = ssub.s32 1, %s8
  %s11 = scalar_select 0, %s10, %s8
  loop: start=0, step=1, limit=4
  $region2: #{lambda_layer_forward.3} parent=0 // loop_pre_header
    _
  $region3: #{lambda_layer_forward.3} parent=0 // loop_header
    %s13 = sphi 0, %s17
    %p14 = scmp.ge.s32.totalorder %s13, 4
    %s23 = sphi 0, %s25
    %s26 = sphi 0, %s23
    %s27 = sphi 0, %s26
    %s43 = sphi 0, %s27
    %s47 = sphi 0, %s47
    %s49 = sphi 0, %s47
    %s50 = sphi 0, %s49
    %s64 = sphi 0, %s50
    %s68 = sphi 0, %s68
    %s70 = sphi 0, %s68
    %s71 = sphi 0, %s70
    %s85 = sphi 0, %s71
    %s89 = sphi 0, %s89
    %s91 = sphi 0, %s89
    %s92 = sphi 0, %s91
    %s106 = sphi 0, %s92
    %s110 = sphi 0, %s110
    %s112 = sphi 0, %s110
    %s113 = sphi 0, %s112
    %s127 = sphi 0, %s113
    %s131 = sphi 0, %s131
    %s133 = sphi 0, %s131
    %s134 = sphi 0, %s133
    %s148 = sphi 0, %s134
    %s152 = sphi 0, %s152
    %s154 = sphi 0, %s152
    %s155 = sphi 0, %s154
    %s169 = sphi 0, %s155
    %s175 = sphi 0, %s177
    %s178 = sphi 0, %s175
    %s179 = sphi 0, %s178
    %s195 = sphi 0, %s179
  $region4: #{lambda_layer_forward.3} parent=0 // loop_header_branch
    %16 = sbr.rel (%p14) target = $region8
  $region5: #{lambda_layer_forward.3} parent=0 // loop_body
    %s18 = ssub.s32 %s13, 1
    %s19 = ssub.s32 %s13, 2
    %s20 = sadd.s32 %s13, 1
    %s21 = ssub.s32 %s13, %s20
    %p22 = scmp.eq.s32.totalorder %s21, 0
    %s24 = sadd.s32 %s23, 1
    %s25 = scalar_select %p22, %s23, %s24
    %p28 = pneg %p22
    %p29 = scmp.eq.s32.totalorder %s13, 1
    %p30 = por %p28, %p29
    %p31 = scmp.ne.s32.totalorder %s23, %s26
    %p32 = scmp.eq.s32.totalorder %s13, 0
    %p33 = por %p31, %p32
    %p34 = scmp.ne.s32.totalorder %s23, %s26
    %p35 = scmp.eq.s32.totalorder %s18, 1
    %p36 = por %p34, %p35
    %p37 = scmp.ne.s32.totalorder %s26, %s27
    %p38 = scmp.eq.s32.totalorder %s18, 0
    %p39 = por %p37, %p38
    %p40 = scmp.ne.s32.totalorder %s26, %s27
    %p41 = scmp.eq.s32.totalorder %s19, 1
    %p42 = por %p40, %p41
    %p44 = scmp.ne.s32.totalorder %s27, %s43
    %p45 = scmp.eq.s32.totalorder %s19, 0
    %p46 = por %p44, %p45
    %s48 = sadd.s32 %s47, 1
    %p51 = scmp.eq.s32.totalorder %s13, 1
    %p52 = scmp.ne.s32.totalorder %s47, %s49
    %p53 = scmp.eq.s32.totalorder %s13, 0
    %p54 = por %p52, %p53
    %p55 = scmp.ne.s32.totalorder %s47, %s49
    %p56 = scmp.eq.s32.totalorder %s18, 1
    %p57 = por %p55, %p56
    %p58 = scmp.ne.s32.totalorder %s49, %s50
    %p59 = scmp.eq.s32.totalorder %s18, 0
    %p60 = por %p58, %p59
    %p61 = scmp.ne.s32.totalorder %s49, %s50
    %p62 = scmp.eq.s32.totalorder %s19, 1
    %p63 = por %p61, %p62
    %p65 = scmp.ne.s32.totalorder %s50, %s64
    %p66 = scmp.eq.s32.totalorder %s19, 0
    %p67 = por %p65, %p66
    %s69 = sadd.s32 %s68, 1
    %p72 = scmp.eq.s32.totalorder %s13, 1
    %p73 = scmp.ne.s32.totalorder %s68, %s70
    %p74 = scmp.eq.s32.totalorder %s13, 0
    %p75 = por %p73, %p74
    %p76 = scmp.ne.s32.totalorder %s68, %s70
    %p77 = scmp.eq.s32.totalorder %s18, 1
    %p78 = por %p76, %p77
    %p79 = scmp.ne.s32.totalorder %s70, %s71
    %p80 = scmp.eq.s32.totalorder %s18, 0
    %p81 = por %p79, %p80
    %p82 = scmp.ne.s32.totalorder %s70, %s71
    %p83 = scmp.eq.s32.totalorder %s19, 1
    %p84 = por %p82, %p83
    %p86 = scmp.ne.s32.totalorder %s71, %s85
    %p87 = scmp.eq.s32.totalorder %s19, 0
    %p88 = por %p86, %p87
    %s90 = sadd.s32 %s89, 1
    %p93 = scmp.eq.s32.totalorder %s13, 1
    %p94 = scmp.ne.s32.totalorder %s89, %s91
    %p95 = scmp.eq.s32.totalorder %s13, 0
    %p96 = por %p94, %p95
    %p97 = scmp.ne.s32.totalorder %s89, %s91
    %p98 = scmp.eq.s32.totalorder %s18, 1
    %p99 = por %p97, %p98
    %p100 = scmp.ne.s32.totalorder %s91, %s92
    %p101 = scmp.eq.s32.totalorder %s18, 0
    %p102 = por %p100, %p101
    %p103 = scmp.ne.s32.totalorder %s91, %s92
    %p104 = scmp.eq.s32.totalorder %s19, 1
    %p105 = por %p103, %p104
    %p107 = scmp.ne.s32.totalorder %s92, %s106
    %p108 = scmp.eq.s32.totalorder %s19, 0
    %p109 = por %p107, %p108
    %s111 = sadd.s32 %s110, 1
    %p114 = scmp.eq.s32.totalorder %s13, 1
    %p115 = scmp.ne.s32.totalorder %s110, %s112
    %p116 = scmp.eq.s32.totalorder %s13, 0
    %p117 = por %p115, %p116
    %p118 = scmp.ne.s32.totalorder %s110, %s112
    %p119 = scmp.eq.s32.totalorder %s18, 1
    %p120 = por %p118, %p119
    %p121 = scmp.ne.s32.totalorder %s112, %s113
    %p122 = scmp.eq.s32.totalorder %s18, 0
    %p123 = por %p121, %p122
    %p124 = scmp.ne.s32.totalorder %s112, %s113
    %p125 = scmp.eq.s32.totalorder %s19, 1
    %p126 = por %p124, %p125
    %p128 = scmp.ne.s32.totalorder %s113, %s127
    %p129 = scmp.eq.s32.totalorder %s19, 0
    %p130 = por %p128, %p129
    %s132 = sadd.s32 %s131, 1
    %p135 = scmp.eq.s32.totalorder %s13, 1
    %p136 = scmp.ne.s32.totalorder %s131, %s133
    %p137 = scmp.eq.s32.totalorder %s13, 0
    %p138 = por %p136, %p137
    %p139 = scmp.ne.s32.totalorder %s131, %s133
    %p140 = scmp.eq.s32.totalorder %s18, 1
    %p141 = por %p139, %p140
    %p142 = scmp.ne.s32.totalorder %s133, %s134
    %p143 = scmp.eq.s32.totalorder %s18, 0
    %p144 = por %p142, %p143
    %p145 = scmp.ne.s32.totalorder %s133, %s134
    %p146 = scmp.eq.s32.totalorder %s19, 1
    %p147 = por %p145, %p146
    %p149 = scmp.ne.s32.totalorder %s134, %s148
    %p150 = scmp.eq.s32.totalorder %s19, 0
    %p151 = por %p149, %p150
    %s153 = sadd.s32 %s152, 1
    %p156 = scmp.eq.s32.totalorder %s13, 1
    %p157 = scmp.ne.s32.totalorder %s152, %s154
    %p158 = scmp.eq.s32.totalorder %s13, 0
    %p159 = por %p157, %p158
    %p160 = scmp.ne.s32.totalorder %s152, %s154
    %p161 = scmp.eq.s32.totalorder %s18, 1
    %p162 = por %p160, %p161
    %p163 = scmp.ne.s32.totalorder %s154, %s155
    %p164 = scmp.eq.s32.totalorder %s18, 0
    %p165 = por %p163, %p164
    %p166 = scmp.ne.s32.totalorder %s154, %s155
    %p167 = scmp.eq.s32.totalorder %s19, 1
    %p168 = por %p166, %p167
    %p170 = scmp.ne.s32.totalorder %s155, %s169
    %p171 = scmp.eq.s32.totalorder %s19, 0
    %p172 = por %p170, %p171
    %s173 = ssub.s32 %s13, %s20
    %p174 = scmp.eq.s32.totalorder %s173, 0
    %s176 = sadd.s32 %s175, 1
    %s177 = scalar_select %p174, %s175, %s176
    %p180 = pneg %p174
    %p181 = scmp.eq.s32.totalorder %s13, 1
    %p182 = por %p180, %p181
    %p183 = scmp.ne.s32.totalorder %s175, %s178
    %p184 = scmp.eq.s32.totalorder %s13, 0
    %p185 = por %p183, %p184
    %p186 = scmp.ne.s32.totalorder %s175, %s178
    %p187 = scmp.eq.s32.totalorder %s18, 1
    %p188 = por %p186, %p187
    %p189 = scmp.ne.s32.totalorder %s178, %s179
    %p190 = scmp.eq.s32.totalorder %s18, 0
    %p191 = por %p189, %p190
    %p192 = scmp.ne.s32.totalorder %s178, %s179
    %p193 = scmp.eq.s32.totalorder %s19, 1
    %p194 = por %p192, %p193
    %p196 = scmp.ne.s32.totalorder %s179, %s195
    %p197 = scmp.eq.s32.totalorder %s19, 0
    %p198 = por %p196, %p197
    %p199 = scmp.le.s32.totalorder 1, %s13
    %p200 = scmp.lt.s32.totalorder %s13, 3
    %p201 = pnand %p199, %p200
    %p202 = pneg %p201
    // Predicated region
    $region9: #{lambda_layer_forward.3} parent=5 // pred_check
      _
    $region10: #{lambda_layer_forward.3} parent=5 // pred_check_branch
      %204 = sbr.rel (%p201) target = $region12
    $region11: #{lambda_layer_forward.3} parent=5 // pred_region
      %s205 = ssub.s32 %s13, 1
      // Predicated region
      $region13: #{lambda_layer_forward.3} parent=11 // pred_check
        %p206 = pneg %p60
      $region14: #{lambda_layer_forward.3} parent=11 // pred_check_branch
        %208 = sbr.rel (%p206) target = $region16
      $region15: #{lambda_layer_forward.3} parent=11 // pred_region
        _
      $region16: #{lambda_layer_forward.3} parent=11 // pred_fallthru
        _
      // Predicated region
      $region17: #{lambda_layer_forward.3} parent=11 // pred_check
        %p209 = pneg %p81
      $region18: #{lambda_layer_forward.3} parent=11 // pred_check_branch
        %211 = sbr.rel (%p209) target = $region20
      $region19: #{lambda_layer_forward.3} parent=11 // pred_region
        _
      $region20: #{lambda_layer_forward.3} parent=11 // pred_fallthru
        _
      // Predicated region
      $region21: #{lambda_layer_forward.3} parent=11 // pred_check
        %p212 = pneg %p102
      $region22: #{lambda_layer_forward.3} parent=11 // pred_check_branch
        %214 = sbr.rel (%p212) target = $region24
      $region23: #{lambda_layer_forward.3} parent=11 // pred_region
        _
      $region24: #{lambda_layer_forward.3} parent=11 // pred_fallthru
        _
      // Predicated region
      $region25: #{lambda_layer_forward.3} parent=11 // pred_check
        %p215 = pneg %p123
      $region26: #{lambda_layer_forward.3} parent=11 // pred_check_branch
        %217 = sbr.rel (%p215) target = $region28
      $region27: #{lambda_layer_forward.3} parent=11 // pred_region
        _
      $region28: #{lambda_layer_forward.3} parent=11 // pred_fallthru
        _
      // Predicated region
      $region29: #{lambda_layer_forward.3} parent=11 // pred_check
        %p218 = pneg %p144
      $region30: #{lambda_layer_forward.3} parent=11 // pred_check_branch
        %220 = sbr.rel (%p218) target = $region32
      $region31: #{lambda_layer_forward.3} parent=11 // pred_region
        _
      $region32: #{lambda_layer_forward.3} parent=11 // pred_fallthru
        _
      // Predicated region
      $region33: #{lambda_layer_forward.3} parent=11 // pred_check
        %p221 = pneg %p165
      $region34: #{lambda_layer_forward.3} parent=11 // pred_check_branch
        %223 = sbr.rel (%p221) target = $region36
      $region35: #{lambda_layer_forward.3} parent=11 // pred_region
        _
      $region36: #{lambda_layer_forward.3} parent=11 // pred_fallthru
        _
    $region12: #{lambda_layer_forward.3} parent=5 // pred_fallthru
      _
    %p224 = scmp.lt.s32.totalorder %s13, 2
    // Predicated region
    $region37: #{lambda_layer_forward.3} parent=5 // pred_check
      %p225 = pneg %p224
    $region38: #{lambda_layer_forward.3} parent=5 // pred_check_branch
      %227 = sbr.rel (%p225) target = $region40
    $region39: #{lambda_layer_forward.3} parent=5 // pred_region
      // Predicated region
      $region41: #{lambda_layer_forward.3} parent=39 // pred_check
        %p228 = pneg %p33
      $region42: #{lambda_layer_forward.3} parent=39 // pred_check_branch
        %230 = sbr.rel (%p228) target = $region44
      $region43: #{lambda_layer_forward.3} parent=39 // pred_region
        %s231 = smul.u32 2, %s13
        %p232 = scmp.lt.s32.totalorder %s231, 3
        %s233 = scalar_select %p232, %s231, 3
        %s234 = smul.addr %s233, 4
        %s235 = scalar_lea.vmem %s0, %s234
        %s236 = smul.u32 2, %s13
      $region44: #{lambda_layer_forward.3} parent=39 // pred_fallthru
        _
    $region40: #{lambda_layer_forward.3} parent=5 // pred_fallthru
      _
    %p237 = scmp.le.s32.totalorder 1, %s13
    %p238 = scmp.lt.s32.totalorder %s13, 3
    %p239 = pnand %p237, %p238
    %p240 = pneg %p239
    // Predicated region
    $region45: #{lambda_layer_forward.3} parent=5 // pred_check
      _
    $region46: #{lambda_layer_forward.3} parent=5 // pred_check_branch
      %242 = sbr.rel (%p239) target = $region48
    $region47: #{lambda_layer_forward.3} parent=5 // pred_region
      %s243 = ssub.s32 %s13, 1
      %s244 = smul.u32 2, %s18
      %p245 = scmp.lt.s32.totalorder %s244, 3
      %s246 = scalar_select %p245, %s244, 3
      %s247 = smul.addr %s246, 4
      %s248 = scalar_lea.vmem %s0, %s247
      %p249 = pneg %p39
      %p250 = pneg %p36
      %p251 = pneg %p60
      %p252 = pneg %p57
      %p253 = pneg %p81
      %p254 = pneg %p78
      %p255 = pneg %p102
      %p256 = pneg %p99
      %p257 = pneg %p123
      %p258 = pneg %p120
      %p259 = pneg %p144
      %p260 = pneg %p141
      %p261 = pneg %p165
      %p262 = pneg %p162
      %p263 = pneg %p191
      %p264 = pneg %p188
      %s265 = smul.u32 2, %s18
      %p266 = scmp.lt.s32.totalorder %s265, 3
      %s267 = scalar_select %p266, %s265, 3
      %s268 = smul.addr %s267, 4
      %s269 = smul.addr %s268, 8
      %s270 = scalar_lea.vmem %s7, %s269
      %s271 = smul.u32 2, %s18
      %p272 = scmp.lt.s32.totalorder %s271, 3
      %s273 = scalar_select %p272, %s271, 3
      %s274 = smul.addr %s273, 4
      %s275 = scalar_lea.vmem %s0, %s274
      %s276 = smul.u32 2, %s18
      %s277 = smul.u32 2, %s18
      %p278 = scmp.lt.s32.totalorder %s277, 3
      %s279 = scalar_select %p278, %s277, 3
      %s280 = smul.addr %s279, 4
      %s281 = smul.addr %s280, 8
      %s282 = scalar_lea.vmem %s7, %s281
      %s283 = smul.u32 2, %s18
      %v285 = vld [vmem:[%s275] sm:$0xf]
      %v286 = vld [vmem:[%s275 + $0x4] sm:$0xf]
      %v287 = vld [vmem:[%s1] sm:$0xff]
      %v288 = vld [vmem:[%s1 + $0x8] sm:$0xff]
      %v289 = vld [vmem:[%s1 + $0x10] sm:$0xff]
      %v290 = vld [vmem:[%s1 + $0x18] sm:$0xff]
      %v291 = vld [vmem:[%s1 + $0x20] sm:$0xff]
      %v292 = vld [vmem:[%s1 + $0x28] sm:$0xff]
      %v293 = vld [vmem:[%s1 + $0x30] sm:$0xff]
      %v294 = vld [vmem:[%s1 + $0x38] sm:$0xff]
      %v295 = vld [vmem:[%s1 + $0x40] sm:$0xff]
      %v296 = vld [vmem:[%s1 + $0x48] sm:$0xff]
      %v297 = vld [vmem:[%s1 + $0x50] sm:$0xff]
      %v298 = vld [vmem:[%s1 + $0x58] sm:$0xff]
      %v301 = vunpack.c.l.b16 %v285
      %v302 = vunpack.c.l.b16 %v286
      %v303 = vpack.c.b16 %v302, %v301
      %v316 = vunpack.c.l.b16 %v287
      %v317 = vunpack.c.h.b16 %v287
      %v318 = vunpack.c.l.b16 %v288
      %v319 = vunpack.c.h.b16 %v288
      %v320 = vunpack.c.l.b16 %v289
      %v321 = vunpack.c.h.b16 %v289
      %v322 = vunpack.c.l.b16 %v290
      %v323 = vunpack.c.h.b16 %v290
      %v324 = vunpack.c.l.b16 %v291
      %v325 = vunpack.c.h.b16 %v291
      %v326 = vunpack.c.l.b16 %v292
      %v327 = vunpack.c.h.b16 %v292
      %v328 = vunpack.c.l.b16 %v293
      %v329 = vunpack.c.h.b16 %v293
      %v330 = vunpack.c.l.b16 %v294
      %v331 = vunpack.c.h.b16 %v294
      %v332 = vunpack.c.l.b16 %v295
      %v333 = vunpack.c.h.b16 %v295
      %v334 = vunpack.c.l.b16 %v296
      %v335 = vunpack.c.h.b16 %v296
      %v336 = vunpack.c.l.b16 %v297
      %v337 = vunpack.c.h.b16 %v297
      %v338 = vunpack.c.l.b16 %v298
      %v339 = vunpack.c.h.b16 %v298
      %v340 = vpack.c.b16 %v322, %v316
      %v341 = vpack.c.b16 %v323, %v317
      %v342 = vpack.c.b16 %v324, %v318
      %v343 = vpack.c.b16 %v325, %v319
      %v344 = vpack.c.b16 %v326, %v320
      %v345 = vpack.c.b16 %v327, %v321
      %v346 = vpack.c.b16 %v334, %v328
      %v347 = vpack.c.b16 %v335, %v329
      %v348 = vpack.c.b16 %v336, %v330
      %v349 = vpack.c.b16 %v337, %v331
      %v350 = vpack.c.b16 %v338, %v332
      %v351 = vpack.c.b16 %v339, %v333
      %vm364 = vcmask 261120
      %v366 = vsel %vm364, %v303, 0
      %368 = vmatpush.bf16.msra.mxu0 0
      %369 = vmatpush.bf16.msra.mxu0 0
      %370 = vmatpush.bf16.msra.mxu0 0
      %371 = vmatpush.bf16.msra.mxu0 0
      %372 = vmatpush.bf16.msra.mxu0 0
      %373 = vmatpush.bf16.msra.mxu0 0
      %374 = vmatpush.bf16.msra.mxu0 %v346
      %375 = vmatpush.bf16.msra.mxu0 %v340
      %376 = vmatmul.bf16.gmra.mxu0 %v366
      %v377 = vpop.f32.mrf.mxu0
      %v378 = vadd.f32 0.0, %v377
      %v379 = vpop.f32.mrf.mxu0
      %v380 = vadd.f32 0.0, %v379
      %381 = vdwg.mxu0
      %382 = vmatpush.bf16.msra.mxu0 0
      %383 = vmatpush.bf16.msra.mxu0 0
      %384 = vmatpush.bf16.msra.mxu0 0
      %385 = vmatpush.bf16.msra.mxu0 0
      %386 = vmatpush.bf16.msra.mxu0 0
      %387 = vmatpush.bf16.msra.mxu0 0
      %388 = vmatpush.bf16.msra.mxu0 %v347
      %389 = vmatpush.bf16.msra.mxu0 %v341
      %390 = vmatmul.bf16.gmra.mxu0 %v366
      %v391 = vpop.f32.mrf.mxu0
      %v392 = vadd.f32 0.0, %v391
      %v393 = vpop.f32.mrf.mxu0
      %v394 = vadd.f32 0.0, %v393
      %395 = vdwg.mxu0
      %396 = vmatpush.bf16.msra.mxu0 0
      %397 = vmatpush.bf16.msra.mxu0 0
      %398 = vmatpush.bf16.msra.mxu0 0
      %399 = vmatpush.bf16.msra.mxu0 0
      %400 = vmatpush.bf16.msra.mxu0 0
      %401 = vmatpush.bf16.msra.mxu0 0
      %402 = vmatpush.bf16.msra.mxu0 %v348
      %403 = vmatpush.bf16.msra.mxu0 %v342
      %404 = vmatmul.bf16.gmra.mxu0 %v366
      %v405 = vpop.f32.mrf.mxu0
      %v406 = vadd.f32 0.0, %v405
      %v407 = vpop.f32.mrf.mxu0
      %v408 = vadd.f32 0.0, %v407
      %409 = vdwg.mxu0
      %410 = vmatpush.bf16.msra.mxu0 0
      %411 = vmatpush.bf16.msra.mxu0 0
      %412 = vmatpush.bf16.msra.mxu0 0
      %413 = vmatpush.bf16.msra.mxu0 0
      %414 = vmatpush.bf16.msra.mxu0 0
      %415 = vmatpush.bf16.msra.mxu0 0
      %416 = vmatpush.bf16.msra.mxu0 %v349
      %417 = vmatpush.bf16.msra.mxu0 %v343
      %418 = vmatmul.bf16.gmra.mxu0 %v366
      %v419 = vpop.f32.mrf.mxu0
      %v420 = vadd.f32 0.0, %v419
      %v421 = vpop.f32.mrf.mxu0
      %v422 = vadd.f32 0.0, %v421
      %423 = vdwg.mxu0
      %424 = vmatpush.bf16.msra.mxu0 0
      %425 = vmatpush.bf16.msra.mxu0 0
      %426 = vmatpush.bf16.msra.mxu0 0
      %427 = vmatpush.bf16.msra.mxu0 0
      %428 = vmatpush.bf16.msra.mxu0 0
      %429 = vmatpush.bf16.msra.mxu0 0
      %430 = vmatpush.bf16.msra.mxu0 %v350
      %431 = vmatpush.bf16.msra.mxu0 %v344
      %432 = vmatmul.bf16.gmra.mxu0 %v366
      %v433 = vpop.f32.mrf.mxu0
      %v434 = vadd.f32 0.0, %v433
      %v435 = vpop.f32.mrf.mxu0
      %v436 = vadd.f32 0.0, %v435
      %437 = vdwg.mxu0
      %438 = vmatpush.bf16.msra.mxu0 0
      %439 = vmatpush.bf16.msra.mxu0 0
      %440 = vmatpush.bf16.msra.mxu0 0
      %441 = vmatpush.bf16.msra.mxu0 0
      %442 = vmatpush.bf16.msra.mxu0 0
      %443 = vmatpush.bf16.msra.mxu0 0
      %444 = vmatpush.bf16.msra.mxu0 %v351
      %445 = vmatpush.bf16.msra.mxu0 %v345
      %446 = vmatmul.bf16.gmra.mxu0 %v366
      %v447 = vpop.f32.mrf.mxu0
      %v448 = vadd.f32 0.0, %v447
      %v449 = vpop.f32.mrf.mxu0
      %v450 = vadd.f32 0.0, %v449
      %451 = vdwg.mxu0
      %v452 = vmax.f32 %v378, %v380
      %v453 = vrot.slane %v452, 4
      %v454 = vmax.f32 %v452, %v453
      %v455 = vrot.slane %v454, 2
      %v456 = vmax.f32 %v454, %v455
      %v457 = vrot.slane %v456, 1
      %v458 = vmax.f32 %v456, %v457
      %v459 = vsub.f32 %v378, %v458
      %v460 = vsub.f32 %v380, %v458
      %v461 = vmul.f32 %v459, 1.442695
      %v462 = vpow.pop %v461
      %v463 = vmul.f32 %v460, 1.442695
      %v464 = vpow.pop %v463
      %v465 = vadd.f32 %v462, %v464
      %v466 = vrot.slane %v465, 4
      %v467 = vadd.f32 %v465, %v466
      %v468 = vrot.slane %v467, 2
      %v469 = vadd.f32 %v467, %v468
      %v470 = vrot.slane %v469, 1
      %v471 = vadd.f32 %v469, %v470
      %v472 = vrcp.pop %v471
      %v473 = vmul.f32 %v462, %v472
      %v474 = vmul.f32 %v464, %v472
      %v475 = vpack.c.bf16 %v474, %v473
      %v476 = vld [vmem:[%s3] sm:$0xff]
      %v477 = vld [vmem:[%s3 + $0x8] sm:$0xff]
      %479 = vset.pattern.permute.xlu0 0
      %480 = vperm.xlu0 %479, %v476
      %v481 = vpop.permute.xlu0 %480
      %484 = vset.pattern.permute.xlu0 0
      %485 = vperm.xlu0 %484, %v477
      %v486 = vpop.permute.xlu0 %485
      %v488 = vsub.f32 %v392, %v481
      %v489 = vsub.f32 %v394, %v486
      %v490 = vld [vmem:[%s4] sm:$0xff]
      %v491 = vld [vmem:[%s4 + $0x8] sm:$0xff]
      %493 = vset.pattern.permute.xlu0 0
      %494 = vperm.xlu0 %493, %v490
      %v495 = vpop.permute.xlu0 %494
      %498 = vset.pattern.permute.xlu0 0
      %499 = vperm.xlu0 %498, %v491
      %v500 = vpop.permute.xlu0 %499
      %v502 = vmul.f32 %v488, %v495
      %v503 = vmul.f32 %v489, %v500
      %v504 = vpack.c.bf16 %v503, %v502
      %v505 = vld [vmem:[%s5] sm:$0x1]
      %v506 = vld [vmem:[%s6] sm:$0x1]
      %v507 = vperm.slane %v505, 0
      %v508 = vsub.f32 %v406, %v507
      %v509 = vsub.f32 %v420, %v507
      %v510 = vsub.f32 %v434, %v507
      %v511 = vsub.f32 %v448, %v507
      %v512 = vsub.f32 %v408, %v507
      %v513 = vsub.f32 %v422, %v507
      %v514 = vsub.f32 %v436, %v507
      %v515 = vsub.f32 %v450, %v507
      %v516 = vperm.slane %v506, 0
      %v517 = vmul.f32 %v508, %v516
      %v518 = vmul.f32 %v509, %v516
      %v519 = vmul.f32 %v510, %v516
      %v520 = vmul.f32 %v511, %v516
      %v521 = vmul.f32 %v512, %v516
      %v522 = vmul.f32 %v513, %v516
      %v523 = vmul.f32 %v514, %v516
      %v524 = vmul.f32 %v515, %v516
      %525 = vxpose.xlu0.c.b16.start [1/8] %v475, 128
      %526 = vxpose.xlu0.c.b16.cont [2/8] 0, 128
      %527 = vxpose.xlu0.c.b16.cont [3/8] 0, 128
      %528 = vxpose.xlu0.c.b16.cont [4/8] 0, 128
      %529 = vxpose.xlu0.c.b16.cont [5/8] 0, 128
      %530 = vxpose.xlu0.c.b16.cont [6/8] 0, 128
      %531 = vxpose.xlu0.c.b16.cont [7/8] 0, 128
      %532 = vxpose.xlu0.c.b16.end [8/8] 0, 128
      %v533 = vpop.trf.xlu0
      %v534 = vpop.trf.xlu0
      %v535 = vpop.trf.xlu0
      %v536 = vpop.trf.xlu0
      %v537 = vpop.trf.xlu0
      %v538 = vpop.trf.xlu0
      %v539 = vpop.trf.xlu0
      %v540 = vpop.trf.xlu0
      %vm541 = vcmask 130048
      %v543 = vsel %vm541, %v533, 0
      %v546 = vsel %vm541, %v534, 0
      %v549 = vsel %vm541, %v535, 0
      %v552 = vsel %vm541, %v536, 0
      %v555 = vsel %vm541, %v537, 0
      %v558 = vsel %vm541, %v538, 0
      %v561 = vsel %vm541, %v539, 0
      %v564 = vsel %vm541, %v540, 0
      %566 = vmatpush.bf16.msra.mxu0 0
      %567 = vmatpush.bf16.msra.mxu0 0
      %568 = vmatpush.bf16.msra.mxu0 0
      %569 = vmatpush.bf16.msra.mxu0 0
      %570 = vmatpush.bf16.msra.mxu0 0
      %571 = vmatpush.bf16.msra.mxu0 0
      %572 = vmatpush.bf16.msra.mxu0 0
      %573 = vmatpush.bf16.msra.mxu0 %v504
      %574 = vmatmul.bf16.gmra.mxu0 %v543
      %v575 = vpop.f32.mrf.mxu0
      %v576 = vadd.f32 0.0, %v575
      %v577 = vpop.f32.mrf.mxu0
      %v578 = vadd.f32 0.0, %v577
      %579 = vmatmul.bf16.gmra.mxu0 %v546
      %v580 = vpop.f32.mrf.mxu0
      %v581 = vadd.f32 0.0, %v580
      %v582 = vpop.f32.mrf.mxu0
      %v583 = vadd.f32 0.0, %v582
      %584 = vmatmul.bf16.gmra.mxu0 %v549
      %v585 = vpop.f32.mrf.mxu0
      %v586 = vadd.f32 0.0, %v585
      %v587 = vpop.f32.mrf.mxu0
      %v588 = vadd.f32 0.0, %v587
      %589 = vmatmul.bf16.gmra.mxu0 %v552
      %v590 = vpop.f32.mrf.mxu0
      %v591 = vadd.f32 0.0, %v590
      %v592 = vpop.f32.mrf.mxu0
      %v593 = vadd.f32 0.0, %v592
      %594 = vmatmul.bf16.gmra.mxu0 %v555
      %v595 = vpop.f32.mrf.mxu0
      %v596 = vadd.f32 0.0, %v595
      %v597 = vpop.f32.mrf.mxu0
      %v598 = vadd.f32 0.0, %v597
      %599 = vmatmul.bf16.gmra.mxu0 %v558
      %v600 = vpop.f32.mrf.mxu0
      %v601 = vadd.f32 0.0, %v600
      %v602 = vpop.f32.mrf.mxu0
      %v603 = vadd.f32 0.0, %v602
      %604 = vmatmul.bf16.gmra.mxu0 %v561
      %v605 = vpop.f32.mrf.mxu0
      %v606 = vadd.f32 0.0, %v605
      %v607 = vpop.f32.mrf.mxu0
      %v608 = vadd.f32 0.0, %v607
      %609 = vmatmul.bf16.gmra.mxu0 %v564
      %v610 = vpop.f32.mrf.mxu0
      %v611 = vadd.f32 0.0, %v610
      %v612 = vpop.f32.mrf.mxu0
      %v613 = vadd.f32 0.0, %v612
      %614 = vdwg.mxu0
      %v615 = vpack.c.bf16 %v578, %v576
      %v616 = vpack.c.bf16 %v583, %v581
      %v617 = vpack.c.bf16 %v588, %v586
      %v618 = vpack.c.bf16 %v593, %v591
      %v619 = vpack.c.bf16 %v598, %v596
      %v620 = vpack.c.bf16 %v603, %v601
      %v621 = vpack.c.bf16 %v608, %v606
      %v622 = vpack.c.bf16 %v613, %v611
      %v623 = vpack.c.bf16 %v521, %v517
      %v624 = vpack.c.bf16 %v522, %v518
      %v625 = vpack.c.bf16 %v523, %v519
      %v626 = vpack.c.bf16 %v524, %v520
      %v627 = vld [vmem:[%s2] sm:$0xf]
      %v628 = vld [vmem:[%s2 + $0x4] sm:$0xf]
      %v631 = vunpack.c.l.b16 %v627
      %v632 = vunpack.c.l.b16 %v628
      %v633 = vpack.c.b16 %v632, %v631
      %v635 = vsel %vm541, %v633, 0
      %637 = vmatpush.bf16.msra.mxu0 0
      %638 = vmatpush.bf16.msra.mxu0 0
      %639 = vmatpush.bf16.msra.mxu0 0
      %640 = vmatpush.bf16.msra.mxu0 0
      %641 = vmatpush.bf16.msra.mxu0 0
      %642 = vmatpush.bf16.msra.mxu0 0
      %643 = vmatpush.bf16.msra.mxu0 0
      %644 = vmatpush.bf16.msra.mxu0 %v504
      %645 = vmatmul.bf16.gmra.mxu0 %v635
      %v646 = vpop.f32.mrf.mxu0
      %v647 = vadd.f32 0.0, %v646
      %v648 = vpop.f32.mrf.mxu0
      %v649 = vadd.f32 0.0, %v648
      %650 = vdwg.mxu0
      %652 = vset.pattern.permute.xlu0 0
      %653 = vperm.xlu0 %652, %v517
      %v654 = vpop.permute.xlu0 %653
      %657 = vset.pattern.permute.xlu0 0
      %658 = vperm.xlu0 %657, %v521
      %v659 = vpop.permute.xlu0 %658
      %v661 = vmul.f32 %v654, %v647
      %v662 = vmul.f32 %v659, %v649
      %663 = vmatpush.bf16.msra.mxu0 %v622
      %664 = vmatpush.bf16.msra.mxu0 %v621
      %665 = vmatpush.bf16.msra.mxu0 %v620
      %666 = vmatpush.bf16.msra.mxu0 %v619
      %667 = vmatpush.bf16.msra.mxu0 %v618
      %668 = vmatpush.bf16.msra.mxu0 %v617
      %669 = vmatpush.bf16.msra.mxu0 %v616
      %670 = vmatpush.bf16.msra.mxu0 %v615
      %671 = vmatmul.bf16.gmra.mxu0 %v623
      %v672 = vpop.f32.mrf.mxu0
      %v673 = vadd.f32 %v661, %v672
      %v674 = vpop.f32.mrf.mxu0
      %v675 = vadd.f32 %v662, %v674
      %676 = vdwg.mxu0
      %678 = vset.pattern.permute.xlu0 0
      %679 = vperm.xlu0 %678, %v518
      %v680 = vpop.permute.xlu0 %679
      %683 = vset.pattern.permute.xlu0 0
      %684 = vperm.xlu0 %683, %v522
      %v685 = vpop.permute.xlu0 %684
      %v687 = vmul.f32 %v680, %v647
      %v688 = vmul.f32 %v685, %v649
      %689 = vmatpush.bf16.msra.mxu0 %v622
      %690 = vmatpush.bf16.msra.mxu0 %v621
      %691 = vmatpush.bf16.msra.mxu0 %v620
      %692 = vmatpush.bf16.msra.mxu0 %v619
      %693 = vmatpush.bf16.msra.mxu0 %v618
      %694 = vmatpush.bf16.msra.mxu0 %v617
      %695 = vmatpush.bf16.msra.mxu0 %v616
      %696 = vmatpush.bf16.msra.mxu0 %v615
      %697 = vmatmul.bf16.gmra.mxu0 %v624
      %v698 = vpop.f32.mrf.mxu0
      %v699 = vadd.f32 %v687, %v698
      %v700 = vpop.f32.mrf.mxu0
      %v701 = vadd.f32 %v688, %v700
      %702 = vdwg.mxu0
      %704 = vset.pattern.permute.xlu0 0
      %705 = vperm.xlu0 %704, %v519
      %v706 = vpop.permute.xlu0 %705
      %709 = vset.pattern.permute.xlu0 0
      %710 = vperm.xlu0 %709, %v523
      %v711 = vpop.permute.xlu0 %710
      %v713 = vmul.f32 %v706, %v647
      %v714 = vmul.f32 %v711, %v649
      %715 = vmatpush.bf16.msra.mxu0 %v622
      %716 = vmatpush.bf16.msra.mxu0 %v621
      %717 = vmatpush.bf16.msra.mxu0 %v620
      %718 = vmatpush.bf16.msra.mxu0 %v619
      %719 = vmatpush.bf16.msra.mxu0 %v618
      %720 = vmatpush.bf16.msra.mxu0 %v617
      %721 = vmatpush.bf16.msra.mxu0 %v616
      %722 = vmatpush.bf16.msra.mxu0 %v615
      %723 = vmatmul.bf16.gmra.mxu0 %v625
      %v724 = vpop.f32.mrf.mxu0
      %v725 = vadd.f32 %v713, %v724
      %v726 = vpop.f32.mrf.mxu0
      %v727 = vadd.f32 %v714, %v726
      %728 = vdwg.mxu0
      %730 = vset.pattern.permute.xlu0 0
      %731 = vperm.xlu0 %730, %v520
      %v732 = vpop.permute.xlu0 %731
      %735 = vset.pattern.permute.xlu0 0
      %736 = vperm.xlu0 %735, %v524
      %v737 = vpop.permute.xlu0 %736
      %v739 = vmul.f32 %v732, %v647
      %v740 = vmul.f32 %v737, %v649
      %741 = vmatpush.bf16.msra.mxu0 %v622
      %742 = vmatpush.bf16.msra.mxu0 %v621
      %743 = vmatpush.bf16.msra.mxu0 %v620
      %744 = vmatpush.bf16.msra.mxu0 %v619
      %745 = vmatpush.bf16.msra.mxu0 %v618
      %746 = vmatpush.bf16.msra.mxu0 %v617
      %747 = vmatpush.bf16.msra.mxu0 %v616
      %748 = vmatpush.bf16.msra.mxu0 %v615
      %749 = vmatmul.bf16.gmra.mxu0 %v626
      %v750 = vpop.f32.mrf.mxu0
      %v751 = vadd.f32 %v739, %v750
      %v752 = vpop.f32.mrf.mxu0
      %v753 = vadd.f32 %v740, %v752
      %754 = vdwg.mxu0
      %s755 = scalar_lea.vmem %s2, 8
      %v756 = vld [vmem:[%s755] sm:$0xf]
      %v757 = vld [vmem:[%s755 + $0x4] sm:$0xf]
      %v760 = vunpack.c.l.b16 %v756
      %v761 = vunpack.c.l.b16 %v757
      %v762 = vpack.c.b16 %v761, %v760
      %v764 = vsel %vm541, %v762, 0
      %766 = vmatpush.bf16.msra.mxu0 0
      %767 = vmatpush.bf16.msra.mxu0 0
      %768 = vmatpush.bf16.msra.mxu0 0
      %769 = vmatpush.bf16.msra.mxu0 0
      %770 = vmatpush.bf16.msra.mxu0 0
      %771 = vmatpush.bf16.msra.mxu0 0
      %772 = vmatpush.bf16.msra.mxu0 0
      %773 = vmatpush.bf16.msra.mxu0 %v504
      %774 = vmatmul.bf16.gmra.mxu0 %v764
      %v775 = vpop.f32.mrf.mxu0
      %v776 = vadd.f32 0.0, %v775
      %v777 = vpop.f32.mrf.mxu0
      %v778 = vadd.f32 0.0, %v777
      %779 = vdwg.mxu0
      %780 = vset.pattern.permute.xlu0 1
      %781 = vperm.xlu0 %780, %v517
      %v782 = vpop.permute.xlu0 %781
      %784 = vset.pattern.permute.xlu0 1
      %785 = vperm.xlu0 %784, %v521
      %v786 = vpop.permute.xlu0 %785
      %v788 = vmul.f32 %v782, %v776
      %v789 = vmul.f32 %v786, %v778
      %v790 = vadd.f32 %v673, %v788
      %v791 = vadd.f32 %v675, %v789
      %792 = vset.pattern.permute.xlu0 1
      %793 = vperm.xlu0 %792, %v518
      %v794 = vpop.permute.xlu0 %793
      %796 = vset.pattern.permute.xlu0 1
      %797 = vperm.xlu0 %796, %v522
      %v798 = vpop.permute.xlu0 %797
      %v800 = vmul.f32 %v794, %v776
      %v801 = vmul.f32 %v798, %v778
      %v802 = vadd.f32 %v699, %v800
      %v803 = vadd.f32 %v701, %v801
      %804 = vset.pattern.permute.xlu0 1
      %805 = vperm.xlu0 %804, %v519
      %v806 = vpop.permute.xlu0 %805
      %808 = vset.pattern.permute.xlu0 1
      %809 = vperm.xlu0 %808, %v523
      %v810 = vpop.permute.xlu0 %809
      %v812 = vmul.f32 %v806, %v776
      %v813 = vmul.f32 %v810, %v778
      %v814 = vadd.f32 %v725, %v812
      %v815 = vadd.f32 %v727, %v813
      %816 = vset.pattern.permute.xlu0 1
      %817 = vperm.xlu0 %816, %v520
      %v818 = vpop.permute.xlu0 %817
      %820 = vset.pattern.permute.xlu0 1
      %821 = vperm.xlu0 %820, %v524
      %v822 = vpop.permute.xlu0 %821
      %v824 = vmul.f32 %v818, %v776
      %v825 = vmul.f32 %v822, %v778
      %v826 = vadd.f32 %v751, %v824
      %v827 = vadd.f32 %v753, %v825
      %s828 = scalar_lea.vmem %s2, 16
      %v829 = vld [vmem:[%s828] sm:$0xf]
      %v830 = vld [vmem:[%s828 + $0x4] sm:$0xf]
      %v833 = vunpack.c.l.b16 %v829
      %v834 = vunpack.c.l.b16 %v830
      %v835 = vpack.c.b16 %v834, %v833
      %v837 = vsel %vm541, %v835, 0
      %839 = vmatpush.bf16.msra.mxu0 0
      %840 = vmatpush.bf16.msra.mxu0 0
      %841 = vmatpush.bf16.msra.mxu0 0
      %842 = vmatpush.bf16.msra.mxu0 0
      %843 = vmatpush.bf16.msra.mxu0 0
      %844 = vmatpush.bf16.msra.mxu0 0
      %845 = vmatpush.bf16.msra.mxu0 0
      %846 = vmatpush.bf16.msra.mxu0 %v504
      %847 = vmatmul.bf16.gmra.mxu0 %v837
      %v848 = vpop.f32.mrf.mxu0
      %v849 = vadd.f32 0.0, %v848
      %v850 = vpop.f32.mrf.mxu0
      %v851 = vadd.f32 0.0, %v850
      %852 = vdwg.mxu0
      %853 = vset.pattern.permute.xlu0 2
      %854 = vperm.xlu0 %853, %v517
      %v855 = vpop.permute.xlu0 %854
      %857 = vset.pattern.permute.xlu0 2
      %858 = vperm.xlu0 %857, %v521
      %v859 = vpop.permute.xlu0 %858
      %v861 = vmul.f32 %v855, %v849
      %v862 = vmul.f32 %v859, %v851
      %v863 = vadd.f32 %v790, %v861
      %v864 = vadd.f32 %v791, %v862
      %865 = vset.pattern.permute.xlu0 2
      %866 = vperm.xlu0 %865, %v518
      %v867 = vpop.permute.xlu0 %866
      %869 = vset.pattern.permute.xlu0 2
      %870 = vperm.xlu0 %869, %v522
      %v871 = vpop.permute.xlu0 %870
      %v873 = vmul.f32 %v867, %v849
      %v874 = vmul.f32 %v871, %v851
      %v875 = vadd.f32 %v802, %v873
      %v876 = vadd.f32 %v803, %v874
      %877 = vset.pattern.permute.xlu0 2
      %878 = vperm.xlu0 %877, %v519
      %v879 = vpop.permute.xlu0 %878
      %881 = vset.pattern.permute.xlu0 2
      %882 = vperm.xlu0 %881, %v523
      %v883 = vpop.permute.xlu0 %882
      %v885 = vmul.f32 %v879, %v849
      %v886 = vmul.f32 %v883, %v851
      %v887 = vadd.f32 %v814, %v885
      %v888 = vadd.f32 %v815, %v886
      %889 = vset.pattern.permute.xlu0 2
      %890 = vperm.xlu0 %889, %v520
      %v891 = vpop.permute.xlu0 %890
      %893 = vset.pattern.permute.xlu0 2
      %894 = vperm.xlu0 %893, %v524
      %v895 = vpop.permute.xlu0 %894
      %v897 = vmul.f32 %v891, %v849
      %v898 = vmul.f32 %v895, %v851
      %v899 = vadd.f32 %v826, %v897
      %v900 = vadd.f32 %v827, %v898
      %s901 = scalar_lea.vmem %s2, 24
      %v902 = vld [vmem:[%s901] sm:$0xf]
      %v903 = vld [vmem:[%s901 + $0x4] sm:$0xf]
      %v906 = vunpack.c.l.b16 %v902
      %v907 = vunpack.c.l.b16 %v903
      %v908 = vpack.c.b16 %v907, %v906
      %v910 = vsel %vm541, %v908, 0
      %912 = vmatpush.bf16.msra.mxu0 0
      %913 = vmatpush.bf16.msra.mxu0 0
      %914 = vmatpush.bf16.msra.mxu0 0
      %915 = vmatpush.bf16.msra.mxu0 0
      %916 = vmatpush.bf16.msra.mxu0 0
      %917 = vmatpush.bf16.msra.mxu0 0
      %918 = vmatpush.bf16.msra.mxu0 0
      %919 = vmatpush.bf16.msra.mxu0 %v504
      %920 = vmatmul.bf16.gmra.mxu0 %v910
      %v921 = vpop.f32.mrf.mxu0
      %v922 = vadd.f32 0.0, %v921
      %v923 = vpop.f32.mrf.mxu0
      %v924 = vadd.f32 0.0, %v923
      %925 = vdwg.mxu0
      %926 = vset.pattern.permute.xlu0 3
      %927 = vperm.xlu0 %926, %v517
      %v928 = vpop.permute.xlu0 %927
      %930 = vset.pattern.permute.xlu0 3
      %931 = vperm.xlu0 %930, %v521
      %v932 = vpop.permute.xlu0 %931
      %v934 = vmul.f32 %v928, %v922
      %v935 = vmul.f32 %v932, %v924
      %v936 = vadd.f32 %v863, %v934
      %v937 = vadd.f32 %v864, %v935
      %938 = vset.pattern.permute.xlu0 3
      %939 = vperm.xlu0 %938, %v518
      %v940 = vpop.permute.xlu0 %939
      %942 = vset.pattern.permute.xlu0 3
      %943 = vperm.xlu0 %942, %v522
      %v944 = vpop.permute.xlu0 %943
      %v946 = vmul.f32 %v940, %v922
      %v947 = vmul.f32 %v944, %v924
      %v948 = vadd.f32 %v875, %v946
      %v949 = vadd.f32 %v876, %v947
      %950 = vset.pattern.permute.xlu0 3
      %951 = vperm.xlu0 %950, %v519
      %v952 = vpop.permute.xlu0 %951
      %954 = vset.pattern.permute.xlu0 3
      %955 = vperm.xlu0 %954, %v523
      %v956 = vpop.permute.xlu0 %955
      %v958 = vmul.f32 %v952, %v922
      %v959 = vmul.f32 %v956, %v924
      %v960 = vadd.f32 %v887, %v958
      %v961 = vadd.f32 %v888, %v959
      %962 = vset.pattern.permute.xlu0 3
      %963 = vperm.xlu0 %962, %v520
      %v964 = vpop.permute.xlu0 %963
      %966 = vset.pattern.permute.xlu0 3
      %967 = vperm.xlu0 %966, %v524
      %v968 = vpop.permute.xlu0 %967
      %v970 = vmul.f32 %v964, %v922
      %v971 = vmul.f32 %v968, %v924
      %v972 = vadd.f32 %v899, %v970
      %v973 = vadd.f32 %v900, %v971
      %s974 = scalar_lea.vmem %s2, 32
      %v975 = vld [vmem:[%s974] sm:$0xf]
      %v976 = vld [vmem:[%s974 + $0x4] sm:$0xf]
      %v979 = vunpack.c.l.b16 %v975
      %v980 = vunpack.c.l.b16 %v976
      %v981 = vpack.c.b16 %v980, %v979
      %v983 = vsel %vm541, %v981, 0
      %985 = vmatpush.bf16.msra.mxu0 0
      %986 = vmatpush.bf16.msra.mxu0 0
      %987 = vmatpush.bf16.msra.mxu0 0
      %988 = vmatpush.bf16.msra.mxu0 0
      %989 = vmatpush.bf16.msra.mxu0 0
      %990 = vmatpush.bf16.msra.mxu0 0
      %991 = vmatpush.bf16.msra.mxu0 0
      %992 = vmatpush.bf16.msra.mxu0 %v504
      %993 = vmatmul.bf16.gmra.mxu0 %v983
      %v994 = vpop.f32.mrf.mxu0
      %v995 = vadd.f32 0.0, %v994
      %v996 = vpop.f32.mrf.mxu0
      %v997 = vadd.f32 0.0, %v996
      %998 = vdwg.mxu0
      %999 = vset.pattern.permute.xlu0 4
      %1000 = vperm.xlu0 %999, %v517
      %v1001 = vpop.permute.xlu0 %1000
      %1003 = vset.pattern.permute.xlu0 4
      %1004 = vperm.xlu0 %1003, %v521
      %v1005 = vpop.permute.xlu0 %1004
      %v1007 = vmul.f32 %v1001, %v995
      %v1008 = vmul.f32 %v1005, %v997
      %v1009 = vadd.f32 %v936, %v1007
      %v1010 = vadd.f32 %v937, %v1008
      %1011 = vset.pattern.permute.xlu0 4
      %1012 = vperm.xlu0 %1011, %v518
      %v1013 = vpop.permute.xlu0 %1012
      %1015 = vset.pattern.permute.xlu0 4
      %1016 = vperm.xlu0 %1015, %v522
      %v1017 = vpop.permute.xlu0 %1016
      %v1019 = vmul.f32 %v1013, %v995
      %v1020 = vmul.f32 %v1017, %v997
      %v1021 = vadd.f32 %v948, %v1019
      %v1022 = vadd.f32 %v949, %v1020
      %1023 = vset.pattern.permute.xlu0 4
      %1024 = vperm.xlu0 %1023, %v519
      %v1025 = vpop.permute.xlu0 %1024
      %1027 = vset.pattern.permute.xlu0 4
      %1028 = vperm.xlu0 %1027, %v523
      %v1029 = vpop.permute.xlu0 %1028
      %v1031 = vmul.f32 %v1025, %v995
      %v1032 = vmul.f32 %v1029, %v997
      %v1033 = vadd.f32 %v960, %v1031
      %v1034 = vadd.f32 %v961, %v1032
      %1035 = vset.pattern.permute.xlu0 4
      %1036 = vperm.xlu0 %1035, %v520
      %v1037 = vpop.permute.xlu0 %1036
      %1039 = vset.pattern.permute.xlu0 4
      %1040 = vperm.xlu0 %1039, %v524
      %v1041 = vpop.permute.xlu0 %1040
      %v1043 = vmul.f32 %v1037, %v995
      %v1044 = vmul.f32 %v1041, %v997
      %v1045 = vadd.f32 %v972, %v1043
      %v1046 = vadd.f32 %v973, %v1044
      %s1047 = scalar_lea.vmem %s2, 40
      %v1048 = vld [vmem:[%s1047] sm:$0xf]
      %v1049 = vld [vmem:[%s1047 + $0x4] sm:$0xf]
      %v1052 = vunpack.c.l.b16 %v1048
      %v1053 = vunpack.c.l.b16 %v1049
      %v1054 = vpack.c.b16 %v1053, %v1052
      %v1056 = vsel %vm541, %v1054, 0
      %1058 = vmatpush.bf16.msra.mxu0 0
      %1059 = vmatpush.bf16.msra.mxu0 0
      %1060 = vmatpush.bf16.msra.mxu0 0
      %1061 = vmatpush.bf16.msra.mxu0 0
      %1062 = vmatpush.bf16.msra.mxu0 0
      %1063 = vmatpush.bf16.msra.mxu0 0
      %1064 = vmatpush.bf16.msra.mxu0 0
      %1065 = vmatpush.bf16.msra.mxu0 %v504
      %1066 = vmatmul.bf16.gmra.mxu0 %v1056
      %v1067 = vpop.f32.mrf.mxu0
      %v1068 = vadd.f32 0.0, %v1067
      %v1069 = vpop.f32.mrf.mxu0
      %v1070 = vadd.f32 0.0, %v1069
      %1071 = vdwg.mxu0
      %1072 = vset.pattern.permute.xlu0 5
      %1073 = vperm.xlu0 %1072, %v517
      %v1074 = vpop.permute.xlu0 %1073
      %1076 = vset.pattern.permute.xlu0 5
      %1077 = vperm.xlu0 %1076, %v521
      %v1078 = vpop.permute.xlu0 %1077
      %v1080 = vmul.f32 %v1074, %v1068
      %v1081 = vmul.f32 %v1078, %v1070
      %v1082 = vadd.f32 %v1009, %v1080
      %v1083 = vadd.f32 %v1010, %v1081
      %1084 = vset.pattern.permute.xlu0 5
      %1085 = vperm.xlu0 %1084, %v518
      %v1086 = vpop.permute.xlu0 %1085
      %1088 = vset.pattern.permute.xlu0 5
      %1089 = vperm.xlu0 %1088, %v522
      %v1090 = vpop.permute.xlu0 %1089
      %v1092 = vmul.f32 %v1086, %v1068
      %v1093 = vmul.f32 %v1090, %v1070
      %v1094 = vadd.f32 %v1021, %v1092
      %v1095 = vadd.f32 %v1022, %v1093
      %1096 = vset.pattern.permute.xlu0 5
      %1097 = vperm.xlu0 %1096, %v519
      %v1098 = vpop.permute.xlu0 %1097
      %1100 = vset.pattern.permute.xlu0 5
      %1101 = vperm.xlu0 %1100, %v523
      %v1102 = vpop.permute.xlu0 %1101
      %v1104 = vmul.f32 %v1098, %v1068
      %v1105 = vmul.f32 %v1102, %v1070
      %v1106 = vadd.f32 %v1033, %v1104
      %v1107 = vadd.f32 %v1034, %v1105
      %1108 = vset.pattern.permute.xlu0 5
      %1109 = vperm.xlu0 %1108, %v520
      %v1110 = vpop.permute.xlu0 %1109
      %1112 = vset.pattern.permute.xlu0 5
      %1113 = vperm.xlu0 %1112, %v524
      %v1114 = vpop.permute.xlu0 %1113
      %v1116 = vmul.f32 %v1110, %v1068
      %v1117 = vmul.f32 %v1114, %v1070
      %v1118 = vadd.f32 %v1045, %v1116
      %v1119 = vadd.f32 %v1046, %v1117
      %s1120 = scalar_lea.vmem %s2, 48
      %v1121 = vld [vmem:[%s1120] sm:$0xf]
      %v1122 = vld [vmem:[%s1120 + $0x4] sm:$0xf]
      %v1125 = vunpack.c.l.b16 %v1121
      %v1126 = vunpack.c.l.b16 %v1122
      %v1127 = vpack.c.b16 %v1126, %v1125
      %v1129 = vsel %vm541, %v1127, 0
      %1131 = vmatpush.bf16.msra.mxu0 0
      %1132 = vmatpush.bf16.msra.mxu0 0
      %1133 = vmatpush.bf16.msra.mxu0 0
      %1134 = vmatpush.bf16.msra.mxu0 0
      %1135 = vmatpush.bf16.msra.mxu0 0
      %1136 = vmatpush.bf16.msra.mxu0 0
      %1137 = vmatpush.bf16.msra.mxu0 0
      %1138 = vmatpush.bf16.msra.mxu0 %v504
      %1139 = vmatmul.bf16.gmra.mxu0 %v1129
      %v1140 = vpop.f32.mrf.mxu0
      %v1141 = vadd.f32 0.0, %v1140
      %v1142 = vpop.f32.mrf.mxu0
      %v1143 = vadd.f32 0.0, %v1142
      %1144 = vdwg.mxu0
      %1145 = vset.pattern.permute.xlu0 6
      %1146 = vperm.xlu0 %1145, %v517
      %v1147 = vpop.permute.xlu0 %1146
      %1149 = vset.pattern.permute.xlu0 6
      %1150 = vperm.xlu0 %1149, %v521
      %v1151 = vpop.permute.xlu0 %1150
      %v1153 = vmul.f32 %v1147, %v1141
      %v1154 = vmul.f32 %v1151, %v1143
      %v1155 = vadd.f32 %v1082, %v1153
      %v1156 = vadd.f32 %v1083, %v1154
      %1157 = vset.pattern.permute.xlu0 6
      %1158 = vperm.xlu0 %1157, %v518
      %v1159 = vpop.permute.xlu0 %1158
      %1161 = vset.pattern.permute.xlu0 6
      %1162 = vperm.xlu0 %1161, %v522
      %v1163 = vpop.permute.xlu0 %1162
      %v1165 = vmul.f32 %v1159, %v1141
      %v1166 = vmul.f32 %v1163, %v1143
      %v1167 = vadd.f32 %v1094, %v1165
      %v1168 = vadd.f32 %v1095, %v1166
      %1169 = vset.pattern.permute.xlu0 6
      %1170 = vperm.xlu0 %1169, %v519
      %v1171 = vpop.permute.xlu0 %1170
      %1173 = vset.pattern.permute.xlu0 6
      %1174 = vperm.xlu0 %1173, %v523
      %v1175 = vpop.permute.xlu0 %1174
      %v1177 = vmul.f32 %v1171, %v1141
      %v1178 = vmul.f32 %v1175, %v1143
      %v1179 = vadd.f32 %v1106, %v1177
      %v1180 = vadd.f32 %v1107, %v1178
      %1181 = vset.pattern.permute.xlu0 6
      %1182 = vperm.xlu0 %1181, %v520
      %v1183 = vpop.permute.xlu0 %1182
      %1185 = vset.pattern.permute.xlu0 6
      %1186 = vperm.xlu0 %1185, %v524
      %v1187 = vpop.permute.xlu0 %1186
      %v1189 = vmul.f32 %v1183, %v1141
      %v1190 = vmul.f32 %v1187, %v1143
      %v1191 = vadd.f32 %v1118, %v1189
      %v1192 = vadd.f32 %v1119, %v1190
      %s1193 = scalar_lea.vmem %s2, 56
      %v1194 = vld [vmem:[%s1193] sm:$0xf]
      %v1195 = vld [vmem:[%s1193 + $0x4] sm:$0xf]
      %v1198 = vunpack.c.l.b16 %v1194
      %v1199 = vunpack.c.l.b16 %v1195
      %v1200 = vpack.c.b16 %v1199, %v1198
      %v1202 = vsel %vm541, %v1200, 0
      %1204 = vmatpush.bf16.msra.mxu0 0
      %1205 = vmatpush.bf16.msra.mxu0 0
      %1206 = vmatpush.bf16.msra.mxu0 0
      %1207 = vmatpush.bf16.msra.mxu0 0
      %1208 = vmatpush.bf16.msra.mxu0 0
      %1209 = vmatpush.bf16.msra.mxu0 0
      %1210 = vmatpush.bf16.msra.mxu0 0
      %1211 = vmatpush.bf16.msra.mxu0 %v504
      %1212 = vmatmul.bf16.gmra.mxu0 %v1202
      %v1213 = vpop.f32.mrf.mxu0
      %v1214 = vadd.f32 0.0, %v1213
      %v1215 = vpop.f32.mrf.mxu0
      %v1216 = vadd.f32 0.0, %v1215
      %1217 = vdwg.mxu0
      %1218 = vset.pattern.permute.xlu0 7
      %1219 = vperm.xlu0 %1218, %v517
      %v1220 = vpop.permute.xlu0 %1219
      %1222 = vset.pattern.permute.xlu0 7
      %1223 = vperm.xlu0 %1222, %v521
      %v1224 = vpop.permute.xlu0 %1223
      %v1226 = vmul.f32 %v1220, %v1214
      %v1227 = vmul.f32 %v1224, %v1216
      %v1228 = vadd.f32 %v1155, %v1226
      %v1229 = vadd.f32 %v1156, %v1227
      %1230 = vset.pattern.permute.xlu0 7
      %1231 = vperm.xlu0 %1230, %v518
      %v1232 = vpop.permute.xlu0 %1231
      %1234 = vset.pattern.permute.xlu0 7
      %1235 = vperm.xlu0 %1234, %v522
      %v1236 = vpop.permute.xlu0 %1235
      %v1238 = vmul.f32 %v1232, %v1214
      %v1239 = vmul.f32 %v1236, %v1216
      %v1240 = vadd.f32 %v1167, %v1238
      %v1241 = vadd.f32 %v1168, %v1239
      %1242 = vset.pattern.permute.xlu0 7
      %1243 = vperm.xlu0 %1242, %v519
      %v1244 = vpop.permute.xlu0 %1243
      %1246 = vset.pattern.permute.xlu0 7
      %1247 = vperm.xlu0 %1246, %v523
      %v1248 = vpop.permute.xlu0 %1247
      %v1250 = vmul.f32 %v1244, %v1214
      %v1251 = vmul.f32 %v1248, %v1216
      %v1252 = vadd.f32 %v1179, %v1250
      %v1253 = vadd.f32 %v1180, %v1251
      %1254 = vset.pattern.permute.xlu0 7
      %1255 = vperm.xlu0 %1254, %v520
      %v1256 = vpop.permute.xlu0 %1255
      %1258 = vset.pattern.permute.xlu0 7
      %1259 = vperm.xlu0 %1258, %v524
      %v1260 = vpop.permute.xlu0 %1259
      %v1262 = vmul.f32 %v1256, %v1214
      %v1263 = vmul.f32 %v1260, %v1216
      %v1264 = vadd.f32 %v1191, %v1262
      %v1265 = vadd.f32 %v1192, %v1263
      %s1266 = scalar_lea.vmem %s2, 64
      %v1267 = vld [vmem:[%s1266] sm:$0xf]
      %v1268 = vld [vmem:[%s1266 + $0x4] sm:$0xf]
      %v1271 = vunpack.c.l.b16 %v1267
      %v1272 = vunpack.c.l.b16 %v1268
      %v1273 = vpack.c.b16 %v1272, %v1271
      %v1275 = vsel %vm541, %v1273, 0
      %1277 = vmatpush.bf16.msra.mxu0 0
      %1278 = vmatpush.bf16.msra.mxu0 0
      %1279 = vmatpush.bf16.msra.mxu0 0
      %1280 = vmatpush.bf16.msra.mxu0 0
      %1281 = vmatpush.bf16.msra.mxu0 0
      %1282 = vmatpush.bf16.msra.mxu0 0
      %1283 = vmatpush.bf16.msra.mxu0 0
      %1284 = vmatpush.bf16.msra.mxu0 %v504
      %1285 = vmatmul.bf16.gmra.mxu0 %v1275
      %v1286 = vpop.f32.mrf.mxu0
      %v1287 = vadd.f32 0.0, %v1286
      %v1288 = vpop.f32.mrf.mxu0
      %v1289 = vadd.f32 0.0, %v1288
      %1290 = vdwg.mxu0
      %1291 = vset.pattern.permute.xlu0 8
      %1292 = vperm.xlu0 %1291, %v517
      %v1293 = vpop.permute.xlu0 %1292
      %1295 = vset.pattern.permute.xlu0 8
      %1296 = vperm.xlu0 %1295, %v521
      %v1297 = vpop.permute.xlu0 %1296
      %v1299 = vmul.f32 %v1293, %v1287
      %v1300 = vmul.f32 %v1297, %v1289
      %v1301 = vadd.f32 %v1228, %v1299
      %v1302 = vadd.f32 %v1229, %v1300
      %1303 = vset.pattern.permute.xlu0 8
      %1304 = vperm.xlu0 %1303, %v518
      %v1305 = vpop.permute.xlu0 %1304
      %1307 = vset.pattern.permute.xlu0 8
      %1308 = vperm.xlu0 %1307, %v522
      %v1309 = vpop.permute.xlu0 %1308
      %v1311 = vmul.f32 %v1305, %v1287
      %v1312 = vmul.f32 %v1309, %v1289
      %v1313 = vadd.f32 %v1240, %v1311
      %v1314 = vadd.f32 %v1241, %v1312
      %1315 = vset.pattern.permute.xlu0 8
      %1316 = vperm.xlu0 %1315, %v519
      %v1317 = vpop.permute.xlu0 %1316
      %1319 = vset.pattern.permute.xlu0 8
      %1320 = vperm.xlu0 %1319, %v523
      %v1321 = vpop.permute.xlu0 %1320
      %v1323 = vmul.f32 %v1317, %v1287
      %v1324 = vmul.f32 %v1321, %v1289
      %v1325 = vadd.f32 %v1252, %v1323
      %v1326 = vadd.f32 %v1253, %v1324
      %1327 = vset.pattern.permute.xlu0 8
      %1328 = vperm.xlu0 %1327, %v520
      %v1329 = vpop.permute.xlu0 %1328
      %1331 = vset.pattern.permute.xlu0 8
      %1332 = vperm.xlu0 %1331, %v524
      %v1333 = vpop.permute.xlu0 %1332
      %v1335 = vmul.f32 %v1329, %v1287
      %v1336 = vmul.f32 %v1333, %v1289
      %v1337 = vadd.f32 %v1264, %v1335
      %v1338 = vadd.f32 %v1265, %v1336
      %s1339 = scalar_lea.vmem %s2, 72
      %v1340 = vld [vmem:[%s1339] sm:$0xf]
      %v1341 = vld [vmem:[%s1339 + $0x4] sm:$0xf]
      %v1344 = vunpack.c.l.b16 %v1340
      %v1345 = vunpack.c.l.b16 %v1341
      %v1346 = vpack.c.b16 %v1345, %v1344
      %v1348 = vsel %vm541, %v1346, 0
      %1350 = vmatpush.bf16.msra.mxu0 0
      %1351 = vmatpush.bf16.msra.mxu0 0
      %1352 = vmatpush.bf16.msra.mxu0 0
      %1353 = vmatpush.bf16.msra.mxu0 0
      %1354 = vmatpush.bf16.msra.mxu0 0
      %1355 = vmatpush.bf16.msra.mxu0 0
      %1356 = vmatpush.bf16.msra.mxu0 0
      %1357 = vmatpush.bf16.msra.mxu0 %v504
      %1358 = vmatmul.bf16.gmra.mxu0 %v1348
      %v1359 = vpop.f32.mrf.mxu0
      %v1360 = vadd.f32 0.0, %v1359
      %v1361 = vpop.f32.mrf.mxu0
      %v1362 = vadd.f32 0.0, %v1361
      %1363 = vdwg.mxu0
      %1364 = vset.pattern.permute.xlu0 9
      %1365 = vperm.xlu0 %1364, %v517
      %v1366 = vpop.permute.xlu0 %1365
      %1368 = vset.pattern.permute.xlu0 9
      %1369 = vperm.xlu0 %1368, %v521
      %v1370 = vpop.permute.xlu0 %1369
      %v1372 = vmul.f32 %v1366, %v1360
      %v1373 = vmul.f32 %v1370, %v1362
      %v1374 = vadd.f32 %v1301, %v1372
      %v1375 = vadd.f32 %v1302, %v1373
      %1376 = vset.pattern.permute.xlu0 9
      %1377 = vperm.xlu0 %1376, %v518
      %v1378 = vpop.permute.xlu0 %1377
      %1380 = vset.pattern.permute.xlu0 9
      %1381 = vperm.xlu0 %1380, %v522
      %v1382 = vpop.permute.xlu0 %1381
      %v1384 = vmul.f32 %v1378, %v1360
      %v1385 = vmul.f32 %v1382, %v1362
      %v1386 = vadd.f32 %v1313, %v1384
      %v1387 = vadd.f32 %v1314, %v1385
      %1388 = vset.pattern.permute.xlu0 9
      %1389 = vperm.xlu0 %1388, %v519
      %v1390 = vpop.permute.xlu0 %1389
      %1392 = vset.pattern.permute.xlu0 9
      %1393 = vperm.xlu0 %1392, %v523
      %v1394 = vpop.permute.xlu0 %1393
      %v1396 = vmul.f32 %v1390, %v1360
      %v1397 = vmul.f32 %v1394, %v1362
      %v1398 = vadd.f32 %v1325, %v1396
      %v1399 = vadd.f32 %v1326, %v1397
      %1400 = vset.pattern.permute.xlu0 9
      %1401 = vperm.xlu0 %1400, %v520
      %v1402 = vpop.permute.xlu0 %1401
      %1404 = vset.pattern.permute.xlu0 9
      %1405 = vperm.xlu0 %1404, %v524
      %v1406 = vpop.permute.xlu0 %1405
      %v1408 = vmul.f32 %v1402, %v1360
      %v1409 = vmul.f32 %v1406, %v1362
      %v1410 = vadd.f32 %v1337, %v1408
      %v1411 = vadd.f32 %v1338, %v1409
      %s1412 = scalar_lea.vmem %s2, 80
      %v1413 = vld [vmem:[%s1412] sm:$0xf]
      %v1414 = vld [vmem:[%s1412 + $0x4] sm:$0xf]
      %v1417 = vunpack.c.l.b16 %v1413
      %v1418 = vunpack.c.l.b16 %v1414
      %v1419 = vpack.c.b16 %v1418, %v1417
      %v1421 = vsel %vm541, %v1419, 0
      %1423 = vmatpush.bf16.msra.mxu0 0
      %1424 = vmatpush.bf16.msra.mxu0 0
      %1425 = vmatpush.bf16.msra.mxu0 0
      %1426 = vmatpush.bf16.msra.mxu0 0
      %1427 = vmatpush.bf16.msra.mxu0 0
      %1428 = vmatpush.bf16.msra.mxu0 0
      %1429 = vmatpush.bf16.msra.mxu0 0
      %1430 = vmatpush.bf16.msra.mxu0 %v504
      %1431 = vmatmul.bf16.gmra.mxu0 %v1421
      %v1432 = vpop.f32.mrf.mxu0
      %v1433 = vadd.f32 0.0, %v1432
      %v1434 = vpop.f32.mrf.mxu0
      %v1435 = vadd.f32 0.0, %v1434
      %1436 = vdwg.mxu0
      %1437 = vset.pattern.permute.xlu0 10
      %1438 = vperm.xlu0 %1437, %v517
      %v1439 = vpop.permute.xlu0 %1438
      %1441 = vset.pattern.permute.xlu0 10
      %1442 = vperm.xlu0 %1441, %v521
      %v1443 = vpop.permute.xlu0 %1442
      %v1445 = vmul.f32 %v1439, %v1433
      %v1446 = vmul.f32 %v1443, %v1435
      %v1447 = vadd.f32 %v1374, %v1445
      %v1448 = vadd.f32 %v1375, %v1446
      %1449 = vset.pattern.permute.xlu0 10
      %1450 = vperm.xlu0 %1449, %v518
      %v1451 = vpop.permute.xlu0 %1450
      %1453 = vset.pattern.permute.xlu0 10
      %1454 = vperm.xlu0 %1453, %v522
      %v1455 = vpop.permute.xlu0 %1454
      %v1457 = vmul.f32 %v1451, %v1433
      %v1458 = vmul.f32 %v1455, %v1435
      %v1459 = vadd.f32 %v1386, %v1457
      %v1460 = vadd.f32 %v1387, %v1458
      %1461 = vset.pattern.permute.xlu0 10
      %1462 = vperm.xlu0 %1461, %v519
      %v1463 = vpop.permute.xlu0 %1462
      %1465 = vset.pattern.permute.xlu0 10
      %1466 = vperm.xlu0 %1465, %v523
      %v1467 = vpop.permute.xlu0 %1466
      %v1469 = vmul.f32 %v1463, %v1433
      %v1470 = vmul.f32 %v1467, %v1435
      %v1471 = vadd.f32 %v1398, %v1469
      %v1472 = vadd.f32 %v1399, %v1470
      %1473 = vset.pattern.permute.xlu0 10
      %1474 = vperm.xlu0 %1473, %v520
      %v1475 = vpop.permute.xlu0 %1474
      %1477 = vset.pattern.permute.xlu0 10
      %1478 = vperm.xlu0 %1477, %v524
      %v1479 = vpop.permute.xlu0 %1478
      %v1481 = vmul.f32 %v1475, %v1433
      %v1482 = vmul.f32 %v1479, %v1435
      %v1483 = vadd.f32 %v1410, %v1481
      %v1484 = vadd.f32 %v1411, %v1482
      %s1485 = scalar_lea.vmem %s2, 88
      %v1486 = vld [vmem:[%s1485] sm:$0xf]
      %v1487 = vld [vmem:[%s1485 + $0x4] sm:$0xf]
      %v1490 = vunpack.c.l.b16 %v1486
      %v1491 = vunpack.c.l.b16 %v1487
      %v1492 = vpack.c.b16 %v1491, %v1490
      %v1494 = vsel %vm541, %v1492, 0
      %1496 = vmatpush.bf16.msra.mxu0 0
      %1497 = vmatpush.bf16.msra.mxu0 0
      %1498 = vmatpush.bf16.msra.mxu0 0
      %1499 = vmatpush.bf16.msra.mxu0 0
      %1500 = vmatpush.bf16.msra.mxu0 0
      %1501 = vmatpush.bf16.msra.mxu0 0
      %1502 = vmatpush.bf16.msra.mxu0 0
      %1503 = vmatpush.bf16.msra.mxu0 %v504
      %1504 = vmatmul.bf16.gmra.mxu0 %v1494
      %v1505 = vpop.f32.mrf.mxu0
      %v1506 = vadd.f32 0.0, %v1505
      %v1507 = vpop.f32.mrf.mxu0
      %v1508 = vadd.f32 0.0, %v1507
      %1509 = vdwg.mxu0
      %1510 = vset.pattern.permute.xlu0 11
      %1511 = vperm.xlu0 %1510, %v517
      %v1512 = vpop.permute.xlu0 %1511
      %1514 = vset.pattern.permute.xlu0 11
      %1515 = vperm.xlu0 %1514, %v521
      %v1516 = vpop.permute.xlu0 %1515
      %v1518 = vmul.f32 %v1512, %v1506
      %v1519 = vmul.f32 %v1516, %v1508
      %v1520 = vadd.f32 %v1447, %v1518
      %v1521 = vadd.f32 %v1448, %v1519
      %1522 = vset.pattern.permute.xlu0 11
      %1523 = vperm.xlu0 %1522, %v518
      %v1524 = vpop.permute.xlu0 %1523
      %1526 = vset.pattern.permute.xlu0 11
      %1527 = vperm.xlu0 %1526, %v522
      %v1528 = vpop.permute.xlu0 %1527
      %v1530 = vmul.f32 %v1524, %v1506
      %v1531 = vmul.f32 %v1528, %v1508
      %v1532 = vadd.f32 %v1459, %v1530
      %v1533 = vadd.f32 %v1460, %v1531
      %1534 = vset.pattern.permute.xlu0 11
      %1535 = vperm.xlu0 %1534, %v519
      %v1536 = vpop.permute.xlu0 %1535
      %1538 = vset.pattern.permute.xlu0 11
      %1539 = vperm.xlu0 %1538, %v523
      %v1540 = vpop.permute.xlu0 %1539
      %v1542 = vmul.f32 %v1536, %v1506
      %v1543 = vmul.f32 %v1540, %v1508
      %v1544 = vadd.f32 %v1471, %v1542
      %v1545 = vadd.f32 %v1472, %v1543
      %1546 = vset.pattern.permute.xlu0 11
      %1547 = vperm.xlu0 %1546, %v520
      %v1548 = vpop.permute.xlu0 %1547
      %1550 = vset.pattern.permute.xlu0 11
      %1551 = vperm.xlu0 %1550, %v524
      %v1552 = vpop.permute.xlu0 %1551
      %v1554 = vmul.f32 %v1548, %v1506
      %v1555 = vmul.f32 %v1552, %v1508
      %v1556 = vadd.f32 %v1483, %v1554
      %v1557 = vadd.f32 %v1484, %v1555
      %s1558 = scalar_lea.vmem %s2, 96
      %v1559 = vld [vmem:[%s1558] sm:$0xf]
      %v1560 = vld [vmem:[%s1558 + $0x4] sm:$0xf]
      %v1563 = vunpack.c.l.b16 %v1559
      %v1564 = vunpack.c.l.b16 %v1560
      %v1565 = vpack.c.b16 %v1564, %v1563
      %v1567 = vsel %vm541, %v1565, 0
      %1569 = vmatpush.bf16.msra.mxu0 0
      %1570 = vmatpush.bf16.msra.mxu0 0
      %1571 = vmatpush.bf16.msra.mxu0 0
      %1572 = vmatpush.bf16.msra.mxu0 0
      %1573 = vmatpush.bf16.msra.mxu0 0
      %1574 = vmatpush.bf16.msra.mxu0 0
      %1575 = vmatpush.bf16.msra.mxu0 0
      %1576 = vmatpush.bf16.msra.mxu0 %v504
      %1577 = vmatmul.bf16.gmra.mxu0 %v1567
      %v1578 = vpop.f32.mrf.mxu0
      %v1579 = vadd.f32 0.0, %v1578
      %v1580 = vpop.f32.mrf.mxu0
      %v1581 = vadd.f32 0.0, %v1580
      %1582 = vdwg.mxu0
      %1583 = vset.pattern.permute.xlu0 12
      %1584 = vperm.xlu0 %1583, %v517
      %v1585 = vpop.permute.xlu0 %1584
      %1587 = vset.pattern.permute.xlu0 12
      %1588 = vperm.xlu0 %1587, %v521
      %v1589 = vpop.permute.xlu0 %1588
      %v1591 = vmul.f32 %v1585, %v1579
      %v1592 = vmul.f32 %v1589, %v1581
      %v1593 = vadd.f32 %v1520, %v1591
      %v1594 = vadd.f32 %v1521, %v1592
      %1595 = vset.pattern.permute.xlu0 12
      %1596 = vperm.xlu0 %1595, %v518
      %v1597 = vpop.permute.xlu0 %1596
      %1599 = vset.pattern.permute.xlu0 12
      %1600 = vperm.xlu0 %1599, %v522
      %v1601 = vpop.permute.xlu0 %1600
      %v1603 = vmul.f32 %v1597, %v1579
      %v1604 = vmul.f32 %v1601, %v1581
      %v1605 = vadd.f32 %v1532, %v1603
      %v1606 = vadd.f32 %v1533, %v1604
      %1607 = vset.pattern.permute.xlu0 12
      %1608 = vperm.xlu0 %1607, %v519
      %v1609 = vpop.permute.xlu0 %1608
      %1611 = vset.pattern.permute.xlu0 12
      %1612 = vperm.xlu0 %1611, %v523
      %v1613 = vpop.permute.xlu0 %1612
      %v1615 = vmul.f32 %v1609, %v1579
      %v1616 = vmul.f32 %v1613, %v1581
      %v1617 = vadd.f32 %v1544, %v1615
      %v1618 = vadd.f32 %v1545, %v1616
      %1619 = vset.pattern.permute.xlu0 12
      %1620 = vperm.xlu0 %1619, %v520
      %v1621 = vpop.permute.xlu0 %1620
      %1623 = vset.pattern.permute.xlu0 12
      %1624 = vperm.xlu0 %1623, %v524
      %v1625 = vpop.permute.xlu0 %1624
      %v1627 = vmul.f32 %v1621, %v1579
      %v1628 = vmul.f32 %v1625, %v1581
      %v1629 = vadd.f32 %v1556, %v1627
      %v1630 = vadd.f32 %v1557, %v1628
      %s1631 = scalar_lea.vmem %s2, 104
      %v1632 = vld [vmem:[%s1631] sm:$0xf]
      %v1633 = vld [vmem:[%s1631 + $0x4] sm:$0xf]
      %v1636 = vunpack.c.l.b16 %v1632
      %v1637 = vunpack.c.l.b16 %v1633
      %v1638 = vpack.c.b16 %v1637, %v1636
      %v1640 = vsel %vm541, %v1638, 0
      %1642 = vmatpush.bf16.msra.mxu0 0
      %1643 = vmatpush.bf16.msra.mxu0 0
      %1644 = vmatpush.bf16.msra.mxu0 0
      %1645 = vmatpush.bf16.msra.mxu0 0
      %1646 = vmatpush.bf16.msra.mxu0 0
      %1647 = vmatpush.bf16.msra.mxu0 0
      %1648 = vmatpush.bf16.msra.mxu0 0
      %1649 = vmatpush.bf16.msra.mxu0 %v504
      %1650 = vmatmul.bf16.gmra.mxu0 %v1640
      %v1651 = vpop.f32.mrf.mxu0
      %v1652 = vadd.f32 0.0, %v1651
      %v1653 = vpop.f32.mrf.mxu0
      %v1654 = vadd.f32 0.0, %v1653
      %1655 = vdwg.mxu0
      %1656 = vset.pattern.permute.xlu0 13
      %1657 = vperm.xlu0 %1656, %v517
      %v1658 = vpop.permute.xlu0 %1657
      %1660 = vset.pattern.permute.xlu0 13
      %1661 = vperm.xlu0 %1660, %v521
      %v1662 = vpop.permute.xlu0 %1661
      %v1664 = vmul.f32 %v1658, %v1652
      %v1665 = vmul.f32 %v1662, %v1654
      %v1666 = vadd.f32 %v1593, %v1664
      %v1667 = vadd.f32 %v1594, %v1665
      %1668 = vset.pattern.permute.xlu0 13
      %1669 = vperm.xlu0 %1668, %v518
      %v1670 = vpop.permute.xlu0 %1669
      %1672 = vset.pattern.permute.xlu0 13
      %1673 = vperm.xlu0 %1672, %v522
      %v1674 = vpop.permute.xlu0 %1673
      %v1676 = vmul.f32 %v1670, %v1652
      %v1677 = vmul.f32 %v1674, %v1654
      %v1678 = vadd.f32 %v1605, %v1676
      %v1679 = vadd.f32 %v1606, %v1677
      %1680 = vset.pattern.permute.xlu0 13
      %1681 = vperm.xlu0 %1680, %v519
      %v1682 = vpop.permute.xlu0 %1681
      %1684 = vset.pattern.permute.xlu0 13
      %1685 = vperm.xlu0 %1684, %v523
      %v1686 = vpop.permute.xlu0 %1685
      %v1688 = vmul.f32 %v1682, %v1652
      %v1689 = vmul.f32 %v1686, %v1654
      %v1690 = vadd.f32 %v1617, %v1688
      %v1691 = vadd.f32 %v1618, %v1689
      %1692 = vset.pattern.permute.xlu0 13
      %1693 = vperm.xlu0 %1692, %v520
      %v1694 = vpop.permute.xlu0 %1693
      %1696 = vset.pattern.permute.xlu0 13
      %1697 = vperm.xlu0 %1696, %v524
      %v1698 = vpop.permute.xlu0 %1697
      %v1700 = vmul.f32 %v1694, %v1652
      %v1701 = vmul.f32 %v1698, %v1654
      %v1702 = vadd.f32 %v1629, %v1700
      %v1703 = vadd.f32 %v1630, %v1701
      %s1704 = scalar_lea.vmem %s2, 112
      %v1705 = vld [vmem:[%s1704] sm:$0xf]
      %v1706 = vld [vmem:[%s1704 + $0x4] sm:$0xf]
      %v1709 = vunpack.c.l.b16 %v1705
      %v1710 = vunpack.c.l.b16 %v1706
      %v1711 = vpack.c.b16 %v1710, %v1709
      %v1713 = vsel %vm541, %v1711, 0
      %1715 = vmatpush.bf16.msra.mxu0 0
      %1716 = vmatpush.bf16.msra.mxu0 0
      %1717 = vmatpush.bf16.msra.mxu0 0
      %1718 = vmatpush.bf16.msra.mxu0 0
      %1719 = vmatpush.bf16.msra.mxu0 0
      %1720 = vmatpush.bf16.msra.mxu0 0
      %1721 = vmatpush.bf16.msra.mxu0 0
      %1722 = vmatpush.bf16.msra.mxu0 %v504
      %1723 = vmatmul.bf16.gmra.mxu0 %v1713
      %v1724 = vpop.f32.mrf.mxu0
      %v1725 = vadd.f32 0.0, %v1724
      %v1726 = vpop.f32.mrf.mxu0
      %v1727 = vadd.f32 0.0, %v1726
      %1728 = vdwg.mxu0
      %1729 = vset.pattern.permute.xlu0 14
      %1730 = vperm.xlu0 %1729, %v517
      %v1731 = vpop.permute.xlu0 %1730
      %1733 = vset.pattern.permute.xlu0 14
      %1734 = vperm.xlu0 %1733, %v521
      %v1735 = vpop.permute.xlu0 %1734
      %v1737 = vmul.f32 %v1731, %v1725
      %v1738 = vmul.f32 %v1735, %v1727
      %v1739 = vadd.f32 %v1666, %v1737
      %v1740 = vadd.f32 %v1667, %v1738
      %1741 = vset.pattern.permute.xlu0 14
      %1742 = vperm.xlu0 %1741, %v518
      %v1743 = vpop.permute.xlu0 %1742
      %1745 = vset.pattern.permute.xlu0 14
      %1746 = vperm.xlu0 %1745, %v522
      %v1747 = vpop.permute.xlu0 %1746
      %v1749 = vmul.f32 %v1743, %v1725
      %v1750 = vmul.f32 %v1747, %v1727
      %v1751 = vadd.f32 %v1678, %v1749
      %v1752 = vadd.f32 %v1679, %v1750
      %1753 = vset.pattern.permute.xlu0 14
      %1754 = vperm.xlu0 %1753, %v519
      %v1755 = vpop.permute.xlu0 %1754
      %1757 = vset.pattern.permute.xlu0 14
      %1758 = vperm.xlu0 %1757, %v523
      %v1759 = vpop.permute.xlu0 %1758
      %v1761 = vmul.f32 %v1755, %v1725
      %v1762 = vmul.f32 %v1759, %v1727
      %v1763 = vadd.f32 %v1690, %v1761
      %v1764 = vadd.f32 %v1691, %v1762
      %1765 = vset.pattern.permute.xlu0 14
      %1766 = vperm.xlu0 %1765, %v520
      %v1767 = vpop.permute.xlu0 %1766
      %1769 = vset.pattern.permute.xlu0 14
      %1770 = vperm.xlu0 %1769, %v524
      %v1771 = vpop.permute.xlu0 %1770
      %v1773 = vmul.f32 %v1767, %v1725
      %v1774 = vmul.f32 %v1771, %v1727
      %v1775 = vadd.f32 %v1702, %v1773
      %v1776 = vadd.f32 %v1703, %v1774
      %s1777 = scalar_lea.vmem %s2, 120
      %v1778 = vld [vmem:[%s1777] sm:$0xf]
      %v1779 = vld [vmem:[%s1777 + $0x4] sm:$0xf]
      %v1782 = vunpack.c.l.b16 %v1778
      %v1783 = vunpack.c.l.b16 %v1779
      %v1784 = vpack.c.b16 %v1783, %v1782
      %v1786 = vsel %vm541, %v1784, 0
      %1788 = vmatpush.bf16.msra.mxu0 0
      %1789 = vmatpush.bf16.msra.mxu0 0
      %1790 = vmatpush.bf16.msra.mxu0 0
      %1791 = vmatpush.bf16.msra.mxu0 0
      %1792 = vmatpush.bf16.msra.mxu0 0
      %1793 = vmatpush.bf16.msra.mxu0 0
      %1794 = vmatpush.bf16.msra.mxu0 0
      %1795 = vmatpush.bf16.msra.mxu0 %v504
      %1796 = vmatmul.bf16.gmra.mxu0 %v1786
      %v1797 = vpop.f32.mrf.mxu0
      %v1798 = vadd.f32 0.0, %v1797
      %v1799 = vpop.f32.mrf.mxu0
      %v1800 = vadd.f32 0.0, %v1799
      %1801 = vdwg.mxu0
      %1802 = vset.pattern.permute.xlu0 15
      %1803 = vperm.xlu0 %1802, %v517
      %v1804 = vpop.permute.xlu0 %1803
      %1806 = vset.pattern.permute.xlu0 15
      %1807 = vperm.xlu0 %1806, %v521
      %v1808 = vpop.permute.xlu0 %1807
      %v1810 = vmul.f32 %v1804, %v1798
      %v1811 = vmul.f32 %v1808, %v1800
      %v1812 = vadd.f32 %v1739, %v1810
      %v1813 = vadd.f32 %v1740, %v1811
      %1814 = vset.pattern.permute.xlu0 15
      %1815 = vperm.xlu0 %1814, %v518
      %v1816 = vpop.permute.xlu0 %1815
      %1818 = vset.pattern.permute.xlu0 15
      %1819 = vperm.xlu0 %1818, %v522
      %v1820 = vpop.permute.xlu0 %1819
      %v1822 = vmul.f32 %v1816, %v1798
      %v1823 = vmul.f32 %v1820, %v1800
      %v1824 = vadd.f32 %v1751, %v1822
      %v1825 = vadd.f32 %v1752, %v1823
      %1826 = vset.pattern.permute.xlu0 15
      %1827 = vperm.xlu0 %1826, %v519
      %v1828 = vpop.permute.xlu0 %1827
      %1830 = vset.pattern.permute.xlu0 15
      %1831 = vperm.xlu0 %1830, %v523
      %v1832 = vpop.permute.xlu0 %1831
      %v1834 = vmul.f32 %v1828, %v1798
      %v1835 = vmul.f32 %v1832, %v1800
      %v1836 = vadd.f32 %v1763, %v1834
      %v1837 = vadd.f32 %v1764, %v1835
      %1838 = vset.pattern.permute.xlu0 15
      %1839 = vperm.xlu0 %1838, %v520
      %v1840 = vpop.permute.xlu0 %1839
      %1842 = vset.pattern.permute.xlu0 15
      %1843 = vperm.xlu0 %1842, %v524
      %v1844 = vpop.permute.xlu0 %1843
      %v1846 = vmul.f32 %v1840, %v1798
      %v1847 = vmul.f32 %v1844, %v1800
      %v1848 = vadd.f32 %v1775, %v1846
      %v1849 = vadd.f32 %v1776, %v1847
      %1850 = vst [vmem:[%s282] sm:$0xff] %v1812
      %1851 = vst [vmem:[%s282 + $0x8] sm:$0xff] %v1824
      %1852 = vst [vmem:[%s282 + $0x10] sm:$0xff] %v1836
      %1853 = vst [vmem:[%s282 + $0x18] sm:$0xff] %v1848
      %1854 = vst [vmem:[%s282 + $0x20] sm:$0xff] %v1813
      %1855 = vst [vmem:[%s282 + $0x28] sm:$0xff] %v1825
      %1856 = vst [vmem:[%s282 + $0x30] sm:$0xff] %v1837
      %1857 = vst [vmem:[%s282 + $0x38] sm:$0xff] %v1849
      %s1858 = smul.u32 2, %s18
      %p1859 = scmp.lt.s32.totalorder %s1858, 3
      %s1860 = scalar_select %p1859, %s1858, 3
      %s1861 = smul.addr %s1860, 4
      %s1862 = smul.addr %s1861, 8
      %s1863 = scalar_lea.vmem %s7, %s1862
      // Predicated region
      $region49: #{lambda_layer_forward.3} parent=47 // pred_check
        %p1864 = pneg %p188
      $region50: #{lambda_layer_forward.3} parent=47 // pred_check_branch
        %1866 = sbr.rel (%p1864) target = $region52
      $region51: #{lambda_layer_forward.3} parent=47 // pred_region
        %s1867 = smul.u32 2, %s18
      $region52: #{lambda_layer_forward.3} parent=47 // pred_fallthru
        _
    $region48: #{lambda_layer_forward.3} parent=5 // pred_fallthru
      _
    %p1868 = scmp.le.s32.totalorder 2, %s13
    // Predicated region
    $region53: #{lambda_layer_forward.3} parent=5 // pred_check
      %p1869 = pneg %p1868
    $region54: #{lambda_layer_forward.3} parent=5 // pred_check_branch
      %1871 = sbr.rel (%p1869) target = $region56
    $region55: #{lambda_layer_forward.3} parent=5 // pred_region
      %s1872 = ssub.s32 %s13, 2
      // Predicated region
      $region57: #{lambda_layer_forward.3} parent=55 // pred_check
        %p1873 = pneg %p194
      $region58: #{lambda_layer_forward.3} parent=55 // pred_check_branch
        %1875 = sbr.rel (%p1873) target = $region60
      $region59: #{lambda_layer_forward.3} parent=55 // pred_region
        %s1876 = smul.u32 2, %s19
        %p1877 = scmp.lt.s32.totalorder %s1876, 3
        %s1878 = scalar_select %p1877, %s1876, 3
        %s1879 = smul.addr %s1878, 4
        %s1880 = smul.addr %s1879, 8
        %s1881 = scalar_lea.vmem %s7, %s1880
      $region60: #{lambda_layer_forward.3} parent=55 // pred_fallthru
        _
    $region56: #{lambda_layer_forward.3} parent=5 // pred_fallthru
      _
  $region6: #{lambda_layer_forward.3} parent=0 // loop_footer
    %s17 = sadd.s32 1, %s13
  $region7: #{lambda_layer_forward.3} parent=0 // loop_footer_branch
    %12 = sbr.rel target = $region3
  $region8: #{lambda_layer_forward.3} parent=0 // loop_exit
    _

</llo_original>
